<compile_context>
chip_gen: v6e
topology: v6e:2x2x1
jax: 0.10.0
libtpu: 0.0.40
codegen_flags: <defaults>
</compile_context>

<pallas_src>
import functools
import math

import jax
import jax.numpy as jnp
from jax import lax
from jax.experimental import pallas as pl
from jax.experimental.pallas import tpu as pltpu

NEG_BIG = -1e10  # masked_fill value used by SelfAttention
TAU = 0.5        # ContrastiveModel default


def _round_up(n, m):
    return ((n + m - 1) // m) * m


# ---------------- the fused kernel ----------------

def _model_kernel(esm_ref, man_ref, mask_ref, w_ref, v_ref, out_ref, *,
                  tau, pdim, mh, off_att, off_cw1, off_cw2, h_stride):
    Bb, L, H = esm_ref.shape
    Dm = man_ref.shape[-1]
    rows = Bb * L
    inv_scale = jnp.float32(1.0 / math.sqrt(H))
    inv_tau = jnp.float32(1.0 / tau)
    neg_big = jnp.float32(NEG_BIG)

    # L is a multiple of 8 here, so these flattens are sublane-aligned no-ops.
    esm2d = esm_ref[...].reshape(rows, H)
    man2d = man_ref[...].reshape(rows, Dm)
    # masked_fill(expanded_mask == 0, -1e10): whole query rows replaced (NOT an additive
    # mask). One compare+broadcast, hoisted and reused by all 3 attention layers.
    masked_rows = jnp.broadcast_to(mask_ref[...] == 0.0, (Bb, L, L))

    # ---- static slab slicing helpers (offsets are Python ints -> zero runtime cost) ----
    def wmat(off, k, n):
        return w_ref[off:off + k, :n]

    def vrow(r, n):
        return v_ref[r:r + 1, :n]

    def linear(x, w_off, k, n, b_row):
        return (jnp.dot(x, wmat(w_off, k, n), preferred_element_type=jnp.float32)
                + vrow(b_row, n))

    def attention(layer, q2d, kv2d):
        w0 = off_att + 4 * layer * h_stride
        b0 = 1 + 4 * layer
        # separate Q / K / V matmuls (no fused-KV lane-dim sub-slice)
        q = linear(q2d, w0, H, H, b0).reshape(Bb, L, H)
        k = linear(kv2d, w0 + h_stride, H, H, b0 + 1).reshape(Bb, L, H)
        v = linear(kv2d, w0 + 2 * h_stride, H, H, b0 + 2).reshape(Bb, L, H)
        energy = jnp.einsum('bld,bmd->blm', q, k,
                            preferred_element_type=jnp.float32) * inv_scale
        energy = jnp.where(masked_rows, neg_big, energy)
        m = jnp.max(energy, axis=-1, keepdims=True)
        p = jnp.exp(energy - m)
        # divide -> EUP reciprocal (frees the VALU slot); dropout = identity (eval)
        attn = p * pl.reciprocal(jnp.sum(p, axis=-1, keepdims=True), approx=True)
        ctx = jnp.einsum('blm,bmd->bld', attn, v,
                         preferred_element_type=jnp.float32).reshape(rows, H)
        return linear(ctx, w0 + 3 * h_stride, H, H, b0 + 3)

    # fc1 on manual features + three chained self-attentions
    manp = linear(man2d, 0, Dm, H, 0)                           # (rows, H)
    f1 = attention(0, manp, esm2d)
    f2 = attention(1, f1, manp)
    f3 = attention(2, f2, esm2d)

    # ---- contrastive loss between fusion_1 and fusion_3 ----
    # project f1 and f3 with one stacked matmul pair ((2*rows, H) MXU work)
    z = jnp.concatenate([f1, f3], axis=0)                       # (2*rows, H)
    t = linear(z, off_cw1, H, pdim, 13)
    t = jnp.where(t > 0.0, t, jnp.exp(t) - 1.0)                 # ELU
    h = linear(t, off_cw2, pdim, H, 14)                         # (2*rows, H)
    ss = jnp.sum(h * h, axis=-1, keepdims=True)
    # F.normalize: h / max(||h||,1e-12) == h * rsqrt(max(||h||^2,1e-24))   (EUP rsqrt)
    hn = h * lax.rsqrt(jnp.maximum(ss, jnp.float32(1e-24)))
    n1 = hn[:rows].reshape(Bb, L, H)
    n2 = hn[rows:].reshape(Bb, L, H)

    refl1 = jnp.exp(jnp.einsum('bld,bmd->blm', n1, n1,
                               preferred_element_type=jnp.float32) * inv_tau)
    refl2 = jnp.exp(jnp.einsum('bld,bmd->blm', n2, n2,
                               preferred_element_type=jnp.float32) * inv_tau)
    cross = jnp.exp(jnp.einsum('bld,bmd->blm', n1, n2,
                               preferred_element_type=jnp.float32) * inv_tau)
    # Exact diagonals via cheap row-wise dots (no eye mask, no unit-norm assumption).
    # l2 reuses cross^T via a column sum; -log(a/b) is written as log(b)-log(a) (no divide),
    # and log(betw_diag) folds to the raw scaled dot (skips an exp+log round trip).
    refl1_diag = jnp.exp(jnp.sum(n1 * n1, axis=-1) * inv_tau)                   # (Bb, L)
    refl2_diag = jnp.exp(jnp.sum(n2 * n2, axis=-1) * inv_tau)
    betw_diag_log = jnp.sum(n1 * n2, axis=-1) * inv_tau
    denom1 = jnp.sum(refl1, axis=-1) + jnp.sum(cross, axis=-1) - refl1_diag
    denom2 = jnp.sum(refl2, axis=-1) + jnp.sum(cross, axis=-2) - refl2_diag
    l1 = jnp.log(denom1) - betw_diag_log
    l2 = jnp.log(denom2) - betw_diag_log
    per_ex = 0.5 * (jnp.sum(l1, axis=-1, keepdims=True)
                    + jnp.sum(l2, axis=-1, keepdims=True))                      # (Bb, 1)

    # ---- MLP classifier head on fusion_3 (dropout = identity in eval) ----
    # Tiny N=2 / N=1 matmuls run on the VPU/XLU (broadcast-mul + lane reduce) with
    # pre-transposed weights, avoiding MXU push+drain in the serial tail.
    xm = jnp.mean(f3.reshape(Bb, L, H), axis=1)                                 # (Bb, H)
    mw1t = v_ref[16:16 + mh, :H]                                                # (MH, H)
    mb1 = vrow(15, mh)                                                          # (1, MH)
    mw2t = vrow(16 + mh, mh)                                                    # (1, MH)
    mb2 = v_ref[17 + mh:18 + mh, 0:1]                                           # (1, 1)
    hcls = jnp.maximum(jnp.sum(xm[:, None, :] * mw1t[None, :, :], axis=-1) + mb1, 0.0)
    logit = jnp.sum(hcls * mw2t, axis=-1, keepdims=True) + mb2                  # (Bb, 1)
    prob = jax.nn.sigmoid(logit)                                                # EUP

    # single lane-packed output block: [classifier prob | per-example contrastive loss]
    out_ref[...] = jnp.concatenate([prob, per_ex], axis=-1)[None]               # (1, Bb, 2)


# ---------------- wrapper ----------------

def model_forward(esm, manual, mask, params, *, batch_blocks=1):
    """batch_blocks=1 (default): whole batch in one grid step (best on single-TC v5e/v6e).
    On v7x pass batch_blocks=2 so the "parallel" batch axis is sharded over both TCs."""
    fc1w, fc1b, aw, ab, cw1, cb1, cw2, cb2, mw1, mb1, mw2, mb2 = params
    B, L, H = esm.shape
    Dm = manual.shape[-1]
    P = cw1.shape[1]
    MH = mw1.shape[1]
    assert B % batch_blocks == 0
    Bb = B // batch_blocks
    # NOTE: keep L a multiple of 8 so in-kernel (Bb,L,H)->(Bb*L,H) flattens are
    # sublane-aligned no-ops (correct either way, just relayout cost otherwise).

    mask3 = mask.reshape(B, L, 1).astype(jnp.float32)

    # ---- pack all weights/biases into 2 contiguous slabs (5 input DMAs instead of ~22) ----
    Hp, Dmp, Pp = _round_up(H, 8), _round_up(Dm, 8), _round_up(P, 8)
    WC = max(H, P)          # matmul-weight slab width
    VC = max(H, P, MH)      # row-vector slab width

    def pad2(a, r, c):
        return jnp.pad(a, ((0, r - a.shape[0]), (0, c - a.shape[1])))

    w_parts = [pad2(fc1w, Dmp, WC)]
    for layer in range(3):
        for j in range(4):
            w_parts.append(pad2(aw[layer, j], Hp, WC))
    w_parts += [pad2(cw1, Hp, WC), pad2(cw2, Pp, WC)]
    w_slab = jnp.concatenate(w_parts, axis=0)
    off_att = Dmp
    off_cw1 = Dmp + 12 * Hp
    off_cw2 = off_cw1 + Hp

    def row(v):
        v = v.reshape(1, -1)
        return jnp.pad(v, ((0, 0), (0, VC - v.shape[1])))

    v_parts = [row(fc1b)]
    for layer in range(3):
        for j in range(4):
            v_parts.append(row(ab[layer, j]))
    v_parts += [row(cb1), row(cb2), row(mb1)]
    v_parts.append(pad2(mw1.T, MH, VC))      # classifier fc1 weight, transposed (VPU path)
    v_parts += [row(mw2.T), row(mb2)]
    v_slab = jnp.concatenate(v_parts, axis=0)

    kernel = functools.partial(
        _model_kernel, tau=TAU, pdim=P, mh=MH,
        off_att=off_att, off_cw1=off_cw1, off_cw2=off_cw2, h_stride=Hp)

    # advisory cost estimate (latency-bound custom call)
    rows = B * L
    flops = (2 * rows * Dm * H
             + 3 * (4 * 2 * rows * H * H + 4 * B * L * L * H)
             + 2 * (2 * rows) * H * P + 2 * (2 * rows) * P * H
             + 3 * 2 * B * L * L * H
             + 2 * B * H * MH + 2 * B * MH)
    transc = (3 * B * L * L + 2 * rows * P + 3 * B * L * L + 3 * B * L
              + 2 * B * L + 2 * rows + 3 * B * L + B)
    bytes_accessed = 4 * (esm.size + manual.size + mask3.size
                          + w_slab.size + v_slab.size + B * 2)

    sem = ("parallel",) if batch_blocks > 1 else ("arbitrary",)
    out = pl.pallas_call(
        kernel,
        out_shape=jax.ShapeDtypeStruct((batch_blocks, Bb, 2), jnp.float32),
        grid=(batch_blocks,),
        in_specs=[
            pl.BlockSpec((Bb, L, H), lambda b: (b, 0, 0)),
            pl.BlockSpec((Bb, L, Dm), lambda b: (b, 0, 0)),
            pl.BlockSpec((Bb, L, 1), lambda b: (b, 0, 0)),
            pl.BlockSpec(w_slab.shape, lambda b: (0, 0)),
            pl.BlockSpec(v_slab.shape, lambda b: (0, 0)),
        ],
        out_specs=pl.BlockSpec((1, Bb, 2), lambda b: (b, 0, 0)),
        compiler_params=pltpu.CompilerParams(dimension_semantics=sem),
        cost_estimate=pl.CostEstimate(flops=int(flops), transcendentals=int(transc),
                                      bytes_accessed=int(bytes_accessed)),
    )(esm, manual, mask3, w_slab, v_slab)

    out = out.reshape(B, 2)
    x = out[:, 0:1]
    loss = jnp.mean(out[:, 1])
    return x, loss


# ---------------- pure-JAX reference (for verification) ----------------

def reference_forward(esm, manual, mask, params):
    fc1w, fc1b, aw, ab, cw1, cb1, cw2, cb2, mw1, mb1, mw2, mb2 = params
    B, L, H = esm.shape
    scale = math.sqrt(H)
    m3 = mask.reshape(B, L, 1).astype(jnp.float32)

    def linear(x, w, b):
        return x @ w + b

    def attn(layer, q, k, v):
        Q = linear(q, aw[layer, 0], ab[layer, 0])
        K = linear(k, aw[layer, 1], ab[layer, 1])
        V = linear(v, aw[layer, 2], ab[layer, 2])
        energy = jnp.einsum('bld,bmd->blm', Q, K) / scale
        energy = jnp.where(m3 == 0.0, NEG_BIG, energy)
        a = jax.nn.softmax(energy, axis=-1)
        return linear(jnp.einsum('blm,bmd->bld', a, V), aw[layer, 3], ab[layer, 3])

    manp = linear(manual, fc1w, fc1b)
    f1 = attn(0, manp, esm, esm)
    f2 = attn(1, f1, manp, manp)
    f3 = attn(2, f2, esm, esm)

    def proj(z):
        t = linear(z, cw1, cb1)
        t = jnp.where(t > 0, t, jnp.exp(t) - 1.0)
        return linear(t, cw2, cb2)

    def normalize(z):
        n = jnp.sqrt(jnp.sum(z * z, axis=-1, keepdims=True))
        return z / jnp.maximum(n, 1e-12)

    def semi(z1, z2):
        z1n, z2n = normalize(z1), normalize(z2)
        refl = jnp.exp(jnp.einsum('bld,bmd->blm', z1n, z1n) / TAU)
        betw = jnp.exp(jnp.einsum('bld,bmd->blm', z1n, z2n) / TAU)
        rd = jnp.diagonal(refl, axis1=-2, axis2=-1)
        bd = jnp.diagonal(betw, axis1=-2, axis2=-1)
        return (-jnp.log(bd / (refl.sum(-1) + betw.sum(-1) - rd))).sum(-1)

    h1, h2 = proj(f1), proj(f3)
    loss = ((semi(h1, h2) + semi(h2, h1)) * 0.5).mean()

    xm = jnp.mean(f3, axis=1)
    hcls = jax.nn.relu(linear(xm, mw1, mb1))
    x = jax.nn.sigmoid(linear(hcls, mw2, mb2))
    return x, loss


# ---------------- deterministic parameter init (PyTorch nn.Linear style) ----------------

def init_linear(key, fan_in, fan_out):
    kw, kb = jax.random.split(key)
    bound = 1.0 / math.sqrt(fan_in)
    w = jax.random.uniform(kw, (fan_in, fan_out), jnp.float32, -bound, bound)
    b = jax.random.uniform(kb, (1, fan_out), jnp.float32, -bound, bound)
    return w, b


if __name__ == "__main__":
    B, L = 2, 8
    manual_dim, esm_dim, proj_dim, mlp_hidden = 16, 32, 32, 2

    key = jax.random.PRNGKey(0)
    keys = jax.random.split(key, 20)

    # fc1: manual_dim -> esm_dim
    fc1w, fc1b = init_linear(keys[0], manual_dim, esm_dim)

    # three self-attention layers, each with 4 linears (q, k, v, fc), all esm_dim -> esm_dim
    aw_list, ab_list = [], []
    ki = 1
    for _layer in range(3):
        ws, bs = [], []
        for _lin in range(4):
            w, b = init_linear(keys[ki], esm_dim, esm_dim)
            ki += 1
            ws.append(w)
            bs.append(b)
        aw_list.append(jnp.stack(ws))                    # (4, H, H)
        ab_list.append(jnp.stack([bb[None] for bb in bs]).reshape(4, 1, esm_dim))
    aw = jnp.stack(aw_list)                              # (3, 4, H, H)
    ab = jnp.stack(ab_list)                              # (3, 4, 1, H)

    # contrastive projection: H -> P -> H
    cw1, cb1 = init_linear(keys[ki], esm_dim, proj_dim); ki += 1
    cw2, cb2 = init_linear(keys[ki], proj_dim, esm_dim); ki += 1

    # MLP classifier: H -> mlp_hidden -> 1
    mw1, mb1 = init_linear(keys[ki], esm_dim, mlp_hidden); ki += 1
    mw2, mb2 = init_linear(keys[ki], mlp_hidden, 1); ki += 1

    params = (fc1w, fc1b, aw, ab, cw1, cb1, cw2, cb2, mw1, mb1, mw2, mb2)

    # inputs
    esm = jax.random.normal(keys[ki], (B, L, esm_dim), jnp.float32); ki += 1
    manual = jax.random.normal(keys[ki], (B, L, manual_dim), jnp.float32); ki += 1
    lengths = jnp.array([[L], [5]], dtype=jnp.int32)                 # valid lengths per example
    mask = (jnp.arange(L)[None, :] < lengths).astype(jnp.float32)    # (B, L)

    x_k, loss_k = model_forward(esm, manual, mask, params)
    jax.block_until_ready((x_k, loss_k))

    x_r, loss_r = reference_forward(esm, manual, mask, params)
    # tolerance accounts for the EUP approx-reciprocal softmax denominator
    assert jnp.allclose(x_k, x_r, rtol=2e-3, atol=2e-3), (x_k, x_r)
    assert jnp.allclose(loss_k, loss_r, rtol=2e-3, atol=2e-3), (loss_k, loss_r)

    print("KERNEL_OK")
</pallas_src>

<mosaic_0001>
module attributes {stable_mosaic.version = 11 : i64} {
  func.func @_model_kernel(%arg0: i32, %arg1: memref<2x8x32xf32, #tpu.memory_space<vmem>>, %arg2: memref<2x8x16xf32, #tpu.memory_space<vmem>>, %arg3: memref<2x8x1xf32, #tpu.memory_space<vmem>>, %arg4: memref<464x32xf32, #tpu.memory_space<vmem>>, %arg5: memref<20x32xf32, #tpu.memory_space<vmem>>, %arg6: memref<1x2x2xf32, #tpu.memory_space<vmem>>) attributes {dimension_semantics = [#tpu.dimension_semantics<arbitrary>], iteration_bounds = array<i64: 1>, scalar_prefetch = 0 : i64, scratch_operands = 0 : i64, tpu.core_type = #tpu.core_type<tc>, window_params = [{transform_indices = @transform_0, window_bounds = array<i64: 2, 8, 32>}, {transform_indices = @transform_1, window_bounds = array<i64: 2, 8, 16>}, {transform_indices = @transform_2, window_bounds = array<i64: 2, 8, 1>}, {pipeline_mode = #tpu.pipeline_mode<synchronous>, transform_indices = @transform_3, window_bounds = array<i64: 464, 32>}, {pipeline_mode = #tpu.pipeline_mode<synchronous>, transform_indices = @transform_4, window_bounds = array<i64: 20, 32>}, {transform_indices = @transform_5, window_bounds = array<i64: 1, 2, 2>}]} {
    %c0 = arith.constant 0 : index
    %c0_0 = arith.constant 0 : index
    %c0_1 = arith.constant 0 : index
    %0 = vector.load %arg1[%c0, %c0_0, %c0_1] : memref<2x8x32xf32, #tpu.memory_space<vmem>>, vector<2x8x32xf32>
    %1 = vector.shape_cast %0 : vector<2x8x32xf32> to vector<16x32xf32>
    %c0_2 = arith.constant 0 : index
    %c0_3 = arith.constant 0 : index
    %c0_4 = arith.constant 0 : index
    %2 = vector.load %arg2[%c0_2, %c0_3, %c0_4] : memref<2x8x16xf32, #tpu.memory_space<vmem>>, vector<2x8x16xf32>
    %3 = vector.shape_cast %2 : vector<2x8x16xf32> to vector<16x16xf32>
    %c0_5 = arith.constant 0 : index
    %c0_6 = arith.constant 0 : index
    %c0_7 = arith.constant 0 : index
    %4 = vector.load %arg3[%c0_5, %c0_6, %c0_7] : memref<2x8x1xf32, #tpu.memory_space<vmem>>, vector<2x8x1xf32>
    %cst = arith.constant 0.000000e+00 : f32
    %5 = vector.broadcast %cst : f32 to vector<2x8x1xf32>
    %6 = arith.cmpf oeq, %4, %5 : vector<2x8x1xf32>
    %7 = vector.shape_cast %6 : vector<2x8x1xi1> to vector<2x8x1xi1>
    %8 = vector.broadcast %7 : vector<2x8x1xi1> to vector<2x8x8xi1>
    %c0_8 = arith.constant 0 : index
    %c0_9 = arith.constant 0 : index
    %9 = vector.load %arg4[%c0_8, %c0_9] : memref<464x32xf32, #tpu.memory_space<vmem>>, vector<16x32xf32>
    %cst_10 = arith.constant dense<0.000000e+00> : vector<16x32xf32>
    %10 = tpu.matmul %3, %9, %cst_10 {dimension_numbers = #tpu.dot_dimension_numbers<[1], [0], [0], [1], [0, 0, 1, 1], [], []>} : vector<16x16xf32>, vector<16x32xf32>, vector<16x32xf32> -> vector<16x32xf32>
    %c0_11 = arith.constant 0 : index
    %c0_12 = arith.constant 0 : index
    %11 = vector.load %arg5[%c0_11, %c0_12] : memref<20x32xf32, #tpu.memory_space<vmem>>, vector<1x32xf32>
    %12 = vector.broadcast %11 : vector<1x32xf32> to vector<16x32xf32>
    %13 = arith.addf %10, %12 : vector<16x32xf32>
    %c16 = arith.constant 16 : index
    %c0_13 = arith.constant 0 : index
    %14 = vector.load %arg4[%c16, %c0_13] : memref<464x32xf32, #tpu.memory_space<vmem>>, vector<32x32xf32>
    %cst_14 = arith.constant dense<0.000000e+00> : vector<16x32xf32>
    %15 = tpu.matmul %13, %14, %cst_14 {dimension_numbers = #tpu.dot_dimension_numbers<[1], [0], [0], [1], [0, 0, 1, 1], [], []>} : vector<16x32xf32>, vector<32x32xf32>, vector<16x32xf32> -> vector<16x32xf32>
    %c1 = arith.constant 1 : index
    %c0_15 = arith.constant 0 : index
    %16 = vector.load %arg5[%c1, %c0_15] : memref<20x32xf32, #tpu.memory_space<vmem>>, vector<1x32xf32>
    %17 = vector.broadcast %16 : vector<1x32xf32> to vector<16x32xf32>
    %18 = arith.addf %15, %17 : vector<16x32xf32>
    %19 = vector.shape_cast %18 : vector<16x32xf32> to vector<2x8x32xf32>
    %c48 = arith.constant 48 : index
    %c0_16 = arith.constant 0 : index
    %20 = vector.load %arg4[%c48, %c0_16] : memref<464x32xf32, #tpu.memory_space<vmem>>, vector<32x32xf32>
    %cst_17 = arith.constant dense<0.000000e+00> : vector<16x32xf32>
    %21 = tpu.matmul %1, %20, %cst_17 {dimension_numbers = #tpu.dot_dimension_numbers<[1], [0], [0], [1], [0, 0, 1, 1], [], []>} : vector<16x32xf32>, vector<32x32xf32>, vector<16x32xf32> -> vector<16x32xf32>
    %c2 = arith.constant 2 : index
    %c0_18 = arith.constant 0 : index
    %22 = vector.load %arg5[%c2, %c0_18] : memref<20x32xf32, #tpu.memory_space<vmem>>, vector<1x32xf32>
    %23 = vector.broadcast %22 : vector<1x32xf32> to vector<16x32xf32>
    %24 = arith.addf %21, %23 : vector<16x32xf32>
    %25 = vector.shape_cast %24 : vector<16x32xf32> to vector<2x8x32xf32>
    %c80 = arith.constant 80 : index
    %c0_19 = arith.constant 0 : index
    %26 = vector.load %arg4[%c80, %c0_19] : memref<464x32xf32, #tpu.memory_space<vmem>>, vector<32x32xf32>
    %cst_20 = arith.constant dense<0.000000e+00> : vector<16x32xf32>
    %27 = tpu.matmul %1, %26, %cst_20 {dimension_numbers = #tpu.dot_dimension_numbers<[1], [0], [0], [1], [0, 0, 1, 1], [], []>} : vector<16x32xf32>, vector<32x32xf32>, vector<16x32xf32> -> vector<16x32xf32>
    %c3 = arith.constant 3 : index
    %c0_21 = arith.constant 0 : index
    %28 = vector.load %arg5[%c3, %c0_21] : memref<20x32xf32, #tpu.memory_space<vmem>>, vector<1x32xf32>
    %29 = vector.broadcast %28 : vector<1x32xf32> to vector<16x32xf32>
    %30 = arith.addf %27, %29 : vector<16x32xf32>
    %31 = vector.shape_cast %30 : vector<16x32xf32> to vector<2x8x32xf32>
    "tpu.trace_start"() <{level = 10 : i32, message = "bld,bmd->blm"}> : () -> ()
    %cst_22 = arith.constant dense<0.000000e+00> : vector<2x8x8xf32>
    %32 = tpu.matmul %19, %25, %cst_22 {dimension_numbers = #tpu.dot_dimension_numbers<[2], [2], [1], [1], [0, 0, 0, 1, 1, 1], [0], [0]>} : vector<2x8x32xf32>, vector<2x8x32xf32>, vector<2x8x8xf32> -> vector<2x8x8xf32>
    "tpu.trace_stop"() : () -> ()
    %cst_23 = arith.constant 0.176776692 : f32
    %33 = vector.broadcast %cst_23 : f32 to vector<2x8x8xf32>
    %34 = arith.mulf %32, %33 : vector<2x8x8xf32>
    %cst_24 = arith.constant -1.000000e+10 : f32
    %35 = vector.broadcast %cst_24 : f32 to vector<2x8x8xf32>
    %36 = arith.select %8, %35, %34 : vector<2x8x8xi1>, vector<2x8x8xf32>
    %cst_25 = arith.constant dense<0xFF800000> : vector<2x8xf32>
    %37 = vector.multi_reduction <maximumf>, %36, %cst_25 [2] : vector<2x8x8xf32> to vector<2x8xf32>
    %38 = vector.shape_cast %37 : vector<2x8xf32> to vector<2x8x1xf32>
    %39 = vector.broadcast %38 : vector<2x8x1xf32> to vector<2x8x8xf32>
    %40 = arith.subf %36, %39 : vector<2x8x8xf32>
    %41 = math.exp %40 : vector<2x8x8xf32>
    %cst_26 = arith.constant dense<0.000000e+00> : vector<2x8xf32>
    %42 = vector.multi_reduction <add>, %41, %cst_26 [2] : vector<2x8x8xf32> to vector<2x8xf32>
    %43 = vector.shape_cast %42 : vector<2x8xf32> to vector<2x8x1xf32>
    %44 = tpu.reciprocal %43 {approx = true} : vector<2x8x1xf32> -> vector<2x8x1xf32>
    %45 = vector.broadcast %44 : vector<2x8x1xf32> to vector<2x8x8xf32>
    %46 = arith.mulf %41, %45 : vector<2x8x8xf32>
    "tpu.trace_start"() <{level = 10 : i32, message = "blm,bmd->bld"}> : () -> ()
    %cst_27 = arith.constant dense<0.000000e+00> : vector<2x8x32xf32>
    %47 = tpu.matmul %46, %31, %cst_27 {dimension_numbers = #tpu.dot_dimension_numbers<[2], [1], [1], [2], [0, 0, 0, 1, 1, 2], [0], [0]>} : vector<2x8x8xf32>, vector<2x8x32xf32>, vector<2x8x32xf32> -> vector<2x8x32xf32>
    "tpu.trace_stop"() : () -> ()
    %48 = vector.shape_cast %47 : vector<2x8x32xf32> to vector<16x32xf32>
    %c112 = arith.constant 112 : index
    %c0_28 = arith.constant 0 : index
    %49 = vector.load %arg4[%c112, %c0_28] : memref<464x32xf32, #tpu.memory_space<vmem>>, vector<32x32xf32>
    %cst_29 = arith.constant dense<0.000000e+00> : vector<16x32xf32>
    %50 = tpu.matmul %48, %49, %cst_29 {dimension_numbers = #tpu.dot_dimension_numbers<[1], [0], [0], [1], [0, 0, 1, 1], [], []>} : vector<16x32xf32>, vector<32x32xf32>, vector<16x32xf32> -> vector<16x32xf32>
    %c4 = arith.constant 4 : index
    %c0_30 = arith.constant 0 : index
    %51 = vector.load %arg5[%c4, %c0_30] : memref<20x32xf32, #tpu.memory_space<vmem>>, vector<1x32xf32>
    %52 = vector.broadcast %51 : vector<1x32xf32> to vector<16x32xf32>
    %53 = arith.addf %50, %52 : vector<16x32xf32>
    %c144 = arith.constant 144 : index
    %c0_31 = arith.constant 0 : index
    %54 = vector.load %arg4[%c144, %c0_31] : memref<464x32xf32, #tpu.memory_space<vmem>>, vector<32x32xf32>
    %cst_32 = arith.constant dense<0.000000e+00> : vector<16x32xf32>
    %55 = tpu.matmul %53, %54, %cst_32 {dimension_numbers = #tpu.dot_dimension_numbers<[1], [0], [0], [1], [0, 0, 1, 1], [], []>} : vector<16x32xf32>, vector<32x32xf32>, vector<16x32xf32> -> vector<16x32xf32>
    %c5 = arith.constant 5 : index
    %c0_33 = arith.constant 0 : index
    %56 = vector.load %arg5[%c5, %c0_33] : memref<20x32xf32, #tpu.memory_space<vmem>>, vector<1x32xf32>
    %57 = vector.broadcast %56 : vector<1x32xf32> to vector<16x32xf32>
    %58 = arith.addf %55, %57 : vector<16x32xf32>
    %59 = vector.shape_cast %58 : vector<16x32xf32> to vector<2x8x32xf32>
    %c176 = arith.constant 176 : index
    %c0_34 = arith.constant 0 : index
    %60 = vector.load %arg4[%c176, %c0_34] : memref<464x32xf32, #tpu.memory_space<vmem>>, vector<32x32xf32>
    %cst_35 = arith.constant dense<0.000000e+00> : vector<16x32xf32>
    %61 = tpu.matmul %13, %60, %cst_35 {dimension_numbers = #tpu.dot_dimension_numbers<[1], [0], [0], [1], [0, 0, 1, 1], [], []>} : vector<16x32xf32>, vector<32x32xf32>, vector<16x32xf32> -> vector<16x32xf32>
    %c6 = arith.constant 6 : index
    %c0_36 = arith.constant 0 : index
    %62 = vector.load %arg5[%c6, %c0_36] : memref<20x32xf32, #tpu.memory_space<vmem>>, vector<1x32xf32>
    %63 = vector.broadcast %62 : vector<1x32xf32> to vector<16x32xf32>
    %64 = arith.addf %61, %63 : vector<16x32xf32>
    %65 = vector.shape_cast %64 : vector<16x32xf32> to vector<2x8x32xf32>
    %c208 = arith.constant 208 : index
    %c0_37 = arith.constant 0 : index
    %66 = vector.load %arg4[%c208, %c0_37] : memref<464x32xf32, #tpu.memory_space<vmem>>, vector<32x32xf32>
    %cst_38 = arith.constant dense<0.000000e+00> : vector<16x32xf32>
    %67 = tpu.matmul %13, %66, %cst_38 {dimension_numbers = #tpu.dot_dimension_numbers<[1], [0], [0], [1], [0, 0, 1, 1], [], []>} : vector<16x32xf32>, vector<32x32xf32>, vector<16x32xf32> -> vector<16x32xf32>
    %c7 = arith.constant 7 : index
    %c0_39 = arith.constant 0 : index
    %68 = vector.load %arg5[%c7, %c0_39] : memref<20x32xf32, #tpu.memory_space<vmem>>, vector<1x32xf32>
    %69 = vector.broadcast %68 : vector<1x32xf32> to vector<16x32xf32>
    %70 = arith.addf %67, %69 : vector<16x32xf32>
    %71 = vector.shape_cast %70 : vector<16x32xf32> to vector<2x8x32xf32>
    "tpu.trace_start"() <{level = 10 : i32, message = "bld,bmd->blm"}> : () -> ()
    %cst_40 = arith.constant dense<0.000000e+00> : vector<2x8x8xf32>
    %72 = tpu.matmul %59, %65, %cst_40 {dimension_numbers = #tpu.dot_dimension_numbers<[2], [2], [1], [1], [0, 0, 0, 1, 1, 1], [0], [0]>} : vector<2x8x32xf32>, vector<2x8x32xf32>, vector<2x8x8xf32> -> vector<2x8x8xf32>
    "tpu.trace_stop"() : () -> ()
    %cst_41 = arith.constant 0.176776692 : f32
    %73 = vector.broadcast %cst_41 : f32 to vector<2x8x8xf32>
    %74 = arith.mulf %72, %73 : vector<2x8x8xf32>
    %cst_42 = arith.constant -1.000000e+10 : f32
    %75 = vector.broadcast %cst_42 : f32 to vector<2x8x8xf32>
    %76 = arith.select %8, %75, %74 : vector<2x8x8xi1>, vector<2x8x8xf32>
    %cst_43 = arith.constant dense<0xFF800000> : vector<2x8xf32>
    %77 = vector.multi_reduction <maximumf>, %76, %cst_43 [2] : vector<2x8x8xf32> to vector<2x8xf32>
    %78 = vector.shape_cast %77 : vector<2x8xf32> to vector<2x8x1xf32>
    %79 = vector.broadcast %78 : vector<2x8x1xf32> to vector<2x8x8xf32>
    %80 = arith.subf %76, %79 : vector<2x8x8xf32>
    %81 = math.exp %80 : vector<2x8x8xf32>
    %cst_44 = arith.constant dense<0.000000e+00> : vector<2x8xf32>
    %82 = vector.multi_reduction <add>, %81, %cst_44 [2] : vector<2x8x8xf32> to vector<2x8xf32>
    %83 = vector.shape_cast %82 : vector<2x8xf32> to vector<2x8x1xf32>
    %84 = tpu.reciprocal %83 {approx = true} : vector<2x8x1xf32> -> vector<2x8x1xf32>
    %85 = vector.broadcast %84 : vector<2x8x1xf32> to vector<2x8x8xf32>
    %86 = arith.mulf %81, %85 : vector<2x8x8xf32>
    "tpu.trace_start"() <{level = 10 : i32, message = "blm,bmd->bld"}> : () -> ()
    %cst_45 = arith.constant dense<0.000000e+00> : vector<2x8x32xf32>
    %87 = tpu.matmul %86, %71, %cst_45 {dimension_numbers = #tpu.dot_dimension_numbers<[2], [1], [1], [2], [0, 0, 0, 1, 1, 2], [0], [0]>} : vector<2x8x8xf32>, vector<2x8x32xf32>, vector<2x8x32xf32> -> vector<2x8x32xf32>
    "tpu.trace_stop"() : () -> ()
    %88 = vector.shape_cast %87 : vector<2x8x32xf32> to vector<16x32xf32>
    %c240 = arith.constant 240 : index
    %c0_46 = arith.constant 0 : index
    %89 = vector.load %arg4[%c240, %c0_46] : memref<464x32xf32, #tpu.memory_space<vmem>>, vector<32x32xf32>
    %cst_47 = arith.constant dense<0.000000e+00> : vector<16x32xf32>
    %90 = tpu.matmul %88, %89, %cst_47 {dimension_numbers = #tpu.dot_dimension_numbers<[1], [0], [0], [1], [0, 0, 1, 1], [], []>} : vector<16x32xf32>, vector<32x32xf32>, vector<16x32xf32> -> vector<16x32xf32>
    %c8 = arith.constant 8 : index
    %c0_48 = arith.constant 0 : index
    %91 = vector.load %arg5[%c8, %c0_48] : memref<20x32xf32, #tpu.memory_space<vmem>>, vector<1x32xf32>
    %92 = vector.broadcast %91 : vector<1x32xf32> to vector<16x32xf32>
    %93 = arith.addf %90, %92 : vector<16x32xf32>
    %c272 = arith.constant 272 : index
    %c0_49 = arith.constant 0 : index
    %94 = vector.load %arg4[%c272, %c0_49] : memref<464x32xf32, #tpu.memory_space<vmem>>, vector<32x32xf32>
    %cst_50 = arith.constant dense<0.000000e+00> : vector<16x32xf32>
    %95 = tpu.matmul %93, %94, %cst_50 {dimension_numbers = #tpu.dot_dimension_numbers<[1], [0], [0], [1], [0, 0, 1, 1], [], []>} : vector<16x32xf32>, vector<32x32xf32>, vector<16x32xf32> -> vector<16x32xf32>
    %c9 = arith.constant 9 : index
    %c0_51 = arith.constant 0 : index
    %96 = vector.load %arg5[%c9, %c0_51] : memref<20x32xf32, #tpu.memory_space<vmem>>, vector<1x32xf32>
    %97 = vector.broadcast %96 : vector<1x32xf32> to vector<16x32xf32>
    %98 = arith.addf %95, %97 : vector<16x32xf32>
    %99 = vector.shape_cast %98 : vector<16x32xf32> to vector<2x8x32xf32>
    %c304 = arith.constant 304 : index
    %c0_52 = arith.constant 0 : index
    %100 = vector.load %arg4[%c304, %c0_52] : memref<464x32xf32, #tpu.memory_space<vmem>>, vector<32x32xf32>
    %cst_53 = arith.constant dense<0.000000e+00> : vector<16x32xf32>
    %101 = tpu.matmul %1, %100, %cst_53 {dimension_numbers = #tpu.dot_dimension_numbers<[1], [0], [0], [1], [0, 0, 1, 1], [], []>} : vector<16x32xf32>, vector<32x32xf32>, vector<16x32xf32> -> vector<16x32xf32>
    %c10 = arith.constant 10 : index
    %c0_54 = arith.constant 0 : index
    %102 = vector.load %arg5[%c10, %c0_54] : memref<20x32xf32, #tpu.memory_space<vmem>>, vector<1x32xf32>
    %103 = vector.broadcast %102 : vector<1x32xf32> to vector<16x32xf32>
    %104 = arith.addf %101, %103 : vector<16x32xf32>
    %105 = vector.shape_cast %104 : vector<16x32xf32> to vector<2x8x32xf32>
    %c336 = arith.constant 336 : index
    %c0_55 = arith.constant 0 : index
    %106 = vector.load %arg4[%c336, %c0_55] : memref<464x32xf32, #tpu.memory_space<vmem>>, vector<32x32xf32>
    %cst_56 = arith.constant dense<0.000000e+00> : vector<16x32xf32>
    %107 = tpu.matmul %1, %106, %cst_56 {dimension_numbers = #tpu.dot_dimension_numbers<[1], [0], [0], [1], [0, 0, 1, 1], [], []>} : vector<16x32xf32>, vector<32x32xf32>, vector<16x32xf32> -> vector<16x32xf32>
    %c11 = arith.constant 11 : index
    %c0_57 = arith.constant 0 : index
    %108 = vector.load %arg5[%c11, %c0_57] : memref<20x32xf32, #tpu.memory_space<vmem>>, vector<1x32xf32>
    %109 = vector.broadcast %108 : vector<1x32xf32> to vector<16x32xf32>
    %110 = arith.addf %107, %109 : vector<16x32xf32>
    %111 = vector.shape_cast %110 : vector<16x32xf32> to vector<2x8x32xf32>
    "tpu.trace_start"() <{level = 10 : i32, message = "bld,bmd->blm"}> : () -> ()
    %cst_58 = arith.constant dense<0.000000e+00> : vector<2x8x8xf32>
    %112 = tpu.matmul %99, %105, %cst_58 {dimension_numbers = #tpu.dot_dimension_numbers<[2], [2], [1], [1], [0, 0, 0, 1, 1, 1], [0], [0]>} : vector<2x8x32xf32>, vector<2x8x32xf32>, vector<2x8x8xf32> -> vector<2x8x8xf32>
    "tpu.trace_stop"() : () -> ()
    %cst_59 = arith.constant 0.176776692 : f32
    %113 = vector.broadcast %cst_59 : f32 to vector<2x8x8xf32>
    %114 = arith.mulf %112, %113 : vector<2x8x8xf32>
    %cst_60 = arith.constant -1.000000e+10 : f32
    %115 = vector.broadcast %cst_60 : f32 to vector<2x8x8xf32>
    %116 = arith.select %8, %115, %114 : vector<2x8x8xi1>, vector<2x8x8xf32>
    %cst_61 = arith.constant dense<0xFF800000> : vector<2x8xf32>
    %117 = vector.multi_reduction <maximumf>, %116, %cst_61 [2] : vector<2x8x8xf32> to vector<2x8xf32>
    %118 = vector.shape_cast %117 : vector<2x8xf32> to vector<2x8x1xf32>
    %119 = vector.broadcast %118 : vector<2x8x1xf32> to vector<2x8x8xf32>
    %120 = arith.subf %116, %119 : vector<2x8x8xf32>
    %121 = math.exp %120 : vector<2x8x8xf32>
    %cst_62 = arith.constant dense<0.000000e+00> : vector<2x8xf32>
    %122 = vector.multi_reduction <add>, %121, %cst_62 [2] : vector<2x8x8xf32> to vector<2x8xf32>
    %123 = vector.shape_cast %122 : vector<2x8xf32> to vector<2x8x1xf32>
    %124 = tpu.reciprocal %123 {approx = true} : vector<2x8x1xf32> -> vector<2x8x1xf32>
    %125 = vector.broadcast %124 : vector<2x8x1xf32> to vector<2x8x8xf32>
    %126 = arith.mulf %121, %125 : vector<2x8x8xf32>
    "tpu.trace_start"() <{level = 10 : i32, message = "blm,bmd->bld"}> : () -> ()
    %cst_63 = arith.constant dense<0.000000e+00> : vector<2x8x32xf32>
    %127 = tpu.matmul %126, %111, %cst_63 {dimension_numbers = #tpu.dot_dimension_numbers<[2], [1], [1], [2], [0, 0, 0, 1, 1, 2], [0], [0]>} : vector<2x8x8xf32>, vector<2x8x32xf32>, vector<2x8x32xf32> -> vector<2x8x32xf32>
    "tpu.trace_stop"() : () -> ()
    %128 = vector.shape_cast %127 : vector<2x8x32xf32> to vector<16x32xf32>
    %c368 = arith.constant 368 : index
    %c0_64 = arith.constant 0 : index
    %129 = vector.load %arg4[%c368, %c0_64] : memref<464x32xf32, #tpu.memory_space<vmem>>, vector<32x32xf32>
    %cst_65 = arith.constant dense<0.000000e+00> : vector<16x32xf32>
    %130 = tpu.matmul %128, %129, %cst_65 {dimension_numbers = #tpu.dot_dimension_numbers<[1], [0], [0], [1], [0, 0, 1, 1], [], []>} : vector<16x32xf32>, vector<32x32xf32>, vector<16x32xf32> -> vector<16x32xf32>
    %c12 = arith.constant 12 : index
    %c0_66 = arith.constant 0 : index
    %131 = vector.load %arg5[%c12, %c0_66] : memref<20x32xf32, #tpu.memory_space<vmem>>, vector<1x32xf32>
    %132 = vector.broadcast %131 : vector<1x32xf32> to vector<16x32xf32>
    %133 = arith.addf %130, %132 : vector<16x32xf32>
    %134 = tpu.concatenate %53, %133 in 0 : vector<16x32xf32>, vector<16x32xf32> -> vector<32x32xf32>
    %c400 = arith.constant 400 : index
    %c0_67 = arith.constant 0 : index
    %135 = vector.load %arg4[%c400, %c0_67] : memref<464x32xf32, #tpu.memory_space<vmem>>, vector<32x32xf32>
    %cst_68 = arith.constant dense<0.000000e+00> : vector<32x32xf32>
    %136 = tpu.matmul %134, %135, %cst_68 {dimension_numbers = #tpu.dot_dimension_numbers<[1], [0], [0], [1], [0, 0, 1, 1], [], []>} : vector<32x32xf32>, vector<32x32xf32>, vector<32x32xf32> -> vector<32x32xf32>
    %c13 = arith.constant 13 : index
    %c0_69 = arith.constant 0 : index
    %137 = vector.load %arg5[%c13, %c0_69] : memref<20x32xf32, #tpu.memory_space<vmem>>, vector<1x32xf32>
    %138 = vector.broadcast %137 : vector<1x32xf32> to vector<32x32xf32>
    %139 = arith.addf %136, %138 : vector<32x32xf32>
    %cst_70 = arith.constant 0.000000e+00 : f32
    %140 = vector.broadcast %cst_70 : f32 to vector<32x32xf32>
    %141 = arith.cmpf ogt, %139, %140 : vector<32x32xf32>
    %142 = math.exp %139 : vector<32x32xf32>
    %cst_71 = arith.constant 1.000000e+00 : f32
    %143 = vector.broadcast %cst_71 : f32 to vector<32x32xf32>
    %144 = arith.subf %142, %143 : vector<32x32xf32>
    %145 = arith.select %141, %139, %144 : vector<32x32xi1>, vector<32x32xf32>
    %c432 = arith.constant 432 : index
    %c0_72 = arith.constant 0 : index
    %146 = vector.load %arg4[%c432, %c0_72] : memref<464x32xf32, #tpu.memory_space<vmem>>, vector<32x32xf32>
    %cst_73 = arith.constant dense<0.000000e+00> : vector<32x32xf32>
    %147 = tpu.matmul %145, %146, %cst_73 {dimension_numbers = #tpu.dot_dimension_numbers<[1], [0], [0], [1], [0, 0, 1, 1], [], []>} : vector<32x32xf32>, vector<32x32xf32>, vector<32x32xf32> -> vector<32x32xf32>
    %c14 = arith.constant 14 : index
    %c0_74 = arith.constant 0 : index
    %148 = vector.load %arg5[%c14, %c0_74] : memref<20x32xf32, #tpu.memory_space<vmem>>, vector<1x32xf32>
    %149 = vector.broadcast %148 : vector<1x32xf32> to vector<32x32xf32>
    %150 = arith.addf %147, %149 : vector<32x32xf32>
    %151 = arith.mulf %150, %150 : vector<32x32xf32>
    %cst_75 = arith.constant dense<0.000000e+00> : vector<32xf32>
    %152 = vector.multi_reduction <add>, %151, %cst_75 [1] : vector<32x32xf32> to vector<32xf32>
    %153 = vector.shape_cast %152 : vector<32xf32> to vector<32x1xf32>
    %cst_76 = arith.constant 1.000000e-24 : f32
    %154 = vector.broadcast %cst_76 : f32 to vector<32x1xf32>
    %155 = arith.maximumf %153, %154 : vector<32x1xf32>
    %156 = math.rsqrt %155 : vector<32x1xf32>
    %157 = vector.broadcast %156 : vector<32x1xf32> to vector<32x32xf32>
    %158 = arith.mulf %150, %157 : vector<32x32xf32>
    %159 = vector.extract_strided_slice %158 {offsets = [0, 0], sizes = [16, 32], strides = [1, 1]} : vector<32x32xf32> to vector<16x32xf32>
    %160 = vector.shape_cast %159 : vector<16x32xf32> to vector<2x8x32xf32>
    %161 = vector.extract_strided_slice %158 {offsets = [16, 0], sizes = [16, 32], strides = [1, 1]} : vector<32x32xf32> to vector<16x32xf32>
    %162 = vector.shape_cast %161 : vector<16x32xf32> to vector<2x8x32xf32>
    "tpu.trace_start"() <{level = 10 : i32, message = "bld,bmd->blm"}> : () -> ()
    %cst_77 = arith.constant dense<0.000000e+00> : vector<2x8x8xf32>
    %163 = tpu.matmul %160, %160, %cst_77 {dimension_numbers = #tpu.dot_dimension_numbers<[2], [2], [1], [1], [0, 0, 0, 1, 1, 1], [0], [0]>} : vector<2x8x32xf32>, vector<2x8x32xf32>, vector<2x8x8xf32> -> vector<2x8x8xf32>
    "tpu.trace_stop"() : () -> ()
    %cst_78 = arith.constant 2.000000e+00 : f32
    %164 = vector.broadcast %cst_78 : f32 to vector<2x8x8xf32>
    %165 = arith.mulf %163, %164 : vector<2x8x8xf32>
    %166 = math.exp %165 : vector<2x8x8xf32>
    "tpu.trace_start"() <{level = 10 : i32, message = "bld,bmd->blm"}> : () -> ()
    %cst_79 = arith.constant dense<0.000000e+00> : vector<2x8x8xf32>
    %167 = tpu.matmul %162, %162, %cst_79 {dimension_numbers = #tpu.dot_dimension_numbers<[2], [2], [1], [1], [0, 0, 0, 1, 1, 1], [0], [0]>} : vector<2x8x32xf32>, vector<2x8x32xf32>, vector<2x8x8xf32> -> vector<2x8x8xf32>
    "tpu.trace_stop"() : () -> ()
    %cst_80 = arith.constant 2.000000e+00 : f32
    %168 = vector.broadcast %cst_80 : f32 to vector<2x8x8xf32>
    %169 = arith.mulf %167, %168 : vector<2x8x8xf32>
    %170 = math.exp %169 : vector<2x8x8xf32>
    "tpu.trace_start"() <{level = 10 : i32, message = "bld,bmd->blm"}> : () -> ()
    %cst_81 = arith.constant dense<0.000000e+00> : vector<2x8x8xf32>
    %171 = tpu.matmul %160, %162, %cst_81 {dimension_numbers = #tpu.dot_dimension_numbers<[2], [2], [1], [1], [0, 0, 0, 1, 1, 1], [0], [0]>} : vector<2x8x32xf32>, vector<2x8x32xf32>, vector<2x8x8xf32> -> vector<2x8x8xf32>
    "tpu.trace_stop"() : () -> ()
    %cst_82 = arith.constant 2.000000e+00 : f32
    %172 = vector.broadcast %cst_82 : f32 to vector<2x8x8xf32>
    %173 = arith.mulf %171, %172 : vector<2x8x8xf32>
    %174 = math.exp %173 : vector<2x8x8xf32>
    %175 = arith.mulf %160, %160 : vector<2x8x32xf32>
    %cst_83 = arith.constant dense<0.000000e+00> : vector<2x8xf32>
    %176 = vector.multi_reduction <add>, %175, %cst_83 [2] : vector<2x8x32xf32> to vector<2x8xf32>
    %cst_84 = arith.constant 2.000000e+00 : f32
    %177 = vector.broadcast %cst_84 : f32 to vector<2x8xf32>
    %178 = arith.mulf %176, %177 : vector<2x8xf32>
    %179 = math.exp %178 : vector<2x8xf32>
    %180 = arith.mulf %162, %162 : vector<2x8x32xf32>
    %cst_85 = arith.constant dense<0.000000e+00> : vector<2x8xf32>
    %181 = vector.multi_reduction <add>, %180, %cst_85 [2] : vector<2x8x32xf32> to vector<2x8xf32>
    %cst_86 = arith.constant 2.000000e+00 : f32
    %182 = vector.broadcast %cst_86 : f32 to vector<2x8xf32>
    %183 = arith.mulf %181, %182 : vector<2x8xf32>
    %184 = math.exp %183 : vector<2x8xf32>
    %185 = arith.mulf %160, %162 : vector<2x8x32xf32>
    %cst_87 = arith.constant dense<0.000000e+00> : vector<2x8xf32>
    %186 = vector.multi_reduction <add>, %185, %cst_87 [2] : vector<2x8x32xf32> to vector<2x8xf32>
    %cst_88 = arith.constant 2.000000e+00 : f32
    %187 = vector.broadcast %cst_88 : f32 to vector<2x8xf32>
    %188 = arith.mulf %186, %187 : vector<2x8xf32>
    %cst_89 = arith.constant dense<0.000000e+00> : vector<2x8xf32>
    %189 = vector.multi_reduction <add>, %166, %cst_89 [2] : vector<2x8x8xf32> to vector<2x8xf32>
    %cst_90 = arith.constant dense<0.000000e+00> : vector<2x8xf32>
    %190 = vector.multi_reduction <add>, %174, %cst_90 [2] : vector<2x8x8xf32> to vector<2x8xf32>
    %191 = arith.addf %189, %190 : vector<2x8xf32>
    %192 = arith.subf %191, %179 : vector<2x8xf32>
    %cst_91 = arith.constant dense<0.000000e+00> : vector<2x8xf32>
    %193 = vector.multi_reduction <add>, %170, %cst_91 [2] : vector<2x8x8xf32> to vector<2x8xf32>
    %cst_92 = arith.constant dense<0.000000e+00> : vector<2x8xf32>
    %194 = vector.multi_reduction <add>, %174, %cst_92 [1] : vector<2x8x8xf32> to vector<2x8xf32>
    %195 = arith.addf %193, %194 : vector<2x8xf32>
    %196 = arith.subf %195, %184 : vector<2x8xf32>
    %197 = math.log %192 : vector<2x8xf32>
    %198 = arith.subf %197, %188 : vector<2x8xf32>
    %199 = math.log %196 : vector<2x8xf32>
    %200 = arith.subf %199, %188 : vector<2x8xf32>
    %cst_93 = arith.constant dense<0.000000e+00> : vector<2xf32>
    %201 = vector.multi_reduction <add>, %198, %cst_93 [1] : vector<2x8xf32> to vector<2xf32>
    %202 = vector.shape_cast %201 : vector<2xf32> to vector<2x1xf32>
    %cst_94 = arith.constant dense<0.000000e+00> : vector<2xf32>
    %203 = vector.multi_reduction <add>, %200, %cst_94 [1] : vector<2x8xf32> to vector<2xf32>
    %204 = vector.shape_cast %203 : vector<2xf32> to vector<2x1xf32>
    %205 = arith.addf %202, %204 : vector<2x1xf32>
    %cst_95 = arith.constant 5.000000e-01 : f32
    %206 = vector.broadcast %cst_95 : f32 to vector<2x1xf32>
    %207 = arith.mulf %206, %205 : vector<2x1xf32>
    %208 = vector.shape_cast %133 : vector<16x32xf32> to vector<2x8x32xf32>
    %cst_96 = arith.constant dense<0.000000e+00> : vector<2x32xf32>
    %209 = vector.multi_reduction <add>, %208, %cst_96 [1] : vector<2x8x32xf32> to vector<2x32xf32>
    %cst_97 = arith.constant 8.000000e+00 : f32
    %210 = vector.broadcast %cst_97 : f32 to vector<2x32xf32>
    %211 = arith.divf %209, %210 : vector<2x32xf32>
    %c16_98 = arith.constant 16 : index
    %c0_99 = arith.constant 0 : index
    %212 = vector.load %arg5[%c16_98, %c0_99] : memref<20x32xf32, #tpu.memory_space<vmem>>, vector<2x32xf32>
    %c15 = arith.constant 15 : index
    %c0_100 = arith.constant 0 : index
    %213 = vector.load %arg5[%c15, %c0_100] : memref<20x32xf32, #tpu.memory_space<vmem>>, vector<1x2xf32>
    %c18 = arith.constant 18 : index
    %c0_101 = arith.constant 0 : index
    %214 = vector.load %arg5[%c18, %c0_101] : memref<20x32xf32, #tpu.memory_space<vmem>>, vector<1x2xf32>
    %c19 = arith.constant 19 : index
    %c0_102 = arith.constant 0 : index
    %215 = vector.load %arg5[%c19, %c0_102] : memref<20x32xf32, #tpu.memory_space<vmem>>, vector<1x1xf32>
    %216 = vector.shape_cast %211 : vector<2x32xf32> to vector<2x1x32xf32>
    %217 = vector.shape_cast %212 : vector<2x32xf32> to vector<1x2x32xf32>
    %218 = vector.broadcast %216 : vector<2x1x32xf32> to vector<2x2x32xf32>
    %219 = vector.broadcast %217 : vector<1x2x32xf32> to vector<2x2x32xf32>
    %220 = arith.mulf %218, %219 : vector<2x2x32xf32>
    %cst_103 = arith.constant dense<0.000000e+00> : vector<2x2xf32>
    %221 = vector.multi_reduction <add>, %220, %cst_103 [2] : vector<2x2x32xf32> to vector<2x2xf32>
    %222 = vector.broadcast %213 : vector<1x2xf32> to vector<2x2xf32>
    %223 = arith.addf %221, %222 : vector<2x2xf32>
    %cst_104 = arith.constant 0.000000e+00 : f32
    %224 = vector.broadcast %cst_104 : f32 to vector<2x2xf32>
    %225 = arith.maximumf %223, %224 : vector<2x2xf32>
    %226 = vector.broadcast %214 : vector<1x2xf32> to vector<2x2xf32>
    %227 = arith.mulf %225, %226 : vector<2x2xf32>
    %cst_105 = arith.constant dense<0.000000e+00> : vector<2xf32>
    %228 = vector.multi_reduction <add>, %227, %cst_105 [1] : vector<2x2xf32> to vector<2xf32>
    %229 = vector.shape_cast %228 : vector<2xf32> to vector<2x1xf32>
    %230 = vector.broadcast %215 : vector<1x1xf32> to vector<2x1xf32>
    %231 = arith.addf %229, %230 : vector<2x1xf32>
    %232 = arith.negf %231 : vector<2x1xf32>
    %233 = math.exp %232 : vector<2x1xf32>
    %cst_106 = arith.constant 1.000000e+00 : f32
    %234 = vector.broadcast %cst_106 : f32 to vector<2x1xf32>
    %235 = arith.addf %234, %233 : vector<2x1xf32>
    %236 = arith.divf %234, %235 : vector<2x1xf32>
    %237 = tpu.concatenate %236, %207 in 1 : vector<2x1xf32>, vector<2x1xf32> -> vector<2x2xf32>
    %238 = vector.shape_cast %237 : vector<2x2xf32> to vector<1x2x2xf32>
    %c0_107 = arith.constant 0 : index
    %c0_108 = arith.constant 0 : index
    %c0_109 = arith.constant 0 : index
    %239 = vector.load %arg6[%c0_107, %c0_108, %c0_109] : memref<1x2x2xf32, #tpu.memory_space<vmem>>, vector<1x2x2xf32>
    tpu.vector_store %arg6[%c0_107, %c0_108, %c0_109], %238 {strides = array<i32>} : memref<1x2x2xf32, #tpu.memory_space<vmem>>, vector<1x2x2xf32>,
    return
  }
  func.func @transform_0(%arg0: i32) -> (i32, i32, i32) {
    %c0_i32 = arith.constant 0 : i32
    %c0_i32_0 = arith.constant 0 : i32
    %c0_i32_1 = arith.constant 0 : i32
    return %arg0, %c0_i32, %c0_i32_0 : i32, i32, i32
  }
  func.func @transform_1(%arg0: i32) -> (i32, i32, i32) {
    %c0_i32 = arith.constant 0 : i32
    %c0_i32_0 = arith.constant 0 : i32
    %c0_i32_1 = arith.constant 0 : i32
    return %arg0, %c0_i32, %c0_i32_0 : i32, i32, i32
  }
  func.func @transform_2(%arg0: i32) -> (i32, i32, i32) {
    %c0_i32 = arith.constant 0 : i32
    %c0_i32_0 = arith.constant 0 : i32
    %c0_i32_1 = arith.constant 0 : i32
    return %arg0, %c0_i32, %c0_i32_0 : i32, i32, i32
  }
  func.func @transform_3(%arg0: i32) -> (i32, i32) {
    %c0_i32 = arith.constant 0 : i32
    %c0_i32_0 = arith.constant 0 : i32
    %c0_i32_1 = arith.constant 0 : i32
    return %c0_i32, %c0_i32_0 : i32, i32
  }
  func.func @transform_4(%arg0: i32) -> (i32, i32) {
    %c0_i32 = arith.constant 0 : i32
    %c0_i32_0 = arith.constant 0 : i32
    %c0_i32_1 = arith.constant 0 : i32
    return %c0_i32, %c0_i32_0 : i32, i32
  }
  func.func @transform_5(%arg0: i32) -> (i32, i32, i32) {
    %c0_i32 = arith.constant 0 : i32
    %c0_i32_0 = arith.constant 0 : i32
    %c0_i32_1 = arith.constant 0 : i32
    return %arg0, %c0_i32, %c0_i32_0 : i32, i32, i32
  }
}

</mosaic_0001>

<llo_original>
// kernel: tpu_custom_call.1
$region0: #{tpu_custom_call.1}
  #allocation0 [shape = 'u32[]', space=smem, size = 0x4, offset = 0x4, fixed_abs, tag = 'smem constant byte address 0x4 - core index']
  #allocation1 [shape = 'u32[144,128]{1,0:T(1,128)}', space=vmem, size = 0x12000, scoped, tag = 'internal scratch']
  %s0 = inlined_call_operand.vmem [shape: f32[2,8,32], index: 0, kind: input, shape index: {}]
  %s1 = inlined_call_operand.vmem [shape: f32[2,8,16], index: 1, kind: input, shape index: {}]
  %s2 = inlined_call_operand.vmem [shape: f32[2,8,1], index: 2, kind: input, shape index: {}]
  %s3 = inlined_call_operand.vmem [shape: f32[464,32], index: 3, kind: input, shape index: {}]
  %s4 = inlined_call_operand.vmem [shape: f32[20,32], index: 4, kind: input, shape index: {}]
  %s5 = inlined_call_operand.hbm [shape: f32[1,2,2], index: 5, kind: output, shape index: {}]
  %s6 = sld [smem:[#allocation0]]
  $region30: #{tpu_custom_call.1} parent=0
    _
  %s8 = ssub.s32 1, %s6
  %s9 = scalar_select 0, %s8, %s6
  $region1: #{tpu_custom_call.1} parent=0
    #allocation2 [shape = 'u8[1024]{0}', space=vmem, size = 0x400, scoped, tag = 'output window, operand 0, single buffered']
    #allocation3 [shape = 's32[1]{0}', space=sflag, size = 0x4, scoped, tag = 'scoped memory for tpu_custom_call.1']
    %10 = vsyncpa [#allocation3], 0
    // Predicated region
    $region2: #{tpu_custom_call.1} parent=1 // pred_check
      _
    $region3: #{tpu_custom_call.1} parent=1 // pred_check_branch
      %12 = sbr.rel (0) target = $region5
    $region4: #{tpu_custom_call.1} parent=1 // pred_region
      _
    $region5: #{tpu_custom_call.1} parent=1 // pred_fallthru
      _
    // Predicated region
    $region6: #{tpu_custom_call.1} parent=1 // pred_check
      _
    $region7: #{tpu_custom_call.1} parent=1 // pred_check_branch
      %14 = sbr.rel (0) target = $region9
    $region8: #{tpu_custom_call.1} parent=1 // pred_region
      _
    $region9: #{tpu_custom_call.1} parent=1 // pred_fallthru
      _
    // Predicated region
    $region10: #{tpu_custom_call.1} parent=1 // pred_check
      _
    $region11: #{tpu_custom_call.1} parent=1 // pred_check_branch
      %16 = sbr.rel (0) target = $region13
    $region12: #{tpu_custom_call.1} parent=1 // pred_region
      _
    $region13: #{tpu_custom_call.1} parent=1 // pred_fallthru
      _
    // Predicated region
    $region14: #{tpu_custom_call.1} parent=1 // pred_check
      _
    $region15: #{tpu_custom_call.1} parent=1 // pred_check_branch
      %18 = sbr.rel (0) target = $region17
    $region16: #{tpu_custom_call.1} parent=1 // pred_region
      _
    $region17: #{tpu_custom_call.1} parent=1 // pred_fallthru
      _
    // Predicated region
    $region18: #{tpu_custom_call.1} parent=1 // pred_check
      _
    $region19: #{tpu_custom_call.1} parent=1 // pred_check_branch
      %20 = sbr.rel (0) target = $region21
    $region20: #{tpu_custom_call.1} parent=1 // pred_region
      _
    $region21: #{tpu_custom_call.1} parent=1 // pred_fallthru
      _
    %v21 = vld [vmem:[%s0] sm:$0xff]
    %v22 = vld [vmem:[%s0 + $0x8] sm:$0xff]
    %v23 = vld [vmem:[%s1] sm:$0xff]
    %v24 = vld [vmem:[%s1 + $0x8] sm:$0xff]
    %v25 = vld [vmem:[%s2] sm:$0xff]
    %v26 = vld [vmem:[%s2 + $0x8] sm:$0xff]
    %vm27 = vcmp.eq.f32.partialorder %v25, 0.0
    %vm28 = vcmp.eq.f32.partialorder %v26, 0.0
    %v29 = vsel %vm27, 1, 0
    %v30 = vsel %vm28, 1, 0
    %31 = vset.pattern.permute.xlu0 0
    %32 = vperm.xlu0 %31, %v29
    %v33 = vpop.permute.xlu0 %32
    %34 = vset.pattern.permute.xlu0 0
    %35 = vperm.xlu0 %34, %v30
    %v36 = vpop.permute.xlu0 %35
    %vm37 = vcmp.eq.s32.totalorder %v33, 1
    %vm38 = vcmp.eq.s32.totalorder %v36, 1
    %v39 = vld [vmem:[%s3] sm:$0xff]
    %v40 = vld [vmem:[%s3 + $0x8] sm:$0xff]
    %v41 = vld [vmem:[%s4] sm:$0x1]
    %v42 = vlaneseq
    %v43 = vshrl.u32 %v42, 7
    %v44 = vsub.s32 0, %v43
    %v45 = vrot.slane %v41, %v44
    %vm46 = vcmask 130048
    %v48 = vsel %vm46, %v23, 0
    %v51 = vsel %vm46, %v24, 0
    %53 = vmatprep.subr.mxu0 0.0
    %54 = vmatpush1.msra.mxu0 0.0
    %55 = vmatprep.subr.mxu0 0.0
    %56 = vmatpush1.msra.mxu0 0.0
    %57 = vmatprep.subr.mxu0 0.0
    %58 = vmatpush1.msra.mxu0 0.0
    %59 = vmatprep.subr.mxu0 0.0
    %60 = vmatpush1.msra.mxu0 0.0
    %61 = vmatprep.subr.mxu0 0.0
    %62 = vmatpush1.msra.mxu0 0.0
    %63 = vmatprep.subr.mxu0 0.0
    %64 = vmatpush1.msra.mxu0 0.0
    %65 = vmatprep.subr.mxu0 0.0
    %66 = vmatpush1.msra.mxu0 0.0
    %67 = vmatprep.subr.mxu0 0.0
    %68 = vmatpush1.msra.mxu0 0.0
    %69 = vmatprep.subr.mxu0 0.0
    %70 = vmatpush1.msra.mxu0 0.0
    %71 = vmatprep.subr.mxu0 0.0
    %72 = vmatpush1.msra.mxu0 0.0
    %73 = vmatprep.subr.mxu0 0.0
    %74 = vmatpush1.msra.mxu0 0.0
    %75 = vmatprep.subr.mxu0 0.0
    %76 = vmatpush1.msra.mxu0 0.0
    %77 = vmatprep.subr.mxu0 0.0
    %78 = vmatpush1.msra.mxu0 0.0
    %79 = vmatprep.subr.mxu0 0.0
    %80 = vmatpush1.msra.mxu0 0.0
    %81 = vmatprep.subr.mxu0 0.0
    %82 = vmatpush1.msra.mxu0 %v40
    %83 = vmatprep.subr.mxu0 0.0
    %84 = vmatpush1.msra.mxu0 %v39
    %85 = vmatprep.subr.mxu0 0.0
    %86 = vmatpush2.msra.mxu0 0.0
    %87 = vmatprep.subr.mxu0 0.0
    %88 = vmatpush2.msra.mxu0 0.0
    %89 = vmatprep.subr.mxu0 0.0
    %90 = vmatpush2.msra.mxu0 0.0
    %91 = vmatprep.subr.mxu0 0.0
    %92 = vmatpush2.msra.mxu0 0.0
    %93 = vmatprep.subr.mxu0 0.0
    %94 = vmatpush2.msra.mxu0 0.0
    %95 = vmatprep.subr.mxu0 0.0
    %96 = vmatpush2.msra.mxu0 0.0
    %97 = vmatprep.subr.mxu0 0.0
    %98 = vmatpush2.msra.mxu0 0.0
    %99 = vmatprep.subr.mxu0 0.0
    %100 = vmatpush2.msra.mxu0 0.0
    %101 = vmatprep.subr.mxu0 0.0
    %102 = vmatpush2.msra.mxu0 0.0
    %103 = vmatprep.subr.mxu0 0.0
    %104 = vmatpush2.msra.mxu0 0.0
    %105 = vmatprep.subr.mxu0 0.0
    %106 = vmatpush2.msra.mxu0 0.0
    %107 = vmatprep.subr.mxu0 0.0
    %108 = vmatpush2.msra.mxu0 0.0
    %109 = vmatprep.subr.mxu0 0.0
    %110 = vmatpush2.msra.mxu0 0.0
    %111 = vmatprep.subr.mxu0 0.0
    %112 = vmatpush2.msra.mxu0 0.0
    %113 = vmatprep.subr.mxu0 0.0
    %114 = vmatpush2.msra.mxu0 0.0
    %115 = vmatprep.subr.mxu0 0.0
    %116 = vmatpush2.msra.mxu0 0.0
    %117 = vmatprep.mubr.f32.mxu0 0.0
    %118 = vmatmul.mubr.f32.gmra.mxu0 %v48
    %v119 = vpop.f32.mrf.mxu0
    %v120 = vadd.f32 %v45, %v119
    %v121 = vpop.f32.mrf.mxu0
    %122 = vmatprep.mubr.f32.mxu0 0.0
    %123 = vmatmul.mubr.f32.gmra.mxu0 %v51
    %v124 = vpop.f32.mrf.mxu0
    %v125 = vadd.f32 %v45, %v124
    %v126 = vpop.f32.mrf.mxu0
    %127 = vdwg.mxu0
    %v128 = vld [vmem:[%s3 + $0x10] sm:$0xff]
    %v129 = vld [vmem:[%s3 + $0x18] sm:$0xff]
    %v130 = vld [vmem:[%s3 + $0x20] sm:$0xff]
    %v131 = vld [vmem:[%s3 + $0x28] sm:$0xff]
    %v132 = vld [vmem:[%s4 + $0x1] sm:$0x1]
    %v133 = vlaneseq
    %v134 = vshrl.u32 %v133, 7
    %v135 = vsub.s32 0, %v134
    %v136 = vrot.slane %v132, %v135
    %vm137 = vcmask 261120
    %v139 = vsel %vm137, %v120, 0
    %v142 = vsel %vm137, %v125, 0
    %144 = vmatprep.subr.mxu0 0.0
    %145 = vmatpush1.msra.mxu0 0.0
    %146 = vmatprep.subr.mxu0 0.0
    %147 = vmatpush1.msra.mxu0 0.0
    %148 = vmatprep.subr.mxu0 0.0
    %149 = vmatpush1.msra.mxu0 0.0
    %150 = vmatprep.subr.mxu0 0.0
    %151 = vmatpush1.msra.mxu0 0.0
    %152 = vmatprep.subr.mxu0 0.0
    %153 = vmatpush1.msra.mxu0 0.0
    %154 = vmatprep.subr.mxu0 0.0
    %155 = vmatpush1.msra.mxu0 0.0
    %156 = vmatprep.subr.mxu0 0.0
    %157 = vmatpush1.msra.mxu0 0.0
    %158 = vmatprep.subr.mxu0 0.0
    %159 = vmatpush1.msra.mxu0 0.0
    %160 = vmatprep.subr.mxu0 0.0
    %161 = vmatpush1.msra.mxu0 0.0
    %162 = vmatprep.subr.mxu0 0.0
    %163 = vmatpush1.msra.mxu0 0.0
    %164 = vmatprep.subr.mxu0 0.0
    %165 = vmatpush1.msra.mxu0 0.0
    %166 = vmatprep.subr.mxu0 0.0
    %167 = vmatpush1.msra.mxu0 0.0
    %168 = vmatprep.subr.mxu0 0.0
    %169 = vmatpush1.msra.mxu0 %v131
    %170 = vmatprep.subr.mxu0 0.0
    %171 = vmatpush1.msra.mxu0 %v130
    %172 = vmatprep.subr.mxu0 0.0
    %173 = vmatpush1.msra.mxu0 %v129
    %174 = vmatprep.subr.mxu0 0.0
    %175 = vmatpush1.msra.mxu0 %v128
    %176 = vmatprep.subr.mxu0 0.0
    %177 = vmatpush2.msra.mxu0 0.0
    %178 = vmatprep.subr.mxu0 0.0
    %179 = vmatpush2.msra.mxu0 0.0
    %180 = vmatprep.subr.mxu0 0.0
    %181 = vmatpush2.msra.mxu0 0.0
    %182 = vmatprep.subr.mxu0 0.0
    %183 = vmatpush2.msra.mxu0 0.0
    %184 = vmatprep.subr.mxu0 0.0
    %185 = vmatpush2.msra.mxu0 0.0
    %186 = vmatprep.subr.mxu0 0.0
    %187 = vmatpush2.msra.mxu0 0.0
    %188 = vmatprep.subr.mxu0 0.0
    %189 = vmatpush2.msra.mxu0 0.0
    %190 = vmatprep.subr.mxu0 0.0
    %191 = vmatpush2.msra.mxu0 0.0
    %192 = vmatprep.subr.mxu0 0.0
    %193 = vmatpush2.msra.mxu0 0.0
    %194 = vmatprep.subr.mxu0 0.0
    %195 = vmatpush2.msra.mxu0 0.0
    %196 = vmatprep.subr.mxu0 0.0
    %197 = vmatpush2.msra.mxu0 0.0
    %198 = vmatprep.subr.mxu0 0.0
    %199 = vmatpush2.msra.mxu0 0.0
    %200 = vmatprep.subr.mxu0 0.0
    %201 = vmatpush2.msra.mxu0 0.0
    %202 = vmatprep.subr.mxu0 0.0
    %203 = vmatpush2.msra.mxu0 0.0
    %204 = vmatprep.subr.mxu0 0.0
    %205 = vmatpush2.msra.mxu0 0.0
    %206 = vmatprep.subr.mxu0 0.0
    %207 = vmatpush2.msra.mxu0 0.0
    %208 = vmatprep.mubr.f32.mxu0 0.0
    %209 = vmatmul.mubr.f32.gmra.mxu0 %v139
    %v210 = vpop.f32.mrf.mxu0
    %v211 = vadd.f32 %v136, %v210
    %v212 = vpop.f32.mrf.mxu0
    %213 = vmatprep.mubr.f32.mxu0 0.0
    %214 = vmatmul.mubr.f32.gmra.mxu0 %v142
    %v215 = vpop.f32.mrf.mxu0
    %v216 = vadd.f32 %v136, %v215
    %v217 = vpop.f32.mrf.mxu0
    %218 = vdwg.mxu0
    %v219 = vld [vmem:[%s3 + $0x30] sm:$0xff]
    %v220 = vld [vmem:[%s3 + $0x38] sm:$0xff]
    %v221 = vld [vmem:[%s3 + $0x40] sm:$0xff]
    %v222 = vld [vmem:[%s3 + $0x48] sm:$0xff]
    %v223 = vld [vmem:[%s4 + $0x2] sm:$0x1]
    %v224 = vlaneseq
    %v225 = vshrl.u32 %v224, 7
    %v226 = vsub.s32 0, %v225
    %v227 = vrot.slane %v223, %v226
    %v229 = vsel %vm137, %v21, 0
    %v232 = vsel %vm137, %v22, 0
    %234 = vmatprep.subr.mxu0 0.0
    %235 = vmatpush1.msra.mxu0 0.0
    %236 = vmatprep.subr.mxu0 0.0
    %237 = vmatpush1.msra.mxu0 0.0
    %238 = vmatprep.subr.mxu0 0.0
    %239 = vmatpush1.msra.mxu0 0.0
    %240 = vmatprep.subr.mxu0 0.0
    %241 = vmatpush1.msra.mxu0 0.0
    %242 = vmatprep.subr.mxu0 0.0
    %243 = vmatpush1.msra.mxu0 0.0
    %244 = vmatprep.subr.mxu0 0.0
    %245 = vmatpush1.msra.mxu0 0.0
    %246 = vmatprep.subr.mxu0 0.0
    %247 = vmatpush1.msra.mxu0 0.0
    %248 = vmatprep.subr.mxu0 0.0
    %249 = vmatpush1.msra.mxu0 0.0
    %250 = vmatprep.subr.mxu0 0.0
    %251 = vmatpush1.msra.mxu0 0.0
    %252 = vmatprep.subr.mxu0 0.0
    %253 = vmatpush1.msra.mxu0 0.0
    %254 = vmatprep.subr.mxu0 0.0
    %255 = vmatpush1.msra.mxu0 0.0
    %256 = vmatprep.subr.mxu0 0.0
    %257 = vmatpush1.msra.mxu0 0.0
    %258 = vmatprep.subr.mxu0 0.0
    %259 = vmatpush1.msra.mxu0 %v222
    %260 = vmatprep.subr.mxu0 0.0
    %261 = vmatpush1.msra.mxu0 %v221
    %262 = vmatprep.subr.mxu0 0.0
    %263 = vmatpush1.msra.mxu0 %v220
    %264 = vmatprep.subr.mxu0 0.0
    %265 = vmatpush1.msra.mxu0 %v219
    %266 = vmatprep.subr.mxu0 0.0
    %267 = vmatpush2.msra.mxu0 0.0
    %268 = vmatprep.subr.mxu0 0.0
    %269 = vmatpush2.msra.mxu0 0.0
    %270 = vmatprep.subr.mxu0 0.0
    %271 = vmatpush2.msra.mxu0 0.0
    %272 = vmatprep.subr.mxu0 0.0
    %273 = vmatpush2.msra.mxu0 0.0
    %274 = vmatprep.subr.mxu0 0.0
    %275 = vmatpush2.msra.mxu0 0.0
    %276 = vmatprep.subr.mxu0 0.0
    %277 = vmatpush2.msra.mxu0 0.0
    %278 = vmatprep.subr.mxu0 0.0
    %279 = vmatpush2.msra.mxu0 0.0
    %280 = vmatprep.subr.mxu0 0.0
    %281 = vmatpush2.msra.mxu0 0.0
    %282 = vmatprep.subr.mxu0 0.0
    %283 = vmatpush2.msra.mxu0 0.0
    %284 = vmatprep.subr.mxu0 0.0
    %285 = vmatpush2.msra.mxu0 0.0
    %286 = vmatprep.subr.mxu0 0.0
    %287 = vmatpush2.msra.mxu0 0.0
    %288 = vmatprep.subr.mxu0 0.0
    %289 = vmatpush2.msra.mxu0 0.0
    %290 = vmatprep.subr.mxu0 0.0
    %291 = vmatpush2.msra.mxu0 0.0
    %292 = vmatprep.subr.mxu0 0.0
    %293 = vmatpush2.msra.mxu0 0.0
    %294 = vmatprep.subr.mxu0 0.0
    %295 = vmatpush2.msra.mxu0 0.0
    %296 = vmatprep.subr.mxu0 0.0
    %297 = vmatpush2.msra.mxu0 0.0
    %298 = vmatprep.mubr.f32.mxu0 0.0
    %299 = vmatmul.mubr.f32.gmra.mxu0 %v229
    %v300 = vpop.f32.mrf.mxu0
    %v301 = vadd.f32 %v227, %v300
    %v302 = vpop.f32.mrf.mxu0
    %303 = vmatprep.mubr.f32.mxu0 0.0
    %304 = vmatmul.mubr.f32.gmra.mxu0 %v232
    %v305 = vpop.f32.mrf.mxu0
    %v306 = vadd.f32 %v227, %v305
    %v307 = vpop.f32.mrf.mxu0
    %308 = vdwg.mxu0
    %v309 = vld [vmem:[%s3 + $0x50] sm:$0xff]
    %v310 = vld [vmem:[%s3 + $0x58] sm:$0xff]
    %v311 = vld [vmem:[%s3 + $0x60] sm:$0xff]
    %v312 = vld [vmem:[%s3 + $0x68] sm:$0xff]
    %v313 = vld [vmem:[%s4 + $0x3] sm:$0x1]
    %v314 = vlaneseq
    %v315 = vshrl.u32 %v314, 7
    %v316 = vsub.s32 0, %v315
    %v317 = vrot.slane %v313, %v316
    %318 = vmatprep.subr.mxu0 0.0
    %319 = vmatpush1.msra.mxu0 0.0
    %320 = vmatprep.subr.mxu0 0.0
    %321 = vmatpush1.msra.mxu0 0.0
    %322 = vmatprep.subr.mxu0 0.0
    %323 = vmatpush1.msra.mxu0 0.0
    %324 = vmatprep.subr.mxu0 0.0
    %325 = vmatpush1.msra.mxu0 0.0
    %326 = vmatprep.subr.mxu0 0.0
    %327 = vmatpush1.msra.mxu0 0.0
    %328 = vmatprep.subr.mxu0 0.0
    %329 = vmatpush1.msra.mxu0 0.0
    %330 = vmatprep.subr.mxu0 0.0
    %331 = vmatpush1.msra.mxu0 0.0
    %332 = vmatprep.subr.mxu0 0.0
    %333 = vmatpush1.msra.mxu0 0.0
    %334 = vmatprep.subr.mxu0 0.0
    %335 = vmatpush1.msra.mxu0 0.0
    %336 = vmatprep.subr.mxu0 0.0
    %337 = vmatpush1.msra.mxu0 0.0
    %338 = vmatprep.subr.mxu0 0.0
    %339 = vmatpush1.msra.mxu0 0.0
    %340 = vmatprep.subr.mxu0 0.0
    %341 = vmatpush1.msra.mxu0 0.0
    %342 = vmatprep.subr.mxu0 0.0
    %343 = vmatpush1.msra.mxu0 %v312
    %344 = vmatprep.subr.mxu0 0.0
    %345 = vmatpush1.msra.mxu0 %v311
    %346 = vmatprep.subr.mxu0 0.0
    %347 = vmatpush1.msra.mxu0 %v310
    %348 = vmatprep.subr.mxu0 0.0
    %349 = vmatpush1.msra.mxu0 %v309
    %350 = vmatprep.subr.mxu0 0.0
    %351 = vmatpush2.msra.mxu0 0.0
    %352 = vmatprep.subr.mxu0 0.0
    %353 = vmatpush2.msra.mxu0 0.0
    %354 = vmatprep.subr.mxu0 0.0
    %355 = vmatpush2.msra.mxu0 0.0
    %356 = vmatprep.subr.mxu0 0.0
    %357 = vmatpush2.msra.mxu0 0.0
    %358 = vmatprep.subr.mxu0 0.0
    %359 = vmatpush2.msra.mxu0 0.0
    %360 = vmatprep.subr.mxu0 0.0
    %361 = vmatpush2.msra.mxu0 0.0
    %362 = vmatprep.subr.mxu0 0.0
    %363 = vmatpush2.msra.mxu0 0.0
    %364 = vmatprep.subr.mxu0 0.0
    %365 = vmatpush2.msra.mxu0 0.0
    %366 = vmatprep.subr.mxu0 0.0
    %367 = vmatpush2.msra.mxu0 0.0
    %368 = vmatprep.subr.mxu0 0.0
    %369 = vmatpush2.msra.mxu0 0.0
    %370 = vmatprep.subr.mxu0 0.0
    %371 = vmatpush2.msra.mxu0 0.0
    %372 = vmatprep.subr.mxu0 0.0
    %373 = vmatpush2.msra.mxu0 0.0
    %374 = vmatprep.subr.mxu0 0.0
    %375 = vmatpush2.msra.mxu0 0.0
    %376 = vmatprep.subr.mxu0 0.0
    %377 = vmatpush2.msra.mxu0 0.0
    %378 = vmatprep.subr.mxu0 0.0
    %379 = vmatpush2.msra.mxu0 0.0
    %380 = vmatprep.subr.mxu0 0.0
    %381 = vmatpush2.msra.mxu0 0.0
    %382 = vmatprep.mubr.f32.mxu0 0.0
    %383 = vmatmul.mubr.f32.gmra.mxu0 %v229
    %v384 = vpop.f32.mrf.mxu0
    %v385 = vadd.f32 %v317, %v384
    %v386 = vpop.f32.mrf.mxu0
    %387 = vmatprep.mubr.f32.mxu0 0.0
    %388 = vmatmul.mubr.f32.gmra.mxu0 %v232
    %v389 = vpop.f32.mrf.mxu0
    %v390 = vadd.f32 %v317, %v389
    %v391 = vpop.f32.mrf.mxu0
    %392 = vdwg.mxu0
    %v394 = vsel %vm137, %v211, 0
    %v397 = vsel %vm137, %v301, 0
    %399 = vmatprep.subr.mxu0 0.0
    %400 = vmatpush1.xpose.msra.mxu0 0.0
    %401 = vmatprep.subr.mxu0 0.0
    %402 = vmatpush1.xpose.msra.mxu0 0.0
    %403 = vmatprep.subr.mxu0 0.0
    %404 = vmatpush1.xpose.msra.mxu0 0.0
    %405 = vmatprep.subr.mxu0 0.0
    %406 = vmatpush1.xpose.msra.mxu0 0.0
    %407 = vmatprep.subr.mxu0 0.0
    %408 = vmatpush1.xpose.msra.mxu0 0.0
    %409 = vmatprep.subr.mxu0 0.0
    %410 = vmatpush1.xpose.msra.mxu0 0.0
    %411 = vmatprep.subr.mxu0 0.0
    %412 = vmatpush1.xpose.msra.mxu0 0.0
    %413 = vmatprep.subr.mxu0 0.0
    %414 = vmatpush1.xpose.msra.mxu0 0.0
    %415 = vmatprep.subr.mxu0 0.0
    %416 = vmatpush1.xpose.msra.mxu0 0.0
    %417 = vmatprep.subr.mxu0 0.0
    %418 = vmatpush1.xpose.msra.mxu0 0.0
    %419 = vmatprep.subr.mxu0 0.0
    %420 = vmatpush1.xpose.msra.mxu0 0.0
    %421 = vmatprep.subr.mxu0 0.0
    %422 = vmatpush1.xpose.msra.mxu0 0.0
    %423 = vmatprep.subr.mxu0 0.0
    %424 = vmatpush1.xpose.msra.mxu0 0.0
    %425 = vmatprep.subr.mxu0 0.0
    %426 = vmatpush1.xpose.msra.mxu0 0.0
    %427 = vmatprep.subr.mxu0 0.0
    %428 = vmatpush1.xpose.msra.mxu0 0.0
    %429 = vmatprep.subr.mxu0 0.0
    %430 = vmatpush1.xpose.msra.mxu0 %v397
    %431 = vmatprep.subr.mxu0 0.0
    %432 = vmatpush2.xpose.msra.mxu0 0.0
    %433 = vmatprep.subr.mxu0 0.0
    %434 = vmatpush2.xpose.msra.mxu0 0.0
    %435 = vmatprep.subr.mxu0 0.0
    %436 = vmatpush2.xpose.msra.mxu0 0.0
    %437 = vmatprep.subr.mxu0 0.0
    %438 = vmatpush2.xpose.msra.mxu0 0.0
    %439 = vmatprep.subr.mxu0 0.0
    %440 = vmatpush2.xpose.msra.mxu0 0.0
    %441 = vmatprep.subr.mxu0 0.0
    %442 = vmatpush2.xpose.msra.mxu0 0.0
    %443 = vmatprep.subr.mxu0 0.0
    %444 = vmatpush2.xpose.msra.mxu0 0.0
    %445 = vmatprep.subr.mxu0 0.0
    %446 = vmatpush2.xpose.msra.mxu0 0.0
    %447 = vmatprep.subr.mxu0 0.0
    %448 = vmatpush2.xpose.msra.mxu0 0.0
    %449 = vmatprep.subr.mxu0 0.0
    %450 = vmatpush2.xpose.msra.mxu0 0.0
    %451 = vmatprep.subr.mxu0 0.0
    %452 = vmatpush2.xpose.msra.mxu0 0.0
    %453 = vmatprep.subr.mxu0 0.0
    %454 = vmatpush2.xpose.msra.mxu0 0.0
    %455 = vmatprep.subr.mxu0 0.0
    %456 = vmatpush2.xpose.msra.mxu0 0.0
    %457 = vmatprep.subr.mxu0 0.0
    %458 = vmatpush2.xpose.msra.mxu0 0.0
    %459 = vmatprep.subr.mxu0 0.0
    %460 = vmatpush2.xpose.msra.mxu0 0.0
    %461 = vmatprep.subr.mxu0 0.0
    %462 = vmatpush2.xpose.msra.mxu0 0.0
    %463 = vmatprep.mubr.f32.mxu0 0.0
    %464 = vmatmul.mubr.f32.gmra.mxu0 %v394
    %v465 = vpop.f32.mrf.mxu0
    %v466 = vadd.f32 0.0, %v465
    %v467 = vpop.f32.mrf.mxu0
    %468 = vdwg.mxu0
    %v470 = vsel %vm137, %v216, 0
    %v473 = vsel %vm137, %v306, 0
    %475 = vmatprep.subr.mxu0 0.0
    %476 = vmatpush1.xpose.msra.mxu0 0.0
    %477 = vmatprep.subr.mxu0 0.0
    %478 = vmatpush1.xpose.msra.mxu0 0.0
    %479 = vmatprep.subr.mxu0 0.0
    %480 = vmatpush1.xpose.msra.mxu0 0.0
    %481 = vmatprep.subr.mxu0 0.0
    %482 = vmatpush1.xpose.msra.mxu0 0.0
    %483 = vmatprep.subr.mxu0 0.0
    %484 = vmatpush1.xpose.msra.mxu0 0.0
    %485 = vmatprep.subr.mxu0 0.0
    %486 = vmatpush1.xpose.msra.mxu0 0.0
    %487 = vmatprep.subr.mxu0 0.0
    %488 = vmatpush1.xpose.msra.mxu0 0.0
    %489 = vmatprep.subr.mxu0 0.0
    %490 = vmatpush1.xpose.msra.mxu0 0.0
    %491 = vmatprep.subr.mxu0 0.0
    %492 = vmatpush1.xpose.msra.mxu0 0.0
    %493 = vmatprep.subr.mxu0 0.0
    %494 = vmatpush1.xpose.msra.mxu0 0.0
    %495 = vmatprep.subr.mxu0 0.0
    %496 = vmatpush1.xpose.msra.mxu0 0.0
    %497 = vmatprep.subr.mxu0 0.0
    %498 = vmatpush1.xpose.msra.mxu0 0.0
    %499 = vmatprep.subr.mxu0 0.0
    %500 = vmatpush1.xpose.msra.mxu0 0.0
    %501 = vmatprep.subr.mxu0 0.0
    %502 = vmatpush1.xpose.msra.mxu0 0.0
    %503 = vmatprep.subr.mxu0 0.0
    %504 = vmatpush1.xpose.msra.mxu0 0.0
    %505 = vmatprep.subr.mxu0 0.0
    %506 = vmatpush1.xpose.msra.mxu0 %v473
    %507 = vmatprep.subr.mxu0 0.0
    %508 = vmatpush2.xpose.msra.mxu0 0.0
    %509 = vmatprep.subr.mxu0 0.0
    %510 = vmatpush2.xpose.msra.mxu0 0.0
    %511 = vmatprep.subr.mxu0 0.0
    %512 = vmatpush2.xpose.msra.mxu0 0.0
    %513 = vmatprep.subr.mxu0 0.0
    %514 = vmatpush2.xpose.msra.mxu0 0.0
    %515 = vmatprep.subr.mxu0 0.0
    %516 = vmatpush2.xpose.msra.mxu0 0.0
    %517 = vmatprep.subr.mxu0 0.0
    %518 = vmatpush2.xpose.msra.mxu0 0.0
    %519 = vmatprep.subr.mxu0 0.0
    %520 = vmatpush2.xpose.msra.mxu0 0.0
    %521 = vmatprep.subr.mxu0 0.0
    %522 = vmatpush2.xpose.msra.mxu0 0.0
    %523 = vmatprep.subr.mxu0 0.0
    %524 = vmatpush2.xpose.msra.mxu0 0.0
    %525 = vmatprep.subr.mxu0 0.0
    %526 = vmatpush2.xpose.msra.mxu0 0.0
    %527 = vmatprep.subr.mxu0 0.0
    %528 = vmatpush2.xpose.msra.mxu0 0.0
    %529 = vmatprep.subr.mxu0 0.0
    %530 = vmatpush2.xpose.msra.mxu0 0.0
    %531 = vmatprep.subr.mxu0 0.0
    %532 = vmatpush2.xpose.msra.mxu0 0.0
    %533 = vmatprep.subr.mxu0 0.0
    %534 = vmatpush2.xpose.msra.mxu0 0.0
    %535 = vmatprep.subr.mxu0 0.0
    %536 = vmatpush2.xpose.msra.mxu0 0.0
    %537 = vmatprep.subr.mxu0 0.0
    %538 = vmatpush2.xpose.msra.mxu0 0.0
    %539 = vmatprep.mubr.f32.mxu0 0.0
    %540 = vmatmul.mubr.f32.gmra.mxu0 %v470
    %v541 = vpop.f32.mrf.mxu0
    %v542 = vadd.f32 0.0, %v541
    %v543 = vpop.f32.mrf.mxu0
    %544 = vdwg.mxu0
    %v545 = vmul.f32 %v466, 0.17677669
    %v546 = vmul.f32 %v542, 0.17677669
    %v547 = vsel %vm37, -1e+10, %v545
    %v548 = vsel %vm38, -1e+10, %v546
    %vm549 = vcmask 64512
    %v550 = vsel %vm549, %v547, -inf
    %551 = vmax.xlane.f32.xlu0 %v550
    %v552 = vpop.xlane.xlu0 %551
    %v553 = vsel %vm549, %v548, -inf
    %554 = vmax.xlane.f32.xlu0 %v553
    %v555 = vpop.xlane.xlu0 %554
    %v556 = vsub.f32 %v547, %v552
    %v557 = vsub.f32 %v548, %v555
    %v558 = vmul.f32 %v556, 1.442695
    %v559 = vpow.pop %v558
    %v560 = vmul.f32 %v557, 1.442695
    %v561 = vpow.pop %v560
    %v562 = vsel %vm549, %v559, 0.0
    %563 = vadd.xlane.f32.xlu0 %v562
    %v564 = vpop.xlane.xlu0 %563
    %v565 = vsel %vm549, %v561, 0.0
    %566 = vadd.xlane.f32.xlu0 %v565
    %v567 = vpop.xlane.xlu0 %566
    %v568 = vrcp.pop %v564
    %v569 = vrcp.pop %v567
    %v570 = vmul.f32 %v559, %v568
    %v571 = vmul.f32 %v561, %v569
    %v573 = vsel %vm549, %v570, 0
    %575 = vmatprep.subr.mxu0 0.0
    %576 = vmatpush1.msra.mxu0 0.0
    %577 = vmatprep.subr.mxu0 0.0
    %578 = vmatpush1.msra.mxu0 0.0
    %579 = vmatprep.subr.mxu0 0.0
    %580 = vmatpush1.msra.mxu0 0.0
    %581 = vmatprep.subr.mxu0 0.0
    %582 = vmatpush1.msra.mxu0 0.0
    %583 = vmatprep.subr.mxu0 0.0
    %584 = vmatpush1.msra.mxu0 0.0
    %585 = vmatprep.subr.mxu0 0.0
    %586 = vmatpush1.msra.mxu0 0.0
    %587 = vmatprep.subr.mxu0 0.0
    %588 = vmatpush1.msra.mxu0 0.0
    %589 = vmatprep.subr.mxu0 0.0
    %590 = vmatpush1.msra.mxu0 0.0
    %591 = vmatprep.subr.mxu0 0.0
    %592 = vmatpush1.msra.mxu0 0.0
    %593 = vmatprep.subr.mxu0 0.0
    %594 = vmatpush1.msra.mxu0 0.0
    %595 = vmatprep.subr.mxu0 0.0
    %596 = vmatpush1.msra.mxu0 0.0
    %597 = vmatprep.subr.mxu0 0.0
    %598 = vmatpush1.msra.mxu0 0.0
    %599 = vmatprep.subr.mxu0 0.0
    %600 = vmatpush1.msra.mxu0 0.0
    %601 = vmatprep.subr.mxu0 0.0
    %602 = vmatpush1.msra.mxu0 0.0
    %603 = vmatprep.subr.mxu0 0.0
    %604 = vmatpush1.msra.mxu0 0.0
    %605 = vmatprep.subr.mxu0 0.0
    %606 = vmatpush1.msra.mxu0 %v385
    %607 = vmatprep.subr.mxu0 0.0
    %608 = vmatpush2.msra.mxu0 0.0
    %609 = vmatprep.subr.mxu0 0.0
    %610 = vmatpush2.msra.mxu0 0.0
    %611 = vmatprep.subr.mxu0 0.0
    %612 = vmatpush2.msra.mxu0 0.0
    %613 = vmatprep.subr.mxu0 0.0
    %614 = vmatpush2.msra.mxu0 0.0
    %615 = vmatprep.subr.mxu0 0.0
    %616 = vmatpush2.msra.mxu0 0.0
    %617 = vmatprep.subr.mxu0 0.0
    %618 = vmatpush2.msra.mxu0 0.0
    %619 = vmatprep.subr.mxu0 0.0
    %620 = vmatpush2.msra.mxu0 0.0
    %621 = vmatprep.subr.mxu0 0.0
    %622 = vmatpush2.msra.mxu0 0.0
    %623 = vmatprep.subr.mxu0 0.0
    %624 = vmatpush2.msra.mxu0 0.0
    %625 = vmatprep.subr.mxu0 0.0
    %626 = vmatpush2.msra.mxu0 0.0
    %627 = vmatprep.subr.mxu0 0.0
    %628 = vmatpush2.msra.mxu0 0.0
    %629 = vmatprep.subr.mxu0 0.0
    %630 = vmatpush2.msra.mxu0 0.0
    %631 = vmatprep.subr.mxu0 0.0
    %632 = vmatpush2.msra.mxu0 0.0
    %633 = vmatprep.subr.mxu0 0.0
    %634 = vmatpush2.msra.mxu0 0.0
    %635 = vmatprep.subr.mxu0 0.0
    %636 = vmatpush2.msra.mxu0 0.0
    %637 = vmatprep.subr.mxu0 0.0
    %638 = vmatpush2.msra.mxu0 0.0
    %639 = vmatprep.mubr.f32.mxu0 0.0
    %640 = vmatmul.mubr.f32.gmra.mxu0 %v573
    %v641 = vpop.f32.mrf.mxu0
    %v642 = vadd.f32 0.0, %v641
    %v643 = vpop.f32.mrf.mxu0
    %644 = vdwg.mxu0
    %v646 = vsel %vm549, %v571, 0
    %648 = vmatprep.subr.mxu0 0.0
    %649 = vmatpush1.msra.mxu0 0.0
    %650 = vmatprep.subr.mxu0 0.0
    %651 = vmatpush1.msra.mxu0 0.0
    %652 = vmatprep.subr.mxu0 0.0
    %653 = vmatpush1.msra.mxu0 0.0
    %654 = vmatprep.subr.mxu0 0.0
    %655 = vmatpush1.msra.mxu0 0.0
    %656 = vmatprep.subr.mxu0 0.0
    %657 = vmatpush1.msra.mxu0 0.0
    %658 = vmatprep.subr.mxu0 0.0
    %659 = vmatpush1.msra.mxu0 0.0
    %660 = vmatprep.subr.mxu0 0.0
    %661 = vmatpush1.msra.mxu0 0.0
    %662 = vmatprep.subr.mxu0 0.0
    %663 = vmatpush1.msra.mxu0 0.0
    %664 = vmatprep.subr.mxu0 0.0
    %665 = vmatpush1.msra.mxu0 0.0
    %666 = vmatprep.subr.mxu0 0.0
    %667 = vmatpush1.msra.mxu0 0.0
    %668 = vmatprep.subr.mxu0 0.0
    %669 = vmatpush1.msra.mxu0 0.0
    %670 = vmatprep.subr.mxu0 0.0
    %671 = vmatpush1.msra.mxu0 0.0
    %672 = vmatprep.subr.mxu0 0.0
    %673 = vmatpush1.msra.mxu0 0.0
    %674 = vmatprep.subr.mxu0 0.0
    %675 = vmatpush1.msra.mxu0 0.0
    %676 = vmatprep.subr.mxu0 0.0
    %677 = vmatpush1.msra.mxu0 0.0
    %678 = vmatprep.subr.mxu0 0.0
    %679 = vmatpush1.msra.mxu0 %v390
    %680 = vmatprep.subr.mxu0 0.0
    %681 = vmatpush2.msra.mxu0 0.0
    %682 = vmatprep.subr.mxu0 0.0
    %683 = vmatpush2.msra.mxu0 0.0
    %684 = vmatprep.subr.mxu0 0.0
    %685 = vmatpush2.msra.mxu0 0.0
    %686 = vmatprep.subr.mxu0 0.0
    %687 = vmatpush2.msra.mxu0 0.0
    %688 = vmatprep.subr.mxu0 0.0
    %689 = vmatpush2.msra.mxu0 0.0
    %690 = vmatprep.subr.mxu0 0.0
    %691 = vmatpush2.msra.mxu0 0.0
    %692 = vmatprep.subr.mxu0 0.0
    %693 = vmatpush2.msra.mxu0 0.0
    %694 = vmatprep.subr.mxu0 0.0
    %695 = vmatpush2.msra.mxu0 0.0
    %696 = vmatprep.subr.mxu0 0.0
    %697 = vmatpush2.msra.mxu0 0.0
    %698 = vmatprep.subr.mxu0 0.0
    %699 = vmatpush2.msra.mxu0 0.0
    %700 = vmatprep.subr.mxu0 0.0
    %701 = vmatpush2.msra.mxu0 0.0
    %702 = vmatprep.subr.mxu0 0.0
    %703 = vmatpush2.msra.mxu0 0.0
    %704 = vmatprep.subr.mxu0 0.0
    %705 = vmatpush2.msra.mxu0 0.0
    %706 = vmatprep.subr.mxu0 0.0
    %707 = vmatpush2.msra.mxu0 0.0
    %708 = vmatprep.subr.mxu0 0.0
    %709 = vmatpush2.msra.mxu0 0.0
    %710 = vmatprep.subr.mxu0 0.0
    %711 = vmatpush2.msra.mxu0 0.0
    %712 = vmatprep.mubr.f32.mxu0 0.0
    %713 = vmatmul.mubr.f32.gmra.mxu0 %v646
    %v714 = vpop.f32.mrf.mxu0
    %v715 = vadd.f32 0.0, %v714
    %v716 = vpop.f32.mrf.mxu0
    %717 = vdwg.mxu0
    %v718 = vld [vmem:[%s3 + $0x70] sm:$0xff]
    %v719 = vld [vmem:[%s3 + $0x78] sm:$0xff]
    %v720 = vld [vmem:[%s3 + $0x80] sm:$0xff]
    %v721 = vld [vmem:[%s3 + $0x88] sm:$0xff]
    %v722 = vld [vmem:[%s4 + $0x4] sm:$0x1]
    %v723 = vlaneseq
    %v724 = vshrl.u32 %v723, 7
    %v725 = vsub.s32 0, %v724
    %v726 = vrot.slane %v722, %v725
    %v728 = vsel %vm137, %v642, 0
    %v731 = vsel %vm137, %v715, 0
    %733 = vmatprep.subr.mxu0 0.0
    %734 = vmatpush1.msra.mxu0 0.0
    %735 = vmatprep.subr.mxu0 0.0
    %736 = vmatpush1.msra.mxu0 0.0
    %737 = vmatprep.subr.mxu0 0.0
    %738 = vmatpush1.msra.mxu0 0.0
    %739 = vmatprep.subr.mxu0 0.0
    %740 = vmatpush1.msra.mxu0 0.0
    %741 = vmatprep.subr.mxu0 0.0
    %742 = vmatpush1.msra.mxu0 0.0
    %743 = vmatprep.subr.mxu0 0.0
    %744 = vmatpush1.msra.mxu0 0.0
    %745 = vmatprep.subr.mxu0 0.0
    %746 = vmatpush1.msra.mxu0 0.0
    %747 = vmatprep.subr.mxu0 0.0
    %748 = vmatpush1.msra.mxu0 0.0
    %749 = vmatprep.subr.mxu0 0.0
    %750 = vmatpush1.msra.mxu0 0.0
    %751 = vmatprep.subr.mxu0 0.0
    %752 = vmatpush1.msra.mxu0 0.0
    %753 = vmatprep.subr.mxu0 0.0
    %754 = vmatpush1.msra.mxu0 0.0
    %755 = vmatprep.subr.mxu0 0.0
    %756 = vmatpush1.msra.mxu0 0.0
    %757 = vmatprep.subr.mxu0 0.0
    %758 = vmatpush1.msra.mxu0 %v721
    %759 = vmatprep.subr.mxu0 0.0
    %760 = vmatpush1.msra.mxu0 %v720
    %761 = vmatprep.subr.mxu0 0.0
    %762 = vmatpush1.msra.mxu0 %v719
    %763 = vmatprep.subr.mxu0 0.0
    %764 = vmatpush1.msra.mxu0 %v718
    %765 = vmatprep.subr.mxu0 0.0
    %766 = vmatpush2.msra.mxu0 0.0
    %767 = vmatprep.subr.mxu0 0.0
    %768 = vmatpush2.msra.mxu0 0.0
    %769 = vmatprep.subr.mxu0 0.0
    %770 = vmatpush2.msra.mxu0 0.0
    %771 = vmatprep.subr.mxu0 0.0
    %772 = vmatpush2.msra.mxu0 0.0
    %773 = vmatprep.subr.mxu0 0.0
    %774 = vmatpush2.msra.mxu0 0.0
    %775 = vmatprep.subr.mxu0 0.0
    %776 = vmatpush2.msra.mxu0 0.0
    %777 = vmatprep.subr.mxu0 0.0
    %778 = vmatpush2.msra.mxu0 0.0
    %779 = vmatprep.subr.mxu0 0.0
    %780 = vmatpush2.msra.mxu0 0.0
    %781 = vmatprep.subr.mxu0 0.0
    %782 = vmatpush2.msra.mxu0 0.0
    %783 = vmatprep.subr.mxu0 0.0
    %784 = vmatpush2.msra.mxu0 0.0
    %785 = vmatprep.subr.mxu0 0.0
    %786 = vmatpush2.msra.mxu0 0.0
    %787 = vmatprep.subr.mxu0 0.0
    %788 = vmatpush2.msra.mxu0 0.0
    %789 = vmatprep.subr.mxu0 0.0
    %790 = vmatpush2.msra.mxu0 0.0
    %791 = vmatprep.subr.mxu0 0.0
    %792 = vmatpush2.msra.mxu0 0.0
    %793 = vmatprep.subr.mxu0 0.0
    %794 = vmatpush2.msra.mxu0 0.0
    %795 = vmatprep.subr.mxu0 0.0
    %796 = vmatpush2.msra.mxu0 0.0
    %797 = vmatprep.mubr.f32.mxu0 0.0
    %798 = vmatmul.mubr.f32.gmra.mxu0 %v728
    %v799 = vpop.f32.mrf.mxu0
    %v800 = vadd.f32 %v726, %v799
    %v801 = vpop.f32.mrf.mxu0
    %802 = vmatprep.mubr.f32.mxu0 0.0
    %803 = vmatmul.mubr.f32.gmra.mxu0 %v731
    %v804 = vpop.f32.mrf.mxu0
    %v805 = vadd.f32 %v726, %v804
    %v806 = vpop.f32.mrf.mxu0
    %807 = vdwg.mxu0
    %v808 = vld [vmem:[%s3 + $0x90] sm:$0xff]
    %v809 = vld [vmem:[%s3 + $0x98] sm:$0xff]
    %v810 = vld [vmem:[%s3 + $0xa0] sm:$0xff]
    %v811 = vld [vmem:[%s3 + $0xa8] sm:$0xff]
    %v812 = vld [vmem:[%s4 + $0x5] sm:$0x1]
    %v813 = vlaneseq
    %v814 = vshrl.u32 %v813, 7
    %v815 = vsub.s32 0, %v814
    %v816 = vrot.slane %v812, %v815
    %v818 = vsel %vm137, %v800, 0
    %v821 = vsel %vm137, %v805, 0
    %823 = vmatprep.subr.mxu0 0.0
    %824 = vmatpush1.msra.mxu0 0.0
    %825 = vmatprep.subr.mxu0 0.0
    %826 = vmatpush1.msra.mxu0 0.0
    %827 = vmatprep.subr.mxu0 0.0
    %828 = vmatpush1.msra.mxu0 0.0
    %829 = vmatprep.subr.mxu0 0.0
    %830 = vmatpush1.msra.mxu0 0.0
    %831 = vmatprep.subr.mxu0 0.0
    %832 = vmatpush1.msra.mxu0 0.0
    %833 = vmatprep.subr.mxu0 0.0
    %834 = vmatpush1.msra.mxu0 0.0
    %835 = vmatprep.subr.mxu0 0.0
    %836 = vmatpush1.msra.mxu0 0.0
    %837 = vmatprep.subr.mxu0 0.0
    %838 = vmatpush1.msra.mxu0 0.0
    %839 = vmatprep.subr.mxu0 0.0
    %840 = vmatpush1.msra.mxu0 0.0
    %841 = vmatprep.subr.mxu0 0.0
    %842 = vmatpush1.msra.mxu0 0.0
    %843 = vmatprep.subr.mxu0 0.0
    %844 = vmatpush1.msra.mxu0 0.0
    %845 = vmatprep.subr.mxu0 0.0
    %846 = vmatpush1.msra.mxu0 0.0
    %847 = vmatprep.subr.mxu0 0.0
    %848 = vmatpush1.msra.mxu0 %v811
    %849 = vmatprep.subr.mxu0 0.0
    %850 = vmatpush1.msra.mxu0 %v810
    %851 = vmatprep.subr.mxu0 0.0
    %852 = vmatpush1.msra.mxu0 %v809
    %853 = vmatprep.subr.mxu0 0.0
    %854 = vmatpush1.msra.mxu0 %v808
    %855 = vmatprep.subr.mxu0 0.0
    %856 = vmatpush2.msra.mxu0 0.0
    %857 = vmatprep.subr.mxu0 0.0
    %858 = vmatpush2.msra.mxu0 0.0
    %859 = vmatprep.subr.mxu0 0.0
    %860 = vmatpush2.msra.mxu0 0.0
    %861 = vmatprep.subr.mxu0 0.0
    %862 = vmatpush2.msra.mxu0 0.0
    %863 = vmatprep.subr.mxu0 0.0
    %864 = vmatpush2.msra.mxu0 0.0
    %865 = vmatprep.subr.mxu0 0.0
    %866 = vmatpush2.msra.mxu0 0.0
    %867 = vmatprep.subr.mxu0 0.0
    %868 = vmatpush2.msra.mxu0 0.0
    %869 = vmatprep.subr.mxu0 0.0
    %870 = vmatpush2.msra.mxu0 0.0
    %871 = vmatprep.subr.mxu0 0.0
    %872 = vmatpush2.msra.mxu0 0.0
    %873 = vmatprep.subr.mxu0 0.0
    %874 = vmatpush2.msra.mxu0 0.0
    %875 = vmatprep.subr.mxu0 0.0
    %876 = vmatpush2.msra.mxu0 0.0
    %877 = vmatprep.subr.mxu0 0.0
    %878 = vmatpush2.msra.mxu0 0.0
    %879 = vmatprep.subr.mxu0 0.0
    %880 = vmatpush2.msra.mxu0 0.0
    %881 = vmatprep.subr.mxu0 0.0
    %882 = vmatpush2.msra.mxu0 0.0
    %883 = vmatprep.subr.mxu0 0.0
    %884 = vmatpush2.msra.mxu0 0.0
    %885 = vmatprep.subr.mxu0 0.0
    %886 = vmatpush2.msra.mxu0 0.0
    %887 = vmatprep.mubr.f32.mxu0 0.0
    %888 = vmatmul.mubr.f32.gmra.mxu0 %v818
    %v889 = vpop.f32.mrf.mxu0
    %v890 = vadd.f32 %v816, %v889
    %v891 = vpop.f32.mrf.mxu0
    %892 = vmatprep.mubr.f32.mxu0 0.0
    %893 = vmatmul.mubr.f32.gmra.mxu0 %v821
    %v894 = vpop.f32.mrf.mxu0
    %v895 = vadd.f32 %v816, %v894
    %v896 = vpop.f32.mrf.mxu0
    %897 = vdwg.mxu0
    %v898 = vld [vmem:[%s3 + $0xb0] sm:$0xff]
    %v899 = vld [vmem:[%s3 + $0xb8] sm:$0xff]
    %v900 = vld [vmem:[%s3 + $0xc0] sm:$0xff]
    %v901 = vld [vmem:[%s3 + $0xc8] sm:$0xff]
    %v902 = vld [vmem:[%s4 + $0x6] sm:$0x1]
    %v903 = vlaneseq
    %v904 = vshrl.u32 %v903, 7
    %v905 = vsub.s32 0, %v904
    %v906 = vrot.slane %v902, %v905
    %907 = vmatprep.subr.mxu0 0.0
    %908 = vmatpush1.msra.mxu0 0.0
    %909 = vmatprep.subr.mxu0 0.0
    %910 = vmatpush1.msra.mxu0 0.0
    %911 = vmatprep.subr.mxu0 0.0
    %912 = vmatpush1.msra.mxu0 0.0
    %913 = vmatprep.subr.mxu0 0.0
    %914 = vmatpush1.msra.mxu0 0.0
    %915 = vmatprep.subr.mxu0 0.0
    %916 = vmatpush1.msra.mxu0 0.0
    %917 = vmatprep.subr.mxu0 0.0
    %918 = vmatpush1.msra.mxu0 0.0
    %919 = vmatprep.subr.mxu0 0.0
    %920 = vmatpush1.msra.mxu0 0.0
    %921 = vmatprep.subr.mxu0 0.0
    %922 = vmatpush1.msra.mxu0 0.0
    %923 = vmatprep.subr.mxu0 0.0
    %924 = vmatpush1.msra.mxu0 0.0
    %925 = vmatprep.subr.mxu0 0.0
    %926 = vmatpush1.msra.mxu0 0.0
    %927 = vmatprep.subr.mxu0 0.0
    %928 = vmatpush1.msra.mxu0 0.0
    %929 = vmatprep.subr.mxu0 0.0
    %930 = vmatpush1.msra.mxu0 0.0
    %931 = vmatprep.subr.mxu0 0.0
    %932 = vmatpush1.msra.mxu0 %v901
    %933 = vmatprep.subr.mxu0 0.0
    %934 = vmatpush1.msra.mxu0 %v900
    %935 = vmatprep.subr.mxu0 0.0
    %936 = vmatpush1.msra.mxu0 %v899
    %937 = vmatprep.subr.mxu0 0.0
    %938 = vmatpush1.msra.mxu0 %v898
    %939 = vmatprep.subr.mxu0 0.0
    %940 = vmatpush2.msra.mxu0 0.0
    %941 = vmatprep.subr.mxu0 0.0
    %942 = vmatpush2.msra.mxu0 0.0
    %943 = vmatprep.subr.mxu0 0.0
    %944 = vmatpush2.msra.mxu0 0.0
    %945 = vmatprep.subr.mxu0 0.0
    %946 = vmatpush2.msra.mxu0 0.0
    %947 = vmatprep.subr.mxu0 0.0
    %948 = vmatpush2.msra.mxu0 0.0
    %949 = vmatprep.subr.mxu0 0.0
    %950 = vmatpush2.msra.mxu0 0.0
    %951 = vmatprep.subr.mxu0 0.0
    %952 = vmatpush2.msra.mxu0 0.0
    %953 = vmatprep.subr.mxu0 0.0
    %954 = vmatpush2.msra.mxu0 0.0
    %955 = vmatprep.subr.mxu0 0.0
    %956 = vmatpush2.msra.mxu0 0.0
    %957 = vmatprep.subr.mxu0 0.0
    %958 = vmatpush2.msra.mxu0 0.0
    %959 = vmatprep.subr.mxu0 0.0
    %960 = vmatpush2.msra.mxu0 0.0
    %961 = vmatprep.subr.mxu0 0.0
    %962 = vmatpush2.msra.mxu0 0.0
    %963 = vmatprep.subr.mxu0 0.0
    %964 = vmatpush2.msra.mxu0 0.0
    %965 = vmatprep.subr.mxu0 0.0
    %966 = vmatpush2.msra.mxu0 0.0
    %967 = vmatprep.subr.mxu0 0.0
    %968 = vmatpush2.msra.mxu0 0.0
    %969 = vmatprep.subr.mxu0 0.0
    %970 = vmatpush2.msra.mxu0 0.0
    %971 = vmatprep.mubr.f32.mxu0 0.0
    %972 = vmatmul.mubr.f32.gmra.mxu0 %v139
    %v973 = vpop.f32.mrf.mxu0
    %v974 = vadd.f32 %v906, %v973
    %v975 = vpop.f32.mrf.mxu0
    %976 = vmatprep.mubr.f32.mxu0 0.0
    %977 = vmatmul.mubr.f32.gmra.mxu0 %v142
    %v978 = vpop.f32.mrf.mxu0
    %v979 = vadd.f32 %v906, %v978
    %v980 = vpop.f32.mrf.mxu0
    %981 = vdwg.mxu0
    %v982 = vld [vmem:[%s3 + $0xd0] sm:$0xff]
    %v983 = vld [vmem:[%s3 + $0xd8] sm:$0xff]
    %v984 = vld [vmem:[%s3 + $0xe0] sm:$0xff]
    %v985 = vld [vmem:[%s3 + $0xe8] sm:$0xff]
    %v986 = vld [vmem:[%s4 + $0x7] sm:$0x1]
    %v987 = vlaneseq
    %v988 = vshrl.u32 %v987, 7
    %v989 = vsub.s32 0, %v988
    %v990 = vrot.slane %v986, %v989
    %991 = vmatprep.subr.mxu0 0.0
    %992 = vmatpush1.msra.mxu0 0.0
    %993 = vmatprep.subr.mxu0 0.0
    %994 = vmatpush1.msra.mxu0 0.0
    %995 = vmatprep.subr.mxu0 0.0
    %996 = vmatpush1.msra.mxu0 0.0
    %997 = vmatprep.subr.mxu0 0.0
    %998 = vmatpush1.msra.mxu0 0.0
    %999 = vmatprep.subr.mxu0 0.0
    %1000 = vmatpush1.msra.mxu0 0.0
    %1001 = vmatprep.subr.mxu0 0.0
    %1002 = vmatpush1.msra.mxu0 0.0
    %1003 = vmatprep.subr.mxu0 0.0
    %1004 = vmatpush1.msra.mxu0 0.0
    %1005 = vmatprep.subr.mxu0 0.0
    %1006 = vmatpush1.msra.mxu0 0.0
    %1007 = vmatprep.subr.mxu0 0.0
    %1008 = vmatpush1.msra.mxu0 0.0
    %1009 = vmatprep.subr.mxu0 0.0
    %1010 = vmatpush1.msra.mxu0 0.0
    %1011 = vmatprep.subr.mxu0 0.0
    %1012 = vmatpush1.msra.mxu0 0.0
    %1013 = vmatprep.subr.mxu0 0.0
    %1014 = vmatpush1.msra.mxu0 0.0
    %1015 = vmatprep.subr.mxu0 0.0
    %1016 = vmatpush1.msra.mxu0 %v985
    %1017 = vmatprep.subr.mxu0 0.0
    %1018 = vmatpush1.msra.mxu0 %v984
    %1019 = vmatprep.subr.mxu0 0.0
    %1020 = vmatpush1.msra.mxu0 %v983
    %1021 = vmatprep.subr.mxu0 0.0
    %1022 = vmatpush1.msra.mxu0 %v982
    %1023 = vmatprep.subr.mxu0 0.0
    %1024 = vmatpush2.msra.mxu0 0.0
    %1025 = vmatprep.subr.mxu0 0.0
    %1026 = vmatpush2.msra.mxu0 0.0
    %1027 = vmatprep.subr.mxu0 0.0
    %1028 = vmatpush2.msra.mxu0 0.0
    %1029 = vmatprep.subr.mxu0 0.0
    %1030 = vmatpush2.msra.mxu0 0.0
    %1031 = vmatprep.subr.mxu0 0.0
    %1032 = vmatpush2.msra.mxu0 0.0
    %1033 = vmatprep.subr.mxu0 0.0
    %1034 = vmatpush2.msra.mxu0 0.0
    %1035 = vmatprep.subr.mxu0 0.0
    %1036 = vmatpush2.msra.mxu0 0.0
    %1037 = vmatprep.subr.mxu0 0.0
    %1038 = vmatpush2.msra.mxu0 0.0
    %1039 = vmatprep.subr.mxu0 0.0
    %1040 = vmatpush2.msra.mxu0 0.0
    %1041 = vmatprep.subr.mxu0 0.0
    %1042 = vmatpush2.msra.mxu0 0.0
    %1043 = vmatprep.subr.mxu0 0.0
    %1044 = vmatpush2.msra.mxu0 0.0
    %1045 = vmatprep.subr.mxu0 0.0
    %1046 = vmatpush2.msra.mxu0 0.0
    %1047 = vmatprep.subr.mxu0 0.0
    %1048 = vmatpush2.msra.mxu0 0.0
    %1049 = vmatprep.subr.mxu0 0.0
    %1050 = vmatpush2.msra.mxu0 0.0
    %1051 = vmatprep.subr.mxu0 0.0
    %1052 = vmatpush2.msra.mxu0 0.0
    %1053 = vmatprep.subr.mxu0 0.0
    %1054 = vmatpush2.msra.mxu0 0.0
    %1055 = vmatprep.mubr.f32.mxu0 0.0
    %1056 = vmatmul.mubr.f32.gmra.mxu0 %v139
    %v1057 = vpop.f32.mrf.mxu0
    %v1058 = vadd.f32 %v990, %v1057
    %v1059 = vpop.f32.mrf.mxu0
    %1060 = vmatprep.mubr.f32.mxu0 0.0
    %1061 = vmatmul.mubr.f32.gmra.mxu0 %v142
    %v1062 = vpop.f32.mrf.mxu0
    %v1063 = vadd.f32 %v990, %v1062
    %v1064 = vpop.f32.mrf.mxu0
    %1065 = vdwg.mxu0
    %v1067 = vsel %vm137, %v890, 0
    %v1070 = vsel %vm137, %v974, 0
    %1072 = vmatprep.subr.mxu0 0.0
    %1073 = vmatpush1.xpose.msra.mxu0 0.0
    %1074 = vmatprep.subr.mxu0 0.0
    %1075 = vmatpush1.xpose.msra.mxu0 0.0
    %1076 = vmatprep.subr.mxu0 0.0
    %1077 = vmatpush1.xpose.msra.mxu0 0.0
    %1078 = vmatprep.subr.mxu0 0.0
    %1079 = vmatpush1.xpose.msra.mxu0 0.0
    %1080 = vmatprep.subr.mxu0 0.0
    %1081 = vmatpush1.xpose.msra.mxu0 0.0
    %1082 = vmatprep.subr.mxu0 0.0
    %1083 = vmatpush1.xpose.msra.mxu0 0.0
    %1084 = vmatprep.subr.mxu0 0.0
    %1085 = vmatpush1.xpose.msra.mxu0 0.0
    %1086 = vmatprep.subr.mxu0 0.0
    %1087 = vmatpush1.xpose.msra.mxu0 0.0
    %1088 = vmatprep.subr.mxu0 0.0
    %1089 = vmatpush1.xpose.msra.mxu0 0.0
    %1090 = vmatprep.subr.mxu0 0.0
    %1091 = vmatpush1.xpose.msra.mxu0 0.0
    %1092 = vmatprep.subr.mxu0 0.0
    %1093 = vmatpush1.xpose.msra.mxu0 0.0
    %1094 = vmatprep.subr.mxu0 0.0
    %1095 = vmatpush1.xpose.msra.mxu0 0.0
    %1096 = vmatprep.subr.mxu0 0.0
    %1097 = vmatpush1.xpose.msra.mxu0 0.0
    %1098 = vmatprep.subr.mxu0 0.0
    %1099 = vmatpush1.xpose.msra.mxu0 0.0
    %1100 = vmatprep.subr.mxu0 0.0
    %1101 = vmatpush1.xpose.msra.mxu0 0.0
    %1102 = vmatprep.subr.mxu0 0.0
    %1103 = vmatpush1.xpose.msra.mxu0 %v1070
    %1104 = vmatprep.subr.mxu0 0.0
    %1105 = vmatpush2.xpose.msra.mxu0 0.0
    %1106 = vmatprep.subr.mxu0 0.0
    %1107 = vmatpush2.xpose.msra.mxu0 0.0
    %1108 = vmatprep.subr.mxu0 0.0
    %1109 = vmatpush2.xpose.msra.mxu0 0.0
    %1110 = vmatprep.subr.mxu0 0.0
    %1111 = vmatpush2.xpose.msra.mxu0 0.0
    %1112 = vmatprep.subr.mxu0 0.0
    %1113 = vmatpush2.xpose.msra.mxu0 0.0
    %1114 = vmatprep.subr.mxu0 0.0
    %1115 = vmatpush2.xpose.msra.mxu0 0.0
    %1116 = vmatprep.subr.mxu0 0.0
    %1117 = vmatpush2.xpose.msra.mxu0 0.0
    %1118 = vmatprep.subr.mxu0 0.0
    %1119 = vmatpush2.xpose.msra.mxu0 0.0
    %1120 = vmatprep.subr.mxu0 0.0
    %1121 = vmatpush2.xpose.msra.mxu0 0.0
    %1122 = vmatprep.subr.mxu0 0.0
    %1123 = vmatpush2.xpose.msra.mxu0 0.0
    %1124 = vmatprep.subr.mxu0 0.0
    %1125 = vmatpush2.xpose.msra.mxu0 0.0
    %1126 = vmatprep.subr.mxu0 0.0
    %1127 = vmatpush2.xpose.msra.mxu0 0.0
    %1128 = vmatprep.subr.mxu0 0.0
    %1129 = vmatpush2.xpose.msra.mxu0 0.0
    %1130 = vmatprep.subr.mxu0 0.0
    %1131 = vmatpush2.xpose.msra.mxu0 0.0
    %1132 = vmatprep.subr.mxu0 0.0
    %1133 = vmatpush2.xpose.msra.mxu0 0.0
    %1134 = vmatprep.subr.mxu0 0.0
    %1135 = vmatpush2.xpose.msra.mxu0 0.0
    %1136 = vmatprep.mubr.f32.mxu0 0.0
    %1137 = vmatmul.mubr.f32.gmra.mxu0 %v1067
    %v1138 = vpop.f32.mrf.mxu0
    %v1139 = vadd.f32 0.0, %v1138
    %v1140 = vpop.f32.mrf.mxu0
    %1141 = vdwg.mxu0
    %v1143 = vsel %vm137, %v895, 0
    %v1146 = vsel %vm137, %v979, 0
    %1148 = vmatprep.subr.mxu0 0.0
    %1149 = vmatpush1.xpose.msra.mxu0 0.0
    %1150 = vmatprep.subr.mxu0 0.0
    %1151 = vmatpush1.xpose.msra.mxu0 0.0
    %1152 = vmatprep.subr.mxu0 0.0
    %1153 = vmatpush1.xpose.msra.mxu0 0.0
    %1154 = vmatprep.subr.mxu0 0.0
    %1155 = vmatpush1.xpose.msra.mxu0 0.0
    %1156 = vmatprep.subr.mxu0 0.0
    %1157 = vmatpush1.xpose.msra.mxu0 0.0
    %1158 = vmatprep.subr.mxu0 0.0
    %1159 = vmatpush1.xpose.msra.mxu0 0.0
    %1160 = vmatprep.subr.mxu0 0.0
    %1161 = vmatpush1.xpose.msra.mxu0 0.0
    %1162 = vmatprep.subr.mxu0 0.0
    %1163 = vmatpush1.xpose.msra.mxu0 0.0
    %1164 = vmatprep.subr.mxu0 0.0
    %1165 = vmatpush1.xpose.msra.mxu0 0.0
    %1166 = vmatprep.subr.mxu0 0.0
    %1167 = vmatpush1.xpose.msra.mxu0 0.0
    %1168 = vmatprep.subr.mxu0 0.0
    %1169 = vmatpush1.xpose.msra.mxu0 0.0
    %1170 = vmatprep.subr.mxu0 0.0
    %1171 = vmatpush1.xpose.msra.mxu0 0.0
    %1172 = vmatprep.subr.mxu0 0.0
    %1173 = vmatpush1.xpose.msra.mxu0 0.0
    %1174 = vmatprep.subr.mxu0 0.0
    %1175 = vmatpush1.xpose.msra.mxu0 0.0
    %1176 = vmatprep.subr.mxu0 0.0
    %1177 = vmatpush1.xpose.msra.mxu0 0.0
    %1178 = vmatprep.subr.mxu0 0.0
    %1179 = vmatpush1.xpose.msra.mxu0 %v1146
    %1180 = vmatprep.subr.mxu0 0.0
    %1181 = vmatpush2.xpose.msra.mxu0 0.0
    %1182 = vmatprep.subr.mxu0 0.0
    %1183 = vmatpush2.xpose.msra.mxu0 0.0
    %1184 = vmatprep.subr.mxu0 0.0
    %1185 = vmatpush2.xpose.msra.mxu0 0.0
    %1186 = vmatprep.subr.mxu0 0.0
    %1187 = vmatpush2.xpose.msra.mxu0 0.0
    %1188 = vmatprep.subr.mxu0 0.0
    %1189 = vmatpush2.xpose.msra.mxu0 0.0
    %1190 = vmatprep.subr.mxu0 0.0
    %1191 = vmatpush2.xpose.msra.mxu0 0.0
    %1192 = vmatprep.subr.mxu0 0.0
    %1193 = vmatpush2.xpose.msra.mxu0 0.0
    %1194 = vmatprep.subr.mxu0 0.0
    %1195 = vmatpush2.xpose.msra.mxu0 0.0
    %1196 = vmatprep.subr.mxu0 0.0
    %1197 = vmatpush2.xpose.msra.mxu0 0.0
    %1198 = vmatprep.subr.mxu0 0.0
    %1199 = vmatpush2.xpose.msra.mxu0 0.0
    %1200 = vmatprep.subr.mxu0 0.0
    %1201 = vmatpush2.xpose.msra.mxu0 0.0
    %1202 = vmatprep.subr.mxu0 0.0
    %1203 = vmatpush2.xpose.msra.mxu0 0.0
    %1204 = vmatprep.subr.mxu0 0.0
    %1205 = vmatpush2.xpose.msra.mxu0 0.0
    %1206 = vmatprep.subr.mxu0 0.0
    %1207 = vmatpush2.xpose.msra.mxu0 0.0
    %1208 = vmatprep.subr.mxu0 0.0
    %1209 = vmatpush2.xpose.msra.mxu0 0.0
    %1210 = vmatprep.subr.mxu0 0.0
    %1211 = vmatpush2.xpose.msra.mxu0 0.0
    %1212 = vmatprep.mubr.f32.mxu0 0.0
    %1213 = vmatmul.mubr.f32.gmra.mxu0 %v1143
    %v1214 = vpop.f32.mrf.mxu0
    %v1215 = vadd.f32 0.0, %v1214
    %v1216 = vpop.f32.mrf.mxu0
    %1217 = vdwg.mxu0
    %v1218 = vmul.f32 %v1139, 0.17677669
    %v1219 = vmul.f32 %v1215, 0.17677669
    %v1220 = vsel %vm37, -1e+10, %v1218
    %v1221 = vsel %vm38, -1e+10, %v1219
    %v1222 = vsel %vm549, %v1220, -inf
    %1223 = vmax.xlane.f32.xlu0 %v1222
    %v1224 = vpop.xlane.xlu0 %1223
    %v1225 = vsel %vm549, %v1221, -inf
    %1226 = vmax.xlane.f32.xlu0 %v1225
    %v1227 = vpop.xlane.xlu0 %1226
    %v1228 = vsub.f32 %v1220, %v1224
    %v1229 = vsub.f32 %v1221, %v1227
    %v1230 = vmul.f32 %v1228, 1.442695
    %v1231 = vpow.pop %v1230
    %v1232 = vmul.f32 %v1229, 1.442695
    %v1233 = vpow.pop %v1232
    %v1234 = vsel %vm549, %v1231, 0.0
    %1235 = vadd.xlane.f32.xlu0 %v1234
    %v1236 = vpop.xlane.xlu0 %1235
    %v1237 = vsel %vm549, %v1233, 0.0
    %1238 = vadd.xlane.f32.xlu0 %v1237
    %v1239 = vpop.xlane.xlu0 %1238
    %v1240 = vrcp.pop %v1236
    %v1241 = vrcp.pop %v1239
    %v1242 = vmul.f32 %v1231, %v1240
    %v1243 = vmul.f32 %v1233, %v1241
    %v1245 = vsel %vm549, %v1242, 0
    %1247 = vmatprep.subr.mxu0 0.0
    %1248 = vmatpush1.msra.mxu0 0.0
    %1249 = vmatprep.subr.mxu0 0.0
    %1250 = vmatpush1.msra.mxu0 0.0
    %1251 = vmatprep.subr.mxu0 0.0
    %1252 = vmatpush1.msra.mxu0 0.0
    %1253 = vmatprep.subr.mxu0 0.0
    %1254 = vmatpush1.msra.mxu0 0.0
    %1255 = vmatprep.subr.mxu0 0.0
    %1256 = vmatpush1.msra.mxu0 0.0
    %1257 = vmatprep.subr.mxu0 0.0
    %1258 = vmatpush1.msra.mxu0 0.0
    %1259 = vmatprep.subr.mxu0 0.0
    %1260 = vmatpush1.msra.mxu0 0.0
    %1261 = vmatprep.subr.mxu0 0.0
    %1262 = vmatpush1.msra.mxu0 0.0
    %1263 = vmatprep.subr.mxu0 0.0
    %1264 = vmatpush1.msra.mxu0 0.0
    %1265 = vmatprep.subr.mxu0 0.0
    %1266 = vmatpush1.msra.mxu0 0.0
    %1267 = vmatprep.subr.mxu0 0.0
    %1268 = vmatpush1.msra.mxu0 0.0
    %1269 = vmatprep.subr.mxu0 0.0
    %1270 = vmatpush1.msra.mxu0 0.0
    %1271 = vmatprep.subr.mxu0 0.0
    %1272 = vmatpush1.msra.mxu0 0.0
    %1273 = vmatprep.subr.mxu0 0.0
    %1274 = vmatpush1.msra.mxu0 0.0
    %1275 = vmatprep.subr.mxu0 0.0
    %1276 = vmatpush1.msra.mxu0 0.0
    %1277 = vmatprep.subr.mxu0 0.0
    %1278 = vmatpush1.msra.mxu0 %v1058
    %1279 = vmatprep.subr.mxu0 0.0
    %1280 = vmatpush2.msra.mxu0 0.0
    %1281 = vmatprep.subr.mxu0 0.0
    %1282 = vmatpush2.msra.mxu0 0.0
    %1283 = vmatprep.subr.mxu0 0.0
    %1284 = vmatpush2.msra.mxu0 0.0
    %1285 = vmatprep.subr.mxu0 0.0
    %1286 = vmatpush2.msra.mxu0 0.0
    %1287 = vmatprep.subr.mxu0 0.0
    %1288 = vmatpush2.msra.mxu0 0.0
    %1289 = vmatprep.subr.mxu0 0.0
    %1290 = vmatpush2.msra.mxu0 0.0
    %1291 = vmatprep.subr.mxu0 0.0
    %1292 = vmatpush2.msra.mxu0 0.0
    %1293 = vmatprep.subr.mxu0 0.0
    %1294 = vmatpush2.msra.mxu0 0.0
    %1295 = vmatprep.subr.mxu0 0.0
    %1296 = vmatpush2.msra.mxu0 0.0
    %1297 = vmatprep.subr.mxu0 0.0
    %1298 = vmatpush2.msra.mxu0 0.0
    %1299 = vmatprep.subr.mxu0 0.0
    %1300 = vmatpush2.msra.mxu0 0.0
    %1301 = vmatprep.subr.mxu0 0.0
    %1302 = vmatpush2.msra.mxu0 0.0
    %1303 = vmatprep.subr.mxu0 0.0
    %1304 = vmatpush2.msra.mxu0 0.0
    %1305 = vmatprep.subr.mxu0 0.0
    %1306 = vmatpush2.msra.mxu0 0.0
    %1307 = vmatprep.subr.mxu0 0.0
    %1308 = vmatpush2.msra.mxu0 0.0
    %1309 = vmatprep.subr.mxu0 0.0
    %1310 = vmatpush2.msra.mxu0 0.0
    %1311 = vmatprep.mubr.f32.mxu0 0.0
    %1312 = vmatmul.mubr.f32.gmra.mxu0 %v1245
    %v1313 = vpop.f32.mrf.mxu0
    %v1314 = vadd.f32 0.0, %v1313
    %v1315 = vpop.f32.mrf.mxu0
    %1316 = vdwg.mxu0
    %v1318 = vsel %vm549, %v1243, 0
    %1320 = vmatprep.subr.mxu0 0.0
    %1321 = vmatpush1.msra.mxu0 0.0
    %1322 = vmatprep.subr.mxu0 0.0
    %1323 = vmatpush1.msra.mxu0 0.0
    %1324 = vmatprep.subr.mxu0 0.0
    %1325 = vmatpush1.msra.mxu0 0.0
    %1326 = vmatprep.subr.mxu0 0.0
    %1327 = vmatpush1.msra.mxu0 0.0
    %1328 = vmatprep.subr.mxu0 0.0
    %1329 = vmatpush1.msra.mxu0 0.0
    %1330 = vmatprep.subr.mxu0 0.0
    %1331 = vmatpush1.msra.mxu0 0.0
    %1332 = vmatprep.subr.mxu0 0.0
    %1333 = vmatpush1.msra.mxu0 0.0
    %1334 = vmatprep.subr.mxu0 0.0
    %1335 = vmatpush1.msra.mxu0 0.0
    %1336 = vmatprep.subr.mxu0 0.0
    %1337 = vmatpush1.msra.mxu0 0.0
    %1338 = vmatprep.subr.mxu0 0.0
    %1339 = vmatpush1.msra.mxu0 0.0
    %1340 = vmatprep.subr.mxu0 0.0
    %1341 = vmatpush1.msra.mxu0 0.0
    %1342 = vmatprep.subr.mxu0 0.0
    %1343 = vmatpush1.msra.mxu0 0.0
    %1344 = vmatprep.subr.mxu0 0.0
    %1345 = vmatpush1.msra.mxu0 0.0
    %1346 = vmatprep.subr.mxu0 0.0
    %1347 = vmatpush1.msra.mxu0 0.0
    %1348 = vmatprep.subr.mxu0 0.0
    %1349 = vmatpush1.msra.mxu0 0.0
    %1350 = vmatprep.subr.mxu0 0.0
    %1351 = vmatpush1.msra.mxu0 %v1063
    %1352 = vmatprep.subr.mxu0 0.0
    %1353 = vmatpush2.msra.mxu0 0.0
    %1354 = vmatprep.subr.mxu0 0.0
    %1355 = vmatpush2.msra.mxu0 0.0
    %1356 = vmatprep.subr.mxu0 0.0
    %1357 = vmatpush2.msra.mxu0 0.0
    %1358 = vmatprep.subr.mxu0 0.0
    %1359 = vmatpush2.msra.mxu0 0.0
    %1360 = vmatprep.subr.mxu0 0.0
    %1361 = vmatpush2.msra.mxu0 0.0
    %1362 = vmatprep.subr.mxu0 0.0
    %1363 = vmatpush2.msra.mxu0 0.0
    %1364 = vmatprep.subr.mxu0 0.0
    %1365 = vmatpush2.msra.mxu0 0.0
    %1366 = vmatprep.subr.mxu0 0.0
    %1367 = vmatpush2.msra.mxu0 0.0
    %1368 = vmatprep.subr.mxu0 0.0
    %1369 = vmatpush2.msra.mxu0 0.0
    %1370 = vmatprep.subr.mxu0 0.0
    %1371 = vmatpush2.msra.mxu0 0.0
    %1372 = vmatprep.subr.mxu0 0.0
    %1373 = vmatpush2.msra.mxu0 0.0
    %1374 = vmatprep.subr.mxu0 0.0
    %1375 = vmatpush2.msra.mxu0 0.0
    %1376 = vmatprep.subr.mxu0 0.0
    %1377 = vmatpush2.msra.mxu0 0.0
    %1378 = vmatprep.subr.mxu0 0.0
    %1379 = vmatpush2.msra.mxu0 0.0
    %1380 = vmatprep.subr.mxu0 0.0
    %1381 = vmatpush2.msra.mxu0 0.0
    %1382 = vmatprep.subr.mxu0 0.0
    %1383 = vmatpush2.msra.mxu0 0.0
    %1384 = vmatprep.mubr.f32.mxu0 0.0
    %1385 = vmatmul.mubr.f32.gmra.mxu0 %v1318
    %v1386 = vpop.f32.mrf.mxu0
    %v1387 = vadd.f32 0.0, %v1386
    %v1388 = vpop.f32.mrf.mxu0
    %1389 = vdwg.mxu0
    %v1390 = vld [vmem:[%s3 + $0xf0] sm:$0xff]
    %v1391 = vld [vmem:[%s3 + $0xf8] sm:$0xff]
    %v1392 = vld [vmem:[%s3 + $0x100] sm:$0xff]
    %v1393 = vld [vmem:[%s3 + $0x108] sm:$0xff]
    %v1394 = vld [vmem:[%s4 + $0x8] sm:$0x1]
    %v1395 = vlaneseq
    %v1396 = vshrl.u32 %v1395, 7
    %v1397 = vsub.s32 0, %v1396
    %v1398 = vrot.slane %v1394, %v1397
    %v1400 = vsel %vm137, %v1314, 0
    %v1403 = vsel %vm137, %v1387, 0
    %1405 = vmatprep.subr.mxu0 0.0
    %1406 = vmatpush1.msra.mxu0 0.0
    %1407 = vmatprep.subr.mxu0 0.0
    %1408 = vmatpush1.msra.mxu0 0.0
    %1409 = vmatprep.subr.mxu0 0.0
    %1410 = vmatpush1.msra.mxu0 0.0
    %1411 = vmatprep.subr.mxu0 0.0
    %1412 = vmatpush1.msra.mxu0 0.0
    %1413 = vmatprep.subr.mxu0 0.0
    %1414 = vmatpush1.msra.mxu0 0.0
    %1415 = vmatprep.subr.mxu0 0.0
    %1416 = vmatpush1.msra.mxu0 0.0
    %1417 = vmatprep.subr.mxu0 0.0
    %1418 = vmatpush1.msra.mxu0 0.0
    %1419 = vmatprep.subr.mxu0 0.0
    %1420 = vmatpush1.msra.mxu0 0.0
    %1421 = vmatprep.subr.mxu0 0.0
    %1422 = vmatpush1.msra.mxu0 0.0
    %1423 = vmatprep.subr.mxu0 0.0
    %1424 = vmatpush1.msra.mxu0 0.0
    %1425 = vmatprep.subr.mxu0 0.0
    %1426 = vmatpush1.msra.mxu0 0.0
    %1427 = vmatprep.subr.mxu0 0.0
    %1428 = vmatpush1.msra.mxu0 0.0
    %1429 = vmatprep.subr.mxu0 0.0
    %1430 = vmatpush1.msra.mxu0 %v1393
    %1431 = vmatprep.subr.mxu0 0.0
    %1432 = vmatpush1.msra.mxu0 %v1392
    %1433 = vmatprep.subr.mxu0 0.0
    %1434 = vmatpush1.msra.mxu0 %v1391
    %1435 = vmatprep.subr.mxu0 0.0
    %1436 = vmatpush1.msra.mxu0 %v1390
    %1437 = vmatprep.subr.mxu0 0.0
    %1438 = vmatpush2.msra.mxu0 0.0
    %1439 = vmatprep.subr.mxu0 0.0
    %1440 = vmatpush2.msra.mxu0 0.0
    %1441 = vmatprep.subr.mxu0 0.0
    %1442 = vmatpush2.msra.mxu0 0.0
    %1443 = vmatprep.subr.mxu0 0.0
    %1444 = vmatpush2.msra.mxu0 0.0
    %1445 = vmatprep.subr.mxu0 0.0
    %1446 = vmatpush2.msra.mxu0 0.0
    %1447 = vmatprep.subr.mxu0 0.0
    %1448 = vmatpush2.msra.mxu0 0.0
    %1449 = vmatprep.subr.mxu0 0.0
    %1450 = vmatpush2.msra.mxu0 0.0
    %1451 = vmatprep.subr.mxu0 0.0
    %1452 = vmatpush2.msra.mxu0 0.0
    %1453 = vmatprep.subr.mxu0 0.0
    %1454 = vmatpush2.msra.mxu0 0.0
    %1455 = vmatprep.subr.mxu0 0.0
    %1456 = vmatpush2.msra.mxu0 0.0
    %1457 = vmatprep.subr.mxu0 0.0
    %1458 = vmatpush2.msra.mxu0 0.0
    %1459 = vmatprep.subr.mxu0 0.0
    %1460 = vmatpush2.msra.mxu0 0.0
    %1461 = vmatprep.subr.mxu0 0.0
    %1462 = vmatpush2.msra.mxu0 0.0
    %1463 = vmatprep.subr.mxu0 0.0
    %1464 = vmatpush2.msra.mxu0 0.0
    %1465 = vmatprep.subr.mxu0 0.0
    %1466 = vmatpush2.msra.mxu0 0.0
    %1467 = vmatprep.subr.mxu0 0.0
    %1468 = vmatpush2.msra.mxu0 0.0
    %1469 = vmatprep.mubr.f32.mxu0 0.0
    %1470 = vmatmul.mubr.f32.gmra.mxu0 %v1400
    %v1471 = vpop.f32.mrf.mxu0
    %v1472 = vadd.f32 %v1398, %v1471
    %v1473 = vpop.f32.mrf.mxu0
    %1474 = vmatprep.mubr.f32.mxu0 0.0
    %1475 = vmatmul.mubr.f32.gmra.mxu0 %v1403
    %v1476 = vpop.f32.mrf.mxu0
    %v1477 = vadd.f32 %v1398, %v1476
    %v1478 = vpop.f32.mrf.mxu0
    %1479 = vdwg.mxu0
    %v1480 = vld [vmem:[%s3 + $0x110] sm:$0xff]
    %v1481 = vld [vmem:[%s3 + $0x118] sm:$0xff]
    %v1482 = vld [vmem:[%s3 + $0x120] sm:$0xff]
    %v1483 = vld [vmem:[%s3 + $0x128] sm:$0xff]
    %v1484 = vld [vmem:[%s4 + $0x9] sm:$0x1]
    %v1485 = vlaneseq
    %v1486 = vshrl.u32 %v1485, 7
    %v1487 = vsub.s32 0, %v1486
    %v1488 = vrot.slane %v1484, %v1487
    %v1490 = vsel %vm137, %v1472, 0
    %v1493 = vsel %vm137, %v1477, 0
    %1495 = vmatprep.subr.mxu0 0.0
    %1496 = vmatpush1.msra.mxu0 0.0
    %1497 = vmatprep.subr.mxu0 0.0
    %1498 = vmatpush1.msra.mxu0 0.0
    %1499 = vmatprep.subr.mxu0 0.0
    %1500 = vmatpush1.msra.mxu0 0.0
    %1501 = vmatprep.subr.mxu0 0.0
    %1502 = vmatpush1.msra.mxu0 0.0
    %1503 = vmatprep.subr.mxu0 0.0
    %1504 = vmatpush1.msra.mxu0 0.0
    %1505 = vmatprep.subr.mxu0 0.0
    %1506 = vmatpush1.msra.mxu0 0.0
    %1507 = vmatprep.subr.mxu0 0.0
    %1508 = vmatpush1.msra.mxu0 0.0
    %1509 = vmatprep.subr.mxu0 0.0
    %1510 = vmatpush1.msra.mxu0 0.0
    %1511 = vmatprep.subr.mxu0 0.0
    %1512 = vmatpush1.msra.mxu0 0.0
    %1513 = vmatprep.subr.mxu0 0.0
    %1514 = vmatpush1.msra.mxu0 0.0
    %1515 = vmatprep.subr.mxu0 0.0
    %1516 = vmatpush1.msra.mxu0 0.0
    %1517 = vmatprep.subr.mxu0 0.0
    %1518 = vmatpush1.msra.mxu0 0.0
    %1519 = vmatprep.subr.mxu0 0.0
    %1520 = vmatpush1.msra.mxu0 %v1483
    %1521 = vmatprep.subr.mxu0 0.0
    %1522 = vmatpush1.msra.mxu0 %v1482
    %1523 = vmatprep.subr.mxu0 0.0
    %1524 = vmatpush1.msra.mxu0 %v1481
    %1525 = vmatprep.subr.mxu0 0.0
    %1526 = vmatpush1.msra.mxu0 %v1480
    %1527 = vmatprep.subr.mxu0 0.0
    %1528 = vmatpush2.msra.mxu0 0.0
    %1529 = vmatprep.subr.mxu0 0.0
    %1530 = vmatpush2.msra.mxu0 0.0
    %1531 = vmatprep.subr.mxu0 0.0
    %1532 = vmatpush2.msra.mxu0 0.0
    %1533 = vmatprep.subr.mxu0 0.0
    %1534 = vmatpush2.msra.mxu0 0.0
    %1535 = vmatprep.subr.mxu0 0.0
    %1536 = vmatpush2.msra.mxu0 0.0
    %1537 = vmatprep.subr.mxu0 0.0
    %1538 = vmatpush2.msra.mxu0 0.0
    %1539 = vmatprep.subr.mxu0 0.0
    %1540 = vmatpush2.msra.mxu0 0.0
    %1541 = vmatprep.subr.mxu0 0.0
    %1542 = vmatpush2.msra.mxu0 0.0
    %1543 = vmatprep.subr.mxu0 0.0
    %1544 = vmatpush2.msra.mxu0 0.0
    %1545 = vmatprep.subr.mxu0 0.0
    %1546 = vmatpush2.msra.mxu0 0.0
    %1547 = vmatprep.subr.mxu0 0.0
    %1548 = vmatpush2.msra.mxu0 0.0
    %1549 = vmatprep.subr.mxu0 0.0
    %1550 = vmatpush2.msra.mxu0 0.0
    %1551 = vmatprep.subr.mxu0 0.0
    %1552 = vmatpush2.msra.mxu0 0.0
    %1553 = vmatprep.subr.mxu0 0.0
    %1554 = vmatpush2.msra.mxu0 0.0
    %1555 = vmatprep.subr.mxu0 0.0
    %1556 = vmatpush2.msra.mxu0 0.0
    %1557 = vmatprep.subr.mxu0 0.0
    %1558 = vmatpush2.msra.mxu0 0.0
    %1559 = vmatprep.mubr.f32.mxu0 0.0
    %1560 = vmatmul.mubr.f32.gmra.mxu0 %v1490
    %v1561 = vpop.f32.mrf.mxu0
    %v1562 = vadd.f32 %v1488, %v1561
    %v1563 = vpop.f32.mrf.mxu0
    %1564 = vmatprep.mubr.f32.mxu0 0.0
    %1565 = vmatmul.mubr.f32.gmra.mxu0 %v1493
    %v1566 = vpop.f32.mrf.mxu0
    %v1567 = vadd.f32 %v1488, %v1566
    %v1568 = vpop.f32.mrf.mxu0
    %1569 = vdwg.mxu0
    %v1570 = vld [vmem:[%s3 + $0x130] sm:$0xff]
    %v1571 = vld [vmem:[%s3 + $0x138] sm:$0xff]
    %v1572 = vld [vmem:[%s3 + $0x140] sm:$0xff]
    %v1573 = vld [vmem:[%s3 + $0x148] sm:$0xff]
    %v1574 = vld [vmem:[%s4 + $0xa] sm:$0x1]
    %v1575 = vlaneseq
    %v1576 = vshrl.u32 %v1575, 7
    %v1577 = vsub.s32 0, %v1576
    %v1578 = vrot.slane %v1574, %v1577
    %1579 = vmatprep.subr.mxu0 0.0
    %1580 = vmatpush1.msra.mxu0 0.0
    %1581 = vmatprep.subr.mxu0 0.0
    %1582 = vmatpush1.msra.mxu0 0.0
    %1583 = vmatprep.subr.mxu0 0.0
    %1584 = vmatpush1.msra.mxu0 0.0
    %1585 = vmatprep.subr.mxu0 0.0
    %1586 = vmatpush1.msra.mxu0 0.0
    %1587 = vmatprep.subr.mxu0 0.0
    %1588 = vmatpush1.msra.mxu0 0.0
    %1589 = vmatprep.subr.mxu0 0.0
    %1590 = vmatpush1.msra.mxu0 0.0
    %1591 = vmatprep.subr.mxu0 0.0
    %1592 = vmatpush1.msra.mxu0 0.0
    %1593 = vmatprep.subr.mxu0 0.0
    %1594 = vmatpush1.msra.mxu0 0.0
    %1595 = vmatprep.subr.mxu0 0.0
    %1596 = vmatpush1.msra.mxu0 0.0
    %1597 = vmatprep.subr.mxu0 0.0
    %1598 = vmatpush1.msra.mxu0 0.0
    %1599 = vmatprep.subr.mxu0 0.0
    %1600 = vmatpush1.msra.mxu0 0.0
    %1601 = vmatprep.subr.mxu0 0.0
    %1602 = vmatpush1.msra.mxu0 0.0
    %1603 = vmatprep.subr.mxu0 0.0
    %1604 = vmatpush1.msra.mxu0 %v1573
    %1605 = vmatprep.subr.mxu0 0.0
    %1606 = vmatpush1.msra.mxu0 %v1572
    %1607 = vmatprep.subr.mxu0 0.0
    %1608 = vmatpush1.msra.mxu0 %v1571
    %1609 = vmatprep.subr.mxu0 0.0
    %1610 = vmatpush1.msra.mxu0 %v1570
    %1611 = vmatprep.subr.mxu0 0.0
    %1612 = vmatpush2.msra.mxu0 0.0
    %1613 = vmatprep.subr.mxu0 0.0
    %1614 = vmatpush2.msra.mxu0 0.0
    %1615 = vmatprep.subr.mxu0 0.0
    %1616 = vmatpush2.msra.mxu0 0.0
    %1617 = vmatprep.subr.mxu0 0.0
    %1618 = vmatpush2.msra.mxu0 0.0
    %1619 = vmatprep.subr.mxu0 0.0
    %1620 = vmatpush2.msra.mxu0 0.0
    %1621 = vmatprep.subr.mxu0 0.0
    %1622 = vmatpush2.msra.mxu0 0.0
    %1623 = vmatprep.subr.mxu0 0.0
    %1624 = vmatpush2.msra.mxu0 0.0
    %1625 = vmatprep.subr.mxu0 0.0
    %1626 = vmatpush2.msra.mxu0 0.0
    %1627 = vmatprep.subr.mxu0 0.0
    %1628 = vmatpush2.msra.mxu0 0.0
    %1629 = vmatprep.subr.mxu0 0.0
    %1630 = vmatpush2.msra.mxu0 0.0
    %1631 = vmatprep.subr.mxu0 0.0
    %1632 = vmatpush2.msra.mxu0 0.0
    %1633 = vmatprep.subr.mxu0 0.0
    %1634 = vmatpush2.msra.mxu0 0.0
    %1635 = vmatprep.subr.mxu0 0.0
    %1636 = vmatpush2.msra.mxu0 0.0
    %1637 = vmatprep.subr.mxu0 0.0
    %1638 = vmatpush2.msra.mxu0 0.0
    %1639 = vmatprep.subr.mxu0 0.0
    %1640 = vmatpush2.msra.mxu0 0.0
    %1641 = vmatprep.subr.mxu0 0.0
    %1642 = vmatpush2.msra.mxu0 0.0
    %1643 = vmatprep.mubr.f32.mxu0 0.0
    %1644 = vmatmul.mubr.f32.gmra.mxu0 %v229
    %v1645 = vpop.f32.mrf.mxu0
    %v1646 = vadd.f32 %v1578, %v1645
    %v1647 = vpop.f32.mrf.mxu0
    %1648 = vmatprep.mubr.f32.mxu0 0.0
    %1649 = vmatmul.mubr.f32.gmra.mxu0 %v232
    %v1650 = vpop.f32.mrf.mxu0
    %v1651 = vadd.f32 %v1578, %v1650
    %v1652 = vpop.f32.mrf.mxu0
    %1653 = vdwg.mxu0
    %v1654 = vld [vmem:[%s3 + $0x150] sm:$0xff]
    %v1655 = vld [vmem:[%s3 + $0x158] sm:$0xff]
    %v1656 = vld [vmem:[%s3 + $0x160] sm:$0xff]
    %v1657 = vld [vmem:[%s3 + $0x168] sm:$0xff]
    %v1658 = vld [vmem:[%s4 + $0xb] sm:$0x1]
    %v1659 = vlaneseq
    %v1660 = vshrl.u32 %v1659, 7
    %v1661 = vsub.s32 0, %v1660
    %v1662 = vrot.slane %v1658, %v1661
    %1663 = vmatprep.subr.mxu0 0.0
    %1664 = vmatpush1.msra.mxu0 0.0
    %1665 = vmatprep.subr.mxu0 0.0
    %1666 = vmatpush1.msra.mxu0 0.0
    %1667 = vmatprep.subr.mxu0 0.0
    %1668 = vmatpush1.msra.mxu0 0.0
    %1669 = vmatprep.subr.mxu0 0.0
    %1670 = vmatpush1.msra.mxu0 0.0
    %1671 = vmatprep.subr.mxu0 0.0
    %1672 = vmatpush1.msra.mxu0 0.0
    %1673 = vmatprep.subr.mxu0 0.0
    %1674 = vmatpush1.msra.mxu0 0.0
    %1675 = vmatprep.subr.mxu0 0.0
    %1676 = vmatpush1.msra.mxu0 0.0
    %1677 = vmatprep.subr.mxu0 0.0
    %1678 = vmatpush1.msra.mxu0 0.0
    %1679 = vmatprep.subr.mxu0 0.0
    %1680 = vmatpush1.msra.mxu0 0.0
    %1681 = vmatprep.subr.mxu0 0.0
    %1682 = vmatpush1.msra.mxu0 0.0
    %1683 = vmatprep.subr.mxu0 0.0
    %1684 = vmatpush1.msra.mxu0 0.0
    %1685 = vmatprep.subr.mxu0 0.0
    %1686 = vmatpush1.msra.mxu0 0.0
    %1687 = vmatprep.subr.mxu0 0.0
    %1688 = vmatpush1.msra.mxu0 %v1657
    %1689 = vmatprep.subr.mxu0 0.0
    %1690 = vmatpush1.msra.mxu0 %v1656
    %1691 = vmatprep.subr.mxu0 0.0
    %1692 = vmatpush1.msra.mxu0 %v1655
    %1693 = vmatprep.subr.mxu0 0.0
    %1694 = vmatpush1.msra.mxu0 %v1654
    %1695 = vmatprep.subr.mxu0 0.0
    %1696 = vmatpush2.msra.mxu0 0.0
    %1697 = vmatprep.subr.mxu0 0.0
    %1698 = vmatpush2.msra.mxu0 0.0
    %1699 = vmatprep.subr.mxu0 0.0
    %1700 = vmatpush2.msra.mxu0 0.0
    %1701 = vmatprep.subr.mxu0 0.0
    %1702 = vmatpush2.msra.mxu0 0.0
    %1703 = vmatprep.subr.mxu0 0.0
    %1704 = vmatpush2.msra.mxu0 0.0
    %1705 = vmatprep.subr.mxu0 0.0
    %1706 = vmatpush2.msra.mxu0 0.0
    %1707 = vmatprep.subr.mxu0 0.0
    %1708 = vmatpush2.msra.mxu0 0.0
    %1709 = vmatprep.subr.mxu0 0.0
    %1710 = vmatpush2.msra.mxu0 0.0
    %1711 = vmatprep.subr.mxu0 0.0
    %1712 = vmatpush2.msra.mxu0 0.0
    %1713 = vmatprep.subr.mxu0 0.0
    %1714 = vmatpush2.msra.mxu0 0.0
    %1715 = vmatprep.subr.mxu0 0.0
    %1716 = vmatpush2.msra.mxu0 0.0
    %1717 = vmatprep.subr.mxu0 0.0
    %1718 = vmatpush2.msra.mxu0 0.0
    %1719 = vmatprep.subr.mxu0 0.0
    %1720 = vmatpush2.msra.mxu0 0.0
    %1721 = vmatprep.subr.mxu0 0.0
    %1722 = vmatpush2.msra.mxu0 0.0
    %1723 = vmatprep.subr.mxu0 0.0
    %1724 = vmatpush2.msra.mxu0 0.0
    %1725 = vmatprep.subr.mxu0 0.0
    %1726 = vmatpush2.msra.mxu0 0.0
    %1727 = vmatprep.mubr.f32.mxu0 0.0
    %1728 = vmatmul.mubr.f32.gmra.mxu0 %v229
    %v1729 = vpop.f32.mrf.mxu0
    %v1730 = vadd.f32 %v1662, %v1729
    %v1731 = vpop.f32.mrf.mxu0
    %1732 = vmatprep.mubr.f32.mxu0 0.0
    %1733 = vmatmul.mubr.f32.gmra.mxu0 %v232
    %v1734 = vpop.f32.mrf.mxu0
    %v1735 = vadd.f32 %v1662, %v1734
    %v1736 = vpop.f32.mrf.mxu0
    %1737 = vdwg.mxu0
    %v1739 = vsel %vm137, %v1562, 0
    %v1742 = vsel %vm137, %v1646, 0
    %1744 = vmatprep.subr.mxu0 0.0
    %1745 = vmatpush1.xpose.msra.mxu0 0.0
    %1746 = vmatprep.subr.mxu0 0.0
    %1747 = vmatpush1.xpose.msra.mxu0 0.0
    %1748 = vmatprep.subr.mxu0 0.0
    %1749 = vmatpush1.xpose.msra.mxu0 0.0
    %1750 = vmatprep.subr.mxu0 0.0
    %1751 = vmatpush1.xpose.msra.mxu0 0.0
    %1752 = vmatprep.subr.mxu0 0.0
    %1753 = vmatpush1.xpose.msra.mxu0 0.0
    %1754 = vmatprep.subr.mxu0 0.0
    %1755 = vmatpush1.xpose.msra.mxu0 0.0
    %1756 = vmatprep.subr.mxu0 0.0
    %1757 = vmatpush1.xpose.msra.mxu0 0.0
    %1758 = vmatprep.subr.mxu0 0.0
    %1759 = vmatpush1.xpose.msra.mxu0 0.0
    %1760 = vmatprep.subr.mxu0 0.0
    %1761 = vmatpush1.xpose.msra.mxu0 0.0
    %1762 = vmatprep.subr.mxu0 0.0
    %1763 = vmatpush1.xpose.msra.mxu0 0.0
    %1764 = vmatprep.subr.mxu0 0.0
    %1765 = vmatpush1.xpose.msra.mxu0 0.0
    %1766 = vmatprep.subr.mxu0 0.0
    %1767 = vmatpush1.xpose.msra.mxu0 0.0
    %1768 = vmatprep.subr.mxu0 0.0
    %1769 = vmatpush1.xpose.msra.mxu0 0.0
    %1770 = vmatprep.subr.mxu0 0.0
    %1771 = vmatpush1.xpose.msra.mxu0 0.0
    %1772 = vmatprep.subr.mxu0 0.0
    %1773 = vmatpush1.xpose.msra.mxu0 0.0
    %1774 = vmatprep.subr.mxu0 0.0
    %1775 = vmatpush1.xpose.msra.mxu0 %v1742
    %1776 = vmatprep.subr.mxu0 0.0
    %1777 = vmatpush2.xpose.msra.mxu0 0.0
    %1778 = vmatprep.subr.mxu0 0.0
    %1779 = vmatpush2.xpose.msra.mxu0 0.0
    %1780 = vmatprep.subr.mxu0 0.0
    %1781 = vmatpush2.xpose.msra.mxu0 0.0
    %1782 = vmatprep.subr.mxu0 0.0
    %1783 = vmatpush2.xpose.msra.mxu0 0.0
    %1784 = vmatprep.subr.mxu0 0.0
    %1785 = vmatpush2.xpose.msra.mxu0 0.0
    %1786 = vmatprep.subr.mxu0 0.0
    %1787 = vmatpush2.xpose.msra.mxu0 0.0
    %1788 = vmatprep.subr.mxu0 0.0
    %1789 = vmatpush2.xpose.msra.mxu0 0.0
    %1790 = vmatprep.subr.mxu0 0.0
    %1791 = vmatpush2.xpose.msra.mxu0 0.0
    %1792 = vmatprep.subr.mxu0 0.0
    %1793 = vmatpush2.xpose.msra.mxu0 0.0
    %1794 = vmatprep.subr.mxu0 0.0
    %1795 = vmatpush2.xpose.msra.mxu0 0.0
    %1796 = vmatprep.subr.mxu0 0.0
    %1797 = vmatpush2.xpose.msra.mxu0 0.0
    %1798 = vmatprep.subr.mxu0 0.0
    %1799 = vmatpush2.xpose.msra.mxu0 0.0
    %1800 = vmatprep.subr.mxu0 0.0
    %1801 = vmatpush2.xpose.msra.mxu0 0.0
    %1802 = vmatprep.subr.mxu0 0.0
    %1803 = vmatpush2.xpose.msra.mxu0 0.0
    %1804 = vmatprep.subr.mxu0 0.0
    %1805 = vmatpush2.xpose.msra.mxu0 0.0
    %1806 = vmatprep.subr.mxu0 0.0
    %1807 = vmatpush2.xpose.msra.mxu0 0.0
    %1808 = vmatprep.mubr.f32.mxu0 0.0
    %1809 = vmatmul.mubr.f32.gmra.mxu0 %v1739
    %v1810 = vpop.f32.mrf.mxu0
    %v1811 = vadd.f32 0.0, %v1810
    %v1812 = vpop.f32.mrf.mxu0
    %1813 = vdwg.mxu0
    %v1815 = vsel %vm137, %v1567, 0
    %v1818 = vsel %vm137, %v1651, 0
    %1820 = vmatprep.subr.mxu0 0.0
    %1821 = vmatpush1.xpose.msra.mxu0 0.0
    %1822 = vmatprep.subr.mxu0 0.0
    %1823 = vmatpush1.xpose.msra.mxu0 0.0
    %1824 = vmatprep.subr.mxu0 0.0
    %1825 = vmatpush1.xpose.msra.mxu0 0.0
    %1826 = vmatprep.subr.mxu0 0.0
    %1827 = vmatpush1.xpose.msra.mxu0 0.0
    %1828 = vmatprep.subr.mxu0 0.0
    %1829 = vmatpush1.xpose.msra.mxu0 0.0
    %1830 = vmatprep.subr.mxu0 0.0
    %1831 = vmatpush1.xpose.msra.mxu0 0.0
    %1832 = vmatprep.subr.mxu0 0.0
    %1833 = vmatpush1.xpose.msra.mxu0 0.0
    %1834 = vmatprep.subr.mxu0 0.0
    %1835 = vmatpush1.xpose.msra.mxu0 0.0
    %1836 = vmatprep.subr.mxu0 0.0
    %1837 = vmatpush1.xpose.msra.mxu0 0.0
    %1838 = vmatprep.subr.mxu0 0.0
    %1839 = vmatpush1.xpose.msra.mxu0 0.0
    %1840 = vmatprep.subr.mxu0 0.0
    %1841 = vmatpush1.xpose.msra.mxu0 0.0
    %1842 = vmatprep.subr.mxu0 0.0
    %1843 = vmatpush1.xpose.msra.mxu0 0.0
    %1844 = vmatprep.subr.mxu0 0.0
    %1845 = vmatpush1.xpose.msra.mxu0 0.0
    %1846 = vmatprep.subr.mxu0 0.0
    %1847 = vmatpush1.xpose.msra.mxu0 0.0
    %1848 = vmatprep.subr.mxu0 0.0
    %1849 = vmatpush1.xpose.msra.mxu0 0.0
    %1850 = vmatprep.subr.mxu0 0.0
    %1851 = vmatpush1.xpose.msra.mxu0 %v1818
    %1852 = vmatprep.subr.mxu0 0.0
    %1853 = vmatpush2.xpose.msra.mxu0 0.0
    %1854 = vmatprep.subr.mxu0 0.0
    %1855 = vmatpush2.xpose.msra.mxu0 0.0
    %1856 = vmatprep.subr.mxu0 0.0
    %1857 = vmatpush2.xpose.msra.mxu0 0.0
    %1858 = vmatprep.subr.mxu0 0.0
    %1859 = vmatpush2.xpose.msra.mxu0 0.0
    %1860 = vmatprep.subr.mxu0 0.0
    %1861 = vmatpush2.xpose.msra.mxu0 0.0
    %1862 = vmatprep.subr.mxu0 0.0
    %1863 = vmatpush2.xpose.msra.mxu0 0.0
    %1864 = vmatprep.subr.mxu0 0.0
    %1865 = vmatpush2.xpose.msra.mxu0 0.0
    %1866 = vmatprep.subr.mxu0 0.0
    %1867 = vmatpush2.xpose.msra.mxu0 0.0
    %1868 = vmatprep.subr.mxu0 0.0
    %1869 = vmatpush2.xpose.msra.mxu0 0.0
    %1870 = vmatprep.subr.mxu0 0.0
    %1871 = vmatpush2.xpose.msra.mxu0 0.0
    %1872 = vmatprep.subr.mxu0 0.0
    %1873 = vmatpush2.xpose.msra.mxu0 0.0
    %1874 = vmatprep.subr.mxu0 0.0
    %1875 = vmatpush2.xpose.msra.mxu0 0.0
    %1876 = vmatprep.subr.mxu0 0.0
    %1877 = vmatpush2.xpose.msra.mxu0 0.0
    %1878 = vmatprep.subr.mxu0 0.0
    %1879 = vmatpush2.xpose.msra.mxu0 0.0
    %1880 = vmatprep.subr.mxu0 0.0
    %1881 = vmatpush2.xpose.msra.mxu0 0.0
    %1882 = vmatprep.subr.mxu0 0.0
    %1883 = vmatpush2.xpose.msra.mxu0 0.0
    %1884 = vmatprep.mubr.f32.mxu0 0.0
    %1885 = vmatmul.mubr.f32.gmra.mxu0 %v1815
    %v1886 = vpop.f32.mrf.mxu0
    %v1887 = vadd.f32 0.0, %v1886
    %v1888 = vpop.f32.mrf.mxu0
    %1889 = vdwg.mxu0
    %v1890 = vmul.f32 %v1811, 0.17677669
    %v1891 = vmul.f32 %v1887, 0.17677669
    %v1892 = vsel %vm37, -1e+10, %v1890
    %v1893 = vsel %vm38, -1e+10, %v1891
    %v1894 = vsel %vm549, %v1892, -inf
    %1895 = vmax.xlane.f32.xlu0 %v1894
    %v1896 = vpop.xlane.xlu0 %1895
    %v1897 = vsel %vm549, %v1893, -inf
    %1898 = vmax.xlane.f32.xlu0 %v1897
    %v1899 = vpop.xlane.xlu0 %1898
    %v1900 = vsub.f32 %v1892, %v1896
    %v1901 = vsub.f32 %v1893, %v1899
    %v1902 = vmul.f32 %v1900, 1.442695
    %v1903 = vpow.pop %v1902
    %v1904 = vmul.f32 %v1901, 1.442695
    %v1905 = vpow.pop %v1904
    %v1906 = vsel %vm549, %v1903, 0.0
    %1907 = vadd.xlane.f32.xlu0 %v1906
    %v1908 = vpop.xlane.xlu0 %1907
    %v1909 = vsel %vm549, %v1905, 0.0
    %1910 = vadd.xlane.f32.xlu0 %v1909
    %v1911 = vpop.xlane.xlu0 %1910
    %v1912 = vrcp.pop %v1908
    %v1913 = vrcp.pop %v1911
    %v1914 = vmul.f32 %v1903, %v1912
    %v1915 = vmul.f32 %v1905, %v1913
    %v1917 = vsel %vm549, %v1914, 0
    %1919 = vmatprep.subr.mxu0 0.0
    %1920 = vmatpush1.msra.mxu0 0.0
    %1921 = vmatprep.subr.mxu0 0.0
    %1922 = vmatpush1.msra.mxu0 0.0
    %1923 = vmatprep.subr.mxu0 0.0
    %1924 = vmatpush1.msra.mxu0 0.0
    %1925 = vmatprep.subr.mxu0 0.0
    %1926 = vmatpush1.msra.mxu0 0.0
    %1927 = vmatprep.subr.mxu0 0.0
    %1928 = vmatpush1.msra.mxu0 0.0
    %1929 = vmatprep.subr.mxu0 0.0
    %1930 = vmatpush1.msra.mxu0 0.0
    %1931 = vmatprep.subr.mxu0 0.0
    %1932 = vmatpush1.msra.mxu0 0.0
    %1933 = vmatprep.subr.mxu0 0.0
    %1934 = vmatpush1.msra.mxu0 0.0
    %1935 = vmatprep.subr.mxu0 0.0
    %1936 = vmatpush1.msra.mxu0 0.0
    %1937 = vmatprep.subr.mxu0 0.0
    %1938 = vmatpush1.msra.mxu0 0.0
    %1939 = vmatprep.subr.mxu0 0.0
    %1940 = vmatpush1.msra.mxu0 0.0
    %1941 = vmatprep.subr.mxu0 0.0
    %1942 = vmatpush1.msra.mxu0 0.0
    %1943 = vmatprep.subr.mxu0 0.0
    %1944 = vmatpush1.msra.mxu0 0.0
    %1945 = vmatprep.subr.mxu0 0.0
    %1946 = vmatpush1.msra.mxu0 0.0
    %1947 = vmatprep.subr.mxu0 0.0
    %1948 = vmatpush1.msra.mxu0 0.0
    %1949 = vmatprep.subr.mxu0 0.0
    %1950 = vmatpush1.msra.mxu0 %v1730
    %1951 = vmatprep.subr.mxu0 0.0
    %1952 = vmatpush2.msra.mxu0 0.0
    %1953 = vmatprep.subr.mxu0 0.0
    %1954 = vmatpush2.msra.mxu0 0.0
    %1955 = vmatprep.subr.mxu0 0.0
    %1956 = vmatpush2.msra.mxu0 0.0
    %1957 = vmatprep.subr.mxu0 0.0
    %1958 = vmatpush2.msra.mxu0 0.0
    %1959 = vmatprep.subr.mxu0 0.0
    %1960 = vmatpush2.msra.mxu0 0.0
    %1961 = vmatprep.subr.mxu0 0.0
    %1962 = vmatpush2.msra.mxu0 0.0
    %1963 = vmatprep.subr.mxu0 0.0
    %1964 = vmatpush2.msra.mxu0 0.0
    %1965 = vmatprep.subr.mxu0 0.0
    %1966 = vmatpush2.msra.mxu0 0.0
    %1967 = vmatprep.subr.mxu0 0.0
    %1968 = vmatpush2.msra.mxu0 0.0
    %1969 = vmatprep.subr.mxu0 0.0
    %1970 = vmatpush2.msra.mxu0 0.0
    %1971 = vmatprep.subr.mxu0 0.0
    %1972 = vmatpush2.msra.mxu0 0.0
    %1973 = vmatprep.subr.mxu0 0.0
    %1974 = vmatpush2.msra.mxu0 0.0
    %1975 = vmatprep.subr.mxu0 0.0
    %1976 = vmatpush2.msra.mxu0 0.0
    %1977 = vmatprep.subr.mxu0 0.0
    %1978 = vmatpush2.msra.mxu0 0.0
    %1979 = vmatprep.subr.mxu0 0.0
    %1980 = vmatpush2.msra.mxu0 0.0
    %1981 = vmatprep.subr.mxu0 0.0
    %1982 = vmatpush2.msra.mxu0 0.0
    %1983 = vmatprep.mubr.f32.mxu0 0.0
    %1984 = vmatmul.mubr.f32.gmra.mxu0 %v1917
    %v1985 = vpop.f32.mrf.mxu0
    %v1986 = vadd.f32 0.0, %v1985
    %v1987 = vpop.f32.mrf.mxu0
    %1988 = vdwg.mxu0
    %v1990 = vsel %vm549, %v1915, 0
    %1992 = vmatprep.subr.mxu0 0.0
    %1993 = vmatpush1.msra.mxu0 0.0
    %1994 = vmatprep.subr.mxu0 0.0
    %1995 = vmatpush1.msra.mxu0 0.0
    %1996 = vmatprep.subr.mxu0 0.0
    %1997 = vmatpush1.msra.mxu0 0.0
    %1998 = vmatprep.subr.mxu0 0.0
    %1999 = vmatpush1.msra.mxu0 0.0
    %2000 = vmatprep.subr.mxu0 0.0
    %2001 = vmatpush1.msra.mxu0 0.0
    %2002 = vmatprep.subr.mxu0 0.0
    %2003 = vmatpush1.msra.mxu0 0.0
    %2004 = vmatprep.subr.mxu0 0.0
    %2005 = vmatpush1.msra.mxu0 0.0
    %2006 = vmatprep.subr.mxu0 0.0
    %2007 = vmatpush1.msra.mxu0 0.0
    %2008 = vmatprep.subr.mxu0 0.0
    %2009 = vmatpush1.msra.mxu0 0.0
    %2010 = vmatprep.subr.mxu0 0.0
    %2011 = vmatpush1.msra.mxu0 0.0
    %2012 = vmatprep.subr.mxu0 0.0
    %2013 = vmatpush1.msra.mxu0 0.0
    %2014 = vmatprep.subr.mxu0 0.0
    %2015 = vmatpush1.msra.mxu0 0.0
    %2016 = vmatprep.subr.mxu0 0.0
    %2017 = vmatpush1.msra.mxu0 0.0
    %2018 = vmatprep.subr.mxu0 0.0
    %2019 = vmatpush1.msra.mxu0 0.0
    %2020 = vmatprep.subr.mxu0 0.0
    %2021 = vmatpush1.msra.mxu0 0.0
    %2022 = vmatprep.subr.mxu0 0.0
    %2023 = vmatpush1.msra.mxu0 %v1735
    %2024 = vmatprep.subr.mxu0 0.0
    %2025 = vmatpush2.msra.mxu0 0.0
    %2026 = vmatprep.subr.mxu0 0.0
    %2027 = vmatpush2.msra.mxu0 0.0
    %2028 = vmatprep.subr.mxu0 0.0
    %2029 = vmatpush2.msra.mxu0 0.0
    %2030 = vmatprep.subr.mxu0 0.0
    %2031 = vmatpush2.msra.mxu0 0.0
    %2032 = vmatprep.subr.mxu0 0.0
    %2033 = vmatpush2.msra.mxu0 0.0
    %2034 = vmatprep.subr.mxu0 0.0
    %2035 = vmatpush2.msra.mxu0 0.0
    %2036 = vmatprep.subr.mxu0 0.0
    %2037 = vmatpush2.msra.mxu0 0.0
    %2038 = vmatprep.subr.mxu0 0.0
    %2039 = vmatpush2.msra.mxu0 0.0
    %2040 = vmatprep.subr.mxu0 0.0
    %2041 = vmatpush2.msra.mxu0 0.0
    %2042 = vmatprep.subr.mxu0 0.0
    %2043 = vmatpush2.msra.mxu0 0.0
    %2044 = vmatprep.subr.mxu0 0.0
    %2045 = vmatpush2.msra.mxu0 0.0
    %2046 = vmatprep.subr.mxu0 0.0
    %2047 = vmatpush2.msra.mxu0 0.0
    %2048 = vmatprep.subr.mxu0 0.0
    %2049 = vmatpush2.msra.mxu0 0.0
    %2050 = vmatprep.subr.mxu0 0.0
    %2051 = vmatpush2.msra.mxu0 0.0
    %2052 = vmatprep.subr.mxu0 0.0
    %2053 = vmatpush2.msra.mxu0 0.0
    %2054 = vmatprep.subr.mxu0 0.0
    %2055 = vmatpush2.msra.mxu0 0.0
    %2056 = vmatprep.mubr.f32.mxu0 0.0
    %2057 = vmatmul.mubr.f32.gmra.mxu0 %v1990
    %v2058 = vpop.f32.mrf.mxu0
    %v2059 = vadd.f32 0.0, %v2058
    %v2060 = vpop.f32.mrf.mxu0
    %2061 = vdwg.mxu0
    %v2062 = vld [vmem:[%s3 + $0x170] sm:$0xff]
    %v2063 = vld [vmem:[%s3 + $0x178] sm:$0xff]
    %v2064 = vld [vmem:[%s3 + $0x180] sm:$0xff]
    %v2065 = vld [vmem:[%s3 + $0x188] sm:$0xff]
    %v2066 = vld [vmem:[%s4 + $0xc] sm:$0x1]
    %v2067 = vlaneseq
    %v2068 = vshrl.u32 %v2067, 7
    %v2069 = vsub.s32 0, %v2068
    %v2070 = vrot.slane %v2066, %v2069
    %v2072 = vsel %vm137, %v1986, 0
    %v2075 = vsel %vm137, %v2059, 0
    %2077 = vmatprep.subr.mxu0 0.0
    %2078 = vmatpush1.msra.mxu0 0.0
    %2079 = vmatprep.subr.mxu0 0.0
    %2080 = vmatpush1.msra.mxu0 0.0
    %2081 = vmatprep.subr.mxu0 0.0
    %2082 = vmatpush1.msra.mxu0 0.0
    %2083 = vmatprep.subr.mxu0 0.0
    %2084 = vmatpush1.msra.mxu0 0.0
    %2085 = vmatprep.subr.mxu0 0.0
    %2086 = vmatpush1.msra.mxu0 0.0
    %2087 = vmatprep.subr.mxu0 0.0
    %2088 = vmatpush1.msra.mxu0 0.0
    %2089 = vmatprep.subr.mxu0 0.0
    %2090 = vmatpush1.msra.mxu0 0.0
    %2091 = vmatprep.subr.mxu0 0.0
    %2092 = vmatpush1.msra.mxu0 0.0
    %2093 = vmatprep.subr.mxu0 0.0
    %2094 = vmatpush1.msra.mxu0 0.0
    %2095 = vmatprep.subr.mxu0 0.0
    %2096 = vmatpush1.msra.mxu0 0.0
    %2097 = vmatprep.subr.mxu0 0.0
    %2098 = vmatpush1.msra.mxu0 0.0
    %2099 = vmatprep.subr.mxu0 0.0
    %2100 = vmatpush1.msra.mxu0 0.0
    %2101 = vmatprep.subr.mxu0 0.0
    %2102 = vmatpush1.msra.mxu0 %v2065
    %2103 = vmatprep.subr.mxu0 0.0
    %2104 = vmatpush1.msra.mxu0 %v2064
    %2105 = vmatprep.subr.mxu0 0.0
    %2106 = vmatpush1.msra.mxu0 %v2063
    %2107 = vmatprep.subr.mxu0 0.0
    %2108 = vmatpush1.msra.mxu0 %v2062
    %2109 = vmatprep.subr.mxu0 0.0
    %2110 = vmatpush2.msra.mxu0 0.0
    %2111 = vmatprep.subr.mxu0 0.0
    %2112 = vmatpush2.msra.mxu0 0.0
    %2113 = vmatprep.subr.mxu0 0.0
    %2114 = vmatpush2.msra.mxu0 0.0
    %2115 = vmatprep.subr.mxu0 0.0
    %2116 = vmatpush2.msra.mxu0 0.0
    %2117 = vmatprep.subr.mxu0 0.0
    %2118 = vmatpush2.msra.mxu0 0.0
    %2119 = vmatprep.subr.mxu0 0.0
    %2120 = vmatpush2.msra.mxu0 0.0
    %2121 = vmatprep.subr.mxu0 0.0
    %2122 = vmatpush2.msra.mxu0 0.0
    %2123 = vmatprep.subr.mxu0 0.0
    %2124 = vmatpush2.msra.mxu0 0.0
    %2125 = vmatprep.subr.mxu0 0.0
    %2126 = vmatpush2.msra.mxu0 0.0
    %2127 = vmatprep.subr.mxu0 0.0
    %2128 = vmatpush2.msra.mxu0 0.0
    %2129 = vmatprep.subr.mxu0 0.0
    %2130 = vmatpush2.msra.mxu0 0.0
    %2131 = vmatprep.subr.mxu0 0.0
    %2132 = vmatpush2.msra.mxu0 0.0
    %2133 = vmatprep.subr.mxu0 0.0
    %2134 = vmatpush2.msra.mxu0 0.0
    %2135 = vmatprep.subr.mxu0 0.0
    %2136 = vmatpush2.msra.mxu0 0.0
    %2137 = vmatprep.subr.mxu0 0.0
    %2138 = vmatpush2.msra.mxu0 0.0
    %2139 = vmatprep.subr.mxu0 0.0
    %2140 = vmatpush2.msra.mxu0 0.0
    %2141 = vmatprep.mubr.f32.mxu0 0.0
    %2142 = vmatmul.mubr.f32.gmra.mxu0 %v2072
    %v2143 = vpop.f32.mrf.mxu0
    %v2144 = vadd.f32 %v2070, %v2143
    %v2145 = vpop.f32.mrf.mxu0
    %2146 = vmatprep.mubr.f32.mxu0 0.0
    %2147 = vmatmul.mubr.f32.gmra.mxu0 %v2075
    %v2148 = vpop.f32.mrf.mxu0
    %v2149 = vadd.f32 %v2070, %v2148
    %v2150 = vpop.f32.mrf.mxu0
    %2151 = vdwg.mxu0
    %v2152 = vld [vmem:[%s3 + $0x190] sm:$0xff]
    %v2153 = vld [vmem:[%s3 + $0x198] sm:$0xff]
    %v2154 = vld [vmem:[%s3 + $0x1a0] sm:$0xff]
    %v2155 = vld [vmem:[%s3 + $0x1a8] sm:$0xff]
    %v2156 = vld [vmem:[%s4 + $0xd] sm:$0x1]
    %v2157 = vlaneseq
    %v2158 = vshrl.u32 %v2157, 7
    %v2159 = vsub.s32 0, %v2158
    %v2160 = vrot.slane %v2156, %v2159
    %v2162 = vsel %vm137, %v2144, 0
    %v2165 = vsel %vm137, %v2149, 0
    %2167 = vmatprep.subr.mxu0 0.0
    %2168 = vmatpush1.msra.mxu0 0.0
    %2169 = vmatprep.subr.mxu0 0.0
    %2170 = vmatpush1.msra.mxu0 0.0
    %2171 = vmatprep.subr.mxu0 0.0
    %2172 = vmatpush1.msra.mxu0 0.0
    %2173 = vmatprep.subr.mxu0 0.0
    %2174 = vmatpush1.msra.mxu0 0.0
    %2175 = vmatprep.subr.mxu0 0.0
    %2176 = vmatpush1.msra.mxu0 0.0
    %2177 = vmatprep.subr.mxu0 0.0
    %2178 = vmatpush1.msra.mxu0 0.0
    %2179 = vmatprep.subr.mxu0 0.0
    %2180 = vmatpush1.msra.mxu0 0.0
    %2181 = vmatprep.subr.mxu0 0.0
    %2182 = vmatpush1.msra.mxu0 0.0
    %2183 = vmatprep.subr.mxu0 0.0
    %2184 = vmatpush1.msra.mxu0 0.0
    %2185 = vmatprep.subr.mxu0 0.0
    %2186 = vmatpush1.msra.mxu0 0.0
    %2187 = vmatprep.subr.mxu0 0.0
    %2188 = vmatpush1.msra.mxu0 0.0
    %2189 = vmatprep.subr.mxu0 0.0
    %2190 = vmatpush1.msra.mxu0 0.0
    %2191 = vmatprep.subr.mxu0 0.0
    %2192 = vmatpush1.msra.mxu0 %v2155
    %2193 = vmatprep.subr.mxu0 0.0
    %2194 = vmatpush1.msra.mxu0 %v2154
    %2195 = vmatprep.subr.mxu0 0.0
    %2196 = vmatpush1.msra.mxu0 %v2153
    %2197 = vmatprep.subr.mxu0 0.0
    %2198 = vmatpush1.msra.mxu0 %v2152
    %2199 = vmatprep.subr.mxu0 0.0
    %2200 = vmatpush2.msra.mxu0 0.0
    %2201 = vmatprep.subr.mxu0 0.0
    %2202 = vmatpush2.msra.mxu0 0.0
    %2203 = vmatprep.subr.mxu0 0.0
    %2204 = vmatpush2.msra.mxu0 0.0
    %2205 = vmatprep.subr.mxu0 0.0
    %2206 = vmatpush2.msra.mxu0 0.0
    %2207 = vmatprep.subr.mxu0 0.0
    %2208 = vmatpush2.msra.mxu0 0.0
    %2209 = vmatprep.subr.mxu0 0.0
    %2210 = vmatpush2.msra.mxu0 0.0
    %2211 = vmatprep.subr.mxu0 0.0
    %2212 = vmatpush2.msra.mxu0 0.0
    %2213 = vmatprep.subr.mxu0 0.0
    %2214 = vmatpush2.msra.mxu0 0.0
    %2215 = vmatprep.subr.mxu0 0.0
    %2216 = vmatpush2.msra.mxu0 0.0
    %2217 = vmatprep.subr.mxu0 0.0
    %2218 = vmatpush2.msra.mxu0 0.0
    %2219 = vmatprep.subr.mxu0 0.0
    %2220 = vmatpush2.msra.mxu0 0.0
    %2221 = vmatprep.subr.mxu0 0.0
    %2222 = vmatpush2.msra.mxu0 0.0
    %2223 = vmatprep.subr.mxu0 0.0
    %2224 = vmatpush2.msra.mxu0 0.0
    %2225 = vmatprep.subr.mxu0 0.0
    %2226 = vmatpush2.msra.mxu0 0.0
    %2227 = vmatprep.subr.mxu0 0.0
    %2228 = vmatpush2.msra.mxu0 0.0
    %2229 = vmatprep.subr.mxu0 0.0
    %2230 = vmatpush2.msra.mxu0 0.0
    %2231 = vmatprep.mubr.f32.mxu0 0.0
    %2232 = vmatmul.mubr.f32.gmra.mxu0 %v818
    %v2233 = vpop.f32.mrf.mxu0
    %v2234 = vadd.f32 %v2160, %v2233
    %v2235 = vpop.f32.mrf.mxu0
    %2236 = vmatprep.mubr.f32.mxu0 0.0
    %2237 = vmatmul.mubr.f32.gmra.mxu0 %v821
    %v2238 = vpop.f32.mrf.mxu0
    %v2239 = vadd.f32 %v2160, %v2238
    %v2240 = vpop.f32.mrf.mxu0
    %2241 = vmatprep.mubr.f32.mxu0 0.0
    %2242 = vmatmul.mubr.f32.gmra.mxu0 %v2162
    %v2243 = vpop.f32.mrf.mxu0
    %v2244 = vadd.f32 %v2160, %v2243
    %v2245 = vpop.f32.mrf.mxu0
    %2246 = vmatprep.mubr.f32.mxu0 0.0
    %2247 = vmatmul.mubr.f32.gmra.mxu0 %v2165
    %v2248 = vpop.f32.mrf.mxu0
    %v2249 = vadd.f32 %v2160, %v2248
    %v2250 = vpop.f32.mrf.mxu0
    %2251 = vdwg.mxu0
    %vm2252 = vcmp.gt.f32.partialorder %v2234, 0.0
    %vm2253 = vcmp.gt.f32.partialorder %v2239, 0.0
    %vm2254 = vcmp.gt.f32.partialorder %v2244, 0.0
    %vm2255 = vcmp.gt.f32.partialorder %v2249, 0.0
    %v2256 = vmul.f32 %v2234, 1.442695
    %v2257 = vpow.pop %v2256
    %v2258 = vmul.f32 %v2239, 1.442695
    %v2259 = vpow.pop %v2258
    %v2260 = vmul.f32 %v2244, 1.442695
    %v2261 = vpow.pop %v2260
    %v2262 = vmul.f32 %v2249, 1.442695
    %v2263 = vpow.pop %v2262
    %v2264 = vsub.f32 %v2257, 1.0
    %v2265 = vsub.f32 %v2259, 1.0
    %v2266 = vsub.f32 %v2261, 1.0
    %v2267 = vsub.f32 %v2263, 1.0
    %v2268 = vsel %vm2252, %v2234, %v2264
    %v2269 = vsel %vm2253, %v2239, %v2265
    %v2270 = vsel %vm2254, %v2244, %v2266
    %v2271 = vsel %vm2255, %v2249, %v2267
    %v2272 = vld [vmem:[%s3 + $0x1b0] sm:$0xff]
    %v2273 = vld [vmem:[%s3 + $0x1b8] sm:$0xff]
    %v2274 = vld [vmem:[%s3 + $0x1c0] sm:$0xff]
    %v2275 = vld [vmem:[%s3 + $0x1c8] sm:$0xff]
    %v2276 = vld [vmem:[%s4 + $0xe] sm:$0x1]
    %v2277 = vlaneseq
    %v2278 = vshrl.u32 %v2277, 7
    %v2279 = vsub.s32 0, %v2278
    %v2280 = vrot.slane %v2276, %v2279
    %v2282 = vsel %vm137, %v2268, 0
    %v2285 = vsel %vm137, %v2269, 0
    %v2288 = vsel %vm137, %v2270, 0
    %v2291 = vsel %vm137, %v2271, 0
    %2293 = vmatprep.subr.mxu0 0.0
    %2294 = vmatpush1.msra.mxu0 0.0
    %2295 = vmatprep.subr.mxu0 0.0
    %2296 = vmatpush1.msra.mxu0 0.0
    %2297 = vmatprep.subr.mxu0 0.0
    %2298 = vmatpush1.msra.mxu0 0.0
    %2299 = vmatprep.subr.mxu0 0.0
    %2300 = vmatpush1.msra.mxu0 0.0
    %2301 = vmatprep.subr.mxu0 0.0
    %2302 = vmatpush1.msra.mxu0 0.0
    %2303 = vmatprep.subr.mxu0 0.0
    %2304 = vmatpush1.msra.mxu0 0.0
    %2305 = vmatprep.subr.mxu0 0.0
    %2306 = vmatpush1.msra.mxu0 0.0
    %2307 = vmatprep.subr.mxu0 0.0
    %2308 = vmatpush1.msra.mxu0 0.0
    %2309 = vmatprep.subr.mxu0 0.0
    %2310 = vmatpush1.msra.mxu0 0.0
    %2311 = vmatprep.subr.mxu0 0.0
    %2312 = vmatpush1.msra.mxu0 0.0
    %2313 = vmatprep.subr.mxu0 0.0
    %2314 = vmatpush1.msra.mxu0 0.0
    %2315 = vmatprep.subr.mxu0 0.0
    %2316 = vmatpush1.msra.mxu0 0.0
    %2317 = vmatprep.subr.mxu0 0.0
    %2318 = vmatpush1.msra.mxu0 %v2275
    %2319 = vmatprep.subr.mxu0 0.0
    %2320 = vmatpush1.msra.mxu0 %v2274
    %2321 = vmatprep.subr.mxu0 0.0
    %2322 = vmatpush1.msra.mxu0 %v2273
    %2323 = vmatprep.subr.mxu0 0.0
    %2324 = vmatpush1.msra.mxu0 %v2272
    %2325 = vmatprep.subr.mxu0 0.0
    %2326 = vmatpush2.msra.mxu0 0.0
    %2327 = vmatprep.subr.mxu0 0.0
    %2328 = vmatpush2.msra.mxu0 0.0
    %2329 = vmatprep.subr.mxu0 0.0
    %2330 = vmatpush2.msra.mxu0 0.0
    %2331 = vmatprep.subr.mxu0 0.0
    %2332 = vmatpush2.msra.mxu0 0.0
    %2333 = vmatprep.subr.mxu0 0.0
    %2334 = vmatpush2.msra.mxu0 0.0
    %2335 = vmatprep.subr.mxu0 0.0
    %2336 = vmatpush2.msra.mxu0 0.0
    %2337 = vmatprep.subr.mxu0 0.0
    %2338 = vmatpush2.msra.mxu0 0.0
    %2339 = vmatprep.subr.mxu0 0.0
    %2340 = vmatpush2.msra.mxu0 0.0
    %2341 = vmatprep.subr.mxu0 0.0
    %2342 = vmatpush2.msra.mxu0 0.0
    %2343 = vmatprep.subr.mxu0 0.0
    %2344 = vmatpush2.msra.mxu0 0.0
    %2345 = vmatprep.subr.mxu0 0.0
    %2346 = vmatpush2.msra.mxu0 0.0
    %2347 = vmatprep.subr.mxu0 0.0
    %2348 = vmatpush2.msra.mxu0 0.0
    %2349 = vmatprep.subr.mxu0 0.0
    %2350 = vmatpush2.msra.mxu0 0.0
    %2351 = vmatprep.subr.mxu0 0.0
    %2352 = vmatpush2.msra.mxu0 0.0
    %2353 = vmatprep.subr.mxu0 0.0
    %2354 = vmatpush2.msra.mxu0 0.0
    %2355 = vmatprep.subr.mxu0 0.0
    %2356 = vmatpush2.msra.mxu0 0.0
    %2357 = vmatprep.mubr.f32.mxu0 0.0
    %2358 = vmatmul.mubr.f32.gmra.mxu0 %v2282
    %v2359 = vpop.f32.mrf.mxu0
    %v2360 = vadd.f32 %v2280, %v2359
    %v2361 = vpop.f32.mrf.mxu0
    %2362 = vmatprep.mubr.f32.mxu0 0.0
    %2363 = vmatmul.mubr.f32.gmra.mxu0 %v2285
    %v2364 = vpop.f32.mrf.mxu0
    %v2365 = vadd.f32 %v2280, %v2364
    %v2366 = vpop.f32.mrf.mxu0
    %2367 = vmatprep.mubr.f32.mxu0 0.0
    %2368 = vmatmul.mubr.f32.gmra.mxu0 %v2288
    %v2369 = vpop.f32.mrf.mxu0
    %v2370 = vadd.f32 %v2280, %v2369
    %v2371 = vpop.f32.mrf.mxu0
    %2372 = vmatprep.mubr.f32.mxu0 0.0
    %2373 = vmatmul.mubr.f32.gmra.mxu0 %v2291
    %v2374 = vpop.f32.mrf.mxu0
    %v2375 = vadd.f32 %v2280, %v2374
    %v2376 = vpop.f32.mrf.mxu0
    %2377 = vdwg.mxu0
    %v2378 = vmul.f32 %v2360, %v2360
    %v2379 = vmul.f32 %v2365, %v2365
    %v2380 = vmul.f32 %v2370, %v2370
    %v2381 = vmul.f32 %v2375, %v2375
    %v2382 = vsel %vm137, %v2378, 0.0
    %2383 = vadd.xlane.f32.xlu0 %v2382
    %v2384 = vpop.xlane.xlu0 %2383
    %v2385 = vsel %vm137, %v2379, 0.0
    %2386 = vadd.xlane.f32.xlu0 %v2385
    %v2387 = vpop.xlane.xlu0 %2386
    %v2388 = vsel %vm137, %v2380, 0.0
    %2389 = vadd.xlane.f32.xlu0 %v2388
    %v2390 = vpop.xlane.xlu0 %2389
    %v2391 = vsel %vm137, %v2381, 0.0
    %2392 = vadd.xlane.f32.xlu0 %v2391
    %v2393 = vpop.xlane.xlu0 %2392
    %v2394 = vmax.f32 %v2384, 1e-24
    %v2395 = vmax.f32 %v2387, 1e-24
    %v2396 = vmax.f32 %v2390, 1e-24
    %v2397 = vmax.f32 %v2393, 1e-24
    %v2398 = vrsqrt.pop %v2394
    %v2399 = vrsqrt.pop %v2395
    %v2400 = vrsqrt.pop %v2396
    %v2401 = vrsqrt.pop %v2397
    %v2402 = vmul.f32 %v2360, %v2398
    %v2403 = vmul.f32 %v2365, %v2399
    %v2404 = vmul.f32 %v2370, %v2400
    %v2405 = vmul.f32 %v2375, %v2401
    %v2407 = vsel %vm137, %v2402, 0
    %2409 = vmatprep.subr.mxu0 0.0
    %2410 = vmatpush1.xpose.msra.mxu0 0.0
    %2411 = vmatprep.subr.mxu0 0.0
    %2412 = vmatpush1.xpose.msra.mxu0 0.0
    %2413 = vmatprep.subr.mxu0 0.0
    %2414 = vmatpush1.xpose.msra.mxu0 0.0
    %2415 = vmatprep.subr.mxu0 0.0
    %2416 = vmatpush1.xpose.msra.mxu0 0.0
    %2417 = vmatprep.subr.mxu0 0.0
    %2418 = vmatpush1.xpose.msra.mxu0 0.0
    %2419 = vmatprep.subr.mxu0 0.0
    %2420 = vmatpush1.xpose.msra.mxu0 0.0
    %2421 = vmatprep.subr.mxu0 0.0
    %2422 = vmatpush1.xpose.msra.mxu0 0.0
    %2423 = vmatprep.subr.mxu0 0.0
    %2424 = vmatpush1.xpose.msra.mxu0 0.0
    %2425 = vmatprep.subr.mxu0 0.0
    %2426 = vmatpush1.xpose.msra.mxu0 0.0
    %2427 = vmatprep.subr.mxu0 0.0
    %2428 = vmatpush1.xpose.msra.mxu0 0.0
    %2429 = vmatprep.subr.mxu0 0.0
    %2430 = vmatpush1.xpose.msra.mxu0 0.0
    %2431 = vmatprep.subr.mxu0 0.0
    %2432 = vmatpush1.xpose.msra.mxu0 0.0
    %2433 = vmatprep.subr.mxu0 0.0
    %2434 = vmatpush1.xpose.msra.mxu0 0.0
    %2435 = vmatprep.subr.mxu0 0.0
    %2436 = vmatpush1.xpose.msra.mxu0 0.0
    %2437 = vmatprep.subr.mxu0 0.0
    %2438 = vmatpush1.xpose.msra.mxu0 0.0
    %2439 = vmatprep.subr.mxu0 0.0
    %2440 = vmatpush1.xpose.msra.mxu0 %v2407
    %2441 = vmatprep.subr.mxu0 0.0
    %2442 = vmatpush2.xpose.msra.mxu0 0.0
    %2443 = vmatprep.subr.mxu0 0.0
    %2444 = vmatpush2.xpose.msra.mxu0 0.0
    %2445 = vmatprep.subr.mxu0 0.0
    %2446 = vmatpush2.xpose.msra.mxu0 0.0
    %2447 = vmatprep.subr.mxu0 0.0
    %2448 = vmatpush2.xpose.msra.mxu0 0.0
    %2449 = vmatprep.subr.mxu0 0.0
    %2450 = vmatpush2.xpose.msra.mxu0 0.0
    %2451 = vmatprep.subr.mxu0 0.0
    %2452 = vmatpush2.xpose.msra.mxu0 0.0
    %2453 = vmatprep.subr.mxu0 0.0
    %2454 = vmatpush2.xpose.msra.mxu0 0.0
    %2455 = vmatprep.subr.mxu0 0.0
    %2456 = vmatpush2.xpose.msra.mxu0 0.0
    %2457 = vmatprep.subr.mxu0 0.0
    %2458 = vmatpush2.xpose.msra.mxu0 0.0
    %2459 = vmatprep.subr.mxu0 0.0
    %2460 = vmatpush2.xpose.msra.mxu0 0.0
    %2461 = vmatprep.subr.mxu0 0.0
    %2462 = vmatpush2.xpose.msra.mxu0 0.0
    %2463 = vmatprep.subr.mxu0 0.0
    %2464 = vmatpush2.xpose.msra.mxu0 0.0
    %2465 = vmatprep.subr.mxu0 0.0
    %2466 = vmatpush2.xpose.msra.mxu0 0.0
    %2467 = vmatprep.subr.mxu0 0.0
    %2468 = vmatpush2.xpose.msra.mxu0 0.0
    %2469 = vmatprep.subr.mxu0 0.0
    %2470 = vmatpush2.xpose.msra.mxu0 0.0
    %2471 = vmatprep.subr.mxu0 0.0
    %2472 = vmatpush2.xpose.msra.mxu0 0.0
    %2473 = vmatprep.mubr.f32.mxu0 0.0
    %2474 = vmatmul.mubr.f32.gmra.mxu0 %v2407
    %v2475 = vpop.f32.mrf.mxu0
    %v2476 = vadd.f32 0.0, %v2475
    %v2477 = vpop.f32.mrf.mxu0
    %2478 = vdwg.mxu0
    %v2480 = vsel %vm137, %v2403, 0
    %2482 = vmatprep.subr.mxu0 0.0
    %2483 = vmatpush1.xpose.msra.mxu0 0.0
    %2484 = vmatprep.subr.mxu0 0.0
    %2485 = vmatpush1.xpose.msra.mxu0 0.0
    %2486 = vmatprep.subr.mxu0 0.0
    %2487 = vmatpush1.xpose.msra.mxu0 0.0
    %2488 = vmatprep.subr.mxu0 0.0
    %2489 = vmatpush1.xpose.msra.mxu0 0.0
    %2490 = vmatprep.subr.mxu0 0.0
    %2491 = vmatpush1.xpose.msra.mxu0 0.0
    %2492 = vmatprep.subr.mxu0 0.0
    %2493 = vmatpush1.xpose.msra.mxu0 0.0
    %2494 = vmatprep.subr.mxu0 0.0
    %2495 = vmatpush1.xpose.msra.mxu0 0.0
    %2496 = vmatprep.subr.mxu0 0.0
    %2497 = vmatpush1.xpose.msra.mxu0 0.0
    %2498 = vmatprep.subr.mxu0 0.0
    %2499 = vmatpush1.xpose.msra.mxu0 0.0
    %2500 = vmatprep.subr.mxu0 0.0
    %2501 = vmatpush1.xpose.msra.mxu0 0.0
    %2502 = vmatprep.subr.mxu0 0.0
    %2503 = vmatpush1.xpose.msra.mxu0 0.0
    %2504 = vmatprep.subr.mxu0 0.0
    %2505 = vmatpush1.xpose.msra.mxu0 0.0
    %2506 = vmatprep.subr.mxu0 0.0
    %2507 = vmatpush1.xpose.msra.mxu0 0.0
    %2508 = vmatprep.subr.mxu0 0.0
    %2509 = vmatpush1.xpose.msra.mxu0 0.0
    %2510 = vmatprep.subr.mxu0 0.0
    %2511 = vmatpush1.xpose.msra.mxu0 0.0
    %2512 = vmatprep.subr.mxu0 0.0
    %2513 = vmatpush1.xpose.msra.mxu0 %v2480
    %2514 = vmatprep.subr.mxu0 0.0
    %2515 = vmatpush2.xpose.msra.mxu0 0.0
    %2516 = vmatprep.subr.mxu0 0.0
    %2517 = vmatpush2.xpose.msra.mxu0 0.0
    %2518 = vmatprep.subr.mxu0 0.0
    %2519 = vmatpush2.xpose.msra.mxu0 0.0
    %2520 = vmatprep.subr.mxu0 0.0
    %2521 = vmatpush2.xpose.msra.mxu0 0.0
    %2522 = vmatprep.subr.mxu0 0.0
    %2523 = vmatpush2.xpose.msra.mxu0 0.0
    %2524 = vmatprep.subr.mxu0 0.0
    %2525 = vmatpush2.xpose.msra.mxu0 0.0
    %2526 = vmatprep.subr.mxu0 0.0
    %2527 = vmatpush2.xpose.msra.mxu0 0.0
    %2528 = vmatprep.subr.mxu0 0.0
    %2529 = vmatpush2.xpose.msra.mxu0 0.0
    %2530 = vmatprep.subr.mxu0 0.0
    %2531 = vmatpush2.xpose.msra.mxu0 0.0
    %2532 = vmatprep.subr.mxu0 0.0
    %2533 = vmatpush2.xpose.msra.mxu0 0.0
    %2534 = vmatprep.subr.mxu0 0.0
    %2535 = vmatpush2.xpose.msra.mxu0 0.0
    %2536 = vmatprep.subr.mxu0 0.0
    %2537 = vmatpush2.xpose.msra.mxu0 0.0
    %2538 = vmatprep.subr.mxu0 0.0
    %2539 = vmatpush2.xpose.msra.mxu0 0.0
    %2540 = vmatprep.subr.mxu0 0.0
    %2541 = vmatpush2.xpose.msra.mxu0 0.0
    %2542 = vmatprep.subr.mxu0 0.0
    %2543 = vmatpush2.xpose.msra.mxu0 0.0
    %2544 = vmatprep.subr.mxu0 0.0
    %2545 = vmatpush2.xpose.msra.mxu0 0.0
    %2546 = vmatprep.mubr.f32.mxu0 0.0
    %2547 = vmatmul.mubr.f32.gmra.mxu0 %v2480
    %v2548 = vpop.f32.mrf.mxu0
    %v2549 = vadd.f32 0.0, %v2548
    %v2550 = vpop.f32.mrf.mxu0
    %2551 = vdwg.mxu0
    %v2552 = vmul.f32 %v2476, 2.0
    %v2553 = vmul.f32 %v2549, 2.0
    %v2554 = vmul.f32 %v2552, 1.442695
    %v2555 = vpow.pop %v2554
    %v2556 = vmul.f32 %v2553, 1.442695
    %v2557 = vpow.pop %v2556
    %v2559 = vsel %vm137, %v2404, 0
    %2561 = vmatprep.subr.mxu0 0.0
    %2562 = vmatpush1.xpose.msra.mxu0 0.0
    %2563 = vmatprep.subr.mxu0 0.0
    %2564 = vmatpush1.xpose.msra.mxu0 0.0
    %2565 = vmatprep.subr.mxu0 0.0
    %2566 = vmatpush1.xpose.msra.mxu0 0.0
    %2567 = vmatprep.subr.mxu0 0.0
    %2568 = vmatpush1.xpose.msra.mxu0 0.0
    %2569 = vmatprep.subr.mxu0 0.0
    %2570 = vmatpush1.xpose.msra.mxu0 0.0
    %2571 = vmatprep.subr.mxu0 0.0
    %2572 = vmatpush1.xpose.msra.mxu0 0.0
    %2573 = vmatprep.subr.mxu0 0.0
    %2574 = vmatpush1.xpose.msra.mxu0 0.0
    %2575 = vmatprep.subr.mxu0 0.0
    %2576 = vmatpush1.xpose.msra.mxu0 0.0
    %2577 = vmatprep.subr.mxu0 0.0
    %2578 = vmatpush1.xpose.msra.mxu0 0.0
    %2579 = vmatprep.subr.mxu0 0.0
    %2580 = vmatpush1.xpose.msra.mxu0 0.0
    %2581 = vmatprep.subr.mxu0 0.0
    %2582 = vmatpush1.xpose.msra.mxu0 0.0
    %2583 = vmatprep.subr.mxu0 0.0
    %2584 = vmatpush1.xpose.msra.mxu0 0.0
    %2585 = vmatprep.subr.mxu0 0.0
    %2586 = vmatpush1.xpose.msra.mxu0 0.0
    %2587 = vmatprep.subr.mxu0 0.0
    %2588 = vmatpush1.xpose.msra.mxu0 0.0
    %2589 = vmatprep.subr.mxu0 0.0
    %2590 = vmatpush1.xpose.msra.mxu0 0.0
    %2591 = vmatprep.subr.mxu0 0.0
    %2592 = vmatpush1.xpose.msra.mxu0 %v2559
    %2593 = vmatprep.subr.mxu0 0.0
    %2594 = vmatpush2.xpose.msra.mxu0 0.0
    %2595 = vmatprep.subr.mxu0 0.0
    %2596 = vmatpush2.xpose.msra.mxu0 0.0
    %2597 = vmatprep.subr.mxu0 0.0
    %2598 = vmatpush2.xpose.msra.mxu0 0.0
    %2599 = vmatprep.subr.mxu0 0.0
    %2600 = vmatpush2.xpose.msra.mxu0 0.0
    %2601 = vmatprep.subr.mxu0 0.0
    %2602 = vmatpush2.xpose.msra.mxu0 0.0
    %2603 = vmatprep.subr.mxu0 0.0
    %2604 = vmatpush2.xpose.msra.mxu0 0.0
    %2605 = vmatprep.subr.mxu0 0.0
    %2606 = vmatpush2.xpose.msra.mxu0 0.0
    %2607 = vmatprep.subr.mxu0 0.0
    %2608 = vmatpush2.xpose.msra.mxu0 0.0
    %2609 = vmatprep.subr.mxu0 0.0
    %2610 = vmatpush2.xpose.msra.mxu0 0.0
    %2611 = vmatprep.subr.mxu0 0.0
    %2612 = vmatpush2.xpose.msra.mxu0 0.0
    %2613 = vmatprep.subr.mxu0 0.0
    %2614 = vmatpush2.xpose.msra.mxu0 0.0
    %2615 = vmatprep.subr.mxu0 0.0
    %2616 = vmatpush2.xpose.msra.mxu0 0.0
    %2617 = vmatprep.subr.mxu0 0.0
    %2618 = vmatpush2.xpose.msra.mxu0 0.0
    %2619 = vmatprep.subr.mxu0 0.0
    %2620 = vmatpush2.xpose.msra.mxu0 0.0
    %2621 = vmatprep.subr.mxu0 0.0
    %2622 = vmatpush2.xpose.msra.mxu0 0.0
    %2623 = vmatprep.subr.mxu0 0.0
    %2624 = vmatpush2.xpose.msra.mxu0 0.0
    %2625 = vmatprep.mubr.f32.mxu0 0.0
    %2626 = vmatmul.mubr.f32.gmra.mxu0 %v2559
    %v2627 = vpop.f32.mrf.mxu0
    %v2628 = vadd.f32 0.0, %v2627
    %v2629 = vpop.f32.mrf.mxu0
    %2630 = vdwg.mxu0
    %v2632 = vsel %vm137, %v2405, 0
    %2634 = vmatprep.subr.mxu0 0.0
    %2635 = vmatpush1.xpose.msra.mxu0 0.0
    %2636 = vmatprep.subr.mxu0 0.0
    %2637 = vmatpush1.xpose.msra.mxu0 0.0
    %2638 = vmatprep.subr.mxu0 0.0
    %2639 = vmatpush1.xpose.msra.mxu0 0.0
    %2640 = vmatprep.subr.mxu0 0.0
    %2641 = vmatpush1.xpose.msra.mxu0 0.0
    %2642 = vmatprep.subr.mxu0 0.0
    %2643 = vmatpush1.xpose.msra.mxu0 0.0
    %2644 = vmatprep.subr.mxu0 0.0
    %2645 = vmatpush1.xpose.msra.mxu0 0.0
    %2646 = vmatprep.subr.mxu0 0.0
    %2647 = vmatpush1.xpose.msra.mxu0 0.0
    %2648 = vmatprep.subr.mxu0 0.0
    %2649 = vmatpush1.xpose.msra.mxu0 0.0
    %2650 = vmatprep.subr.mxu0 0.0
    %2651 = vmatpush1.xpose.msra.mxu0 0.0
    %2652 = vmatprep.subr.mxu0 0.0
    %2653 = vmatpush1.xpose.msra.mxu0 0.0
    %2654 = vmatprep.subr.mxu0 0.0
    %2655 = vmatpush1.xpose.msra.mxu0 0.0
    %2656 = vmatprep.subr.mxu0 0.0
    %2657 = vmatpush1.xpose.msra.mxu0 0.0
    %2658 = vmatprep.subr.mxu0 0.0
    %2659 = vmatpush1.xpose.msra.mxu0 0.0
    %2660 = vmatprep.subr.mxu0 0.0
    %2661 = vmatpush1.xpose.msra.mxu0 0.0
    %2662 = vmatprep.subr.mxu0 0.0
    %2663 = vmatpush1.xpose.msra.mxu0 0.0
    %2664 = vmatprep.subr.mxu0 0.0
    %2665 = vmatpush1.xpose.msra.mxu0 %v2632
    %2666 = vmatprep.subr.mxu0 0.0
    %2667 = vmatpush2.xpose.msra.mxu0 0.0
    %2668 = vmatprep.subr.mxu0 0.0
    %2669 = vmatpush2.xpose.msra.mxu0 0.0
    %2670 = vmatprep.subr.mxu0 0.0
    %2671 = vmatpush2.xpose.msra.mxu0 0.0
    %2672 = vmatprep.subr.mxu0 0.0
    %2673 = vmatpush2.xpose.msra.mxu0 0.0
    %2674 = vmatprep.subr.mxu0 0.0
    %2675 = vmatpush2.xpose.msra.mxu0 0.0
    %2676 = vmatprep.subr.mxu0 0.0
    %2677 = vmatpush2.xpose.msra.mxu0 0.0
    %2678 = vmatprep.subr.mxu0 0.0
    %2679 = vmatpush2.xpose.msra.mxu0 0.0
    %2680 = vmatprep.subr.mxu0 0.0
    %2681 = vmatpush2.xpose.msra.mxu0 0.0
    %2682 = vmatprep.subr.mxu0 0.0
    %2683 = vmatpush2.xpose.msra.mxu0 0.0
    %2684 = vmatprep.subr.mxu0 0.0
    %2685 = vmatpush2.xpose.msra.mxu0 0.0
    %2686 = vmatprep.subr.mxu0 0.0
    %2687 = vmatpush2.xpose.msra.mxu0 0.0
    %2688 = vmatprep.subr.mxu0 0.0
    %2689 = vmatpush2.xpose.msra.mxu0 0.0
    %2690 = vmatprep.subr.mxu0 0.0
    %2691 = vmatpush2.xpose.msra.mxu0 0.0
    %2692 = vmatprep.subr.mxu0 0.0
    %2693 = vmatpush2.xpose.msra.mxu0 0.0
    %2694 = vmatprep.subr.mxu0 0.0
    %2695 = vmatpush2.xpose.msra.mxu0 0.0
    %2696 = vmatprep.subr.mxu0 0.0
    %2697 = vmatpush2.xpose.msra.mxu0 0.0
    %2698 = vmatprep.mubr.f32.mxu0 0.0
    %2699 = vmatmul.mubr.f32.gmra.mxu0 %v2632
    %v2700 = vpop.f32.mrf.mxu0
    %v2701 = vadd.f32 0.0, %v2700
    %v2702 = vpop.f32.mrf.mxu0
    %2703 = vdwg.mxu0
    %v2704 = vmul.f32 %v2628, 2.0
    %v2705 = vmul.f32 %v2701, 2.0
    %v2706 = vmul.f32 %v2704, 1.442695
    %v2707 = vpow.pop %v2706
    %v2708 = vmul.f32 %v2705, 1.442695
    %v2709 = vpow.pop %v2708
    %2710 = vmatprep.subr.mxu0 0.0
    %2711 = vmatpush1.xpose.msra.mxu0 0.0
    %2712 = vmatprep.subr.mxu0 0.0
    %2713 = vmatpush1.xpose.msra.mxu0 0.0
    %2714 = vmatprep.subr.mxu0 0.0
    %2715 = vmatpush1.xpose.msra.mxu0 0.0
    %2716 = vmatprep.subr.mxu0 0.0
    %2717 = vmatpush1.xpose.msra.mxu0 0.0
    %2718 = vmatprep.subr.mxu0 0.0
    %2719 = vmatpush1.xpose.msra.mxu0 0.0
    %2720 = vmatprep.subr.mxu0 0.0
    %2721 = vmatpush1.xpose.msra.mxu0 0.0
    %2722 = vmatprep.subr.mxu0 0.0
    %2723 = vmatpush1.xpose.msra.mxu0 0.0
    %2724 = vmatprep.subr.mxu0 0.0
    %2725 = vmatpush1.xpose.msra.mxu0 0.0
    %2726 = vmatprep.subr.mxu0 0.0
    %2727 = vmatpush1.xpose.msra.mxu0 0.0
    %2728 = vmatprep.subr.mxu0 0.0
    %2729 = vmatpush1.xpose.msra.mxu0 0.0
    %2730 = vmatprep.subr.mxu0 0.0
    %2731 = vmatpush1.xpose.msra.mxu0 0.0
    %2732 = vmatprep.subr.mxu0 0.0
    %2733 = vmatpush1.xpose.msra.mxu0 0.0
    %2734 = vmatprep.subr.mxu0 0.0
    %2735 = vmatpush1.xpose.msra.mxu0 0.0
    %2736 = vmatprep.subr.mxu0 0.0
    %2737 = vmatpush1.xpose.msra.mxu0 0.0
    %2738 = vmatprep.subr.mxu0 0.0
    %2739 = vmatpush1.xpose.msra.mxu0 0.0
    %2740 = vmatprep.subr.mxu0 0.0
    %2741 = vmatpush1.xpose.msra.mxu0 %v2559
    %2742 = vmatprep.subr.mxu0 0.0
    %2743 = vmatpush2.xpose.msra.mxu0 0.0
    %2744 = vmatprep.subr.mxu0 0.0
    %2745 = vmatpush2.xpose.msra.mxu0 0.0
    %2746 = vmatprep.subr.mxu0 0.0
    %2747 = vmatpush2.xpose.msra.mxu0 0.0
    %2748 = vmatprep.subr.mxu0 0.0
    %2749 = vmatpush2.xpose.msra.mxu0 0.0
    %2750 = vmatprep.subr.mxu0 0.0
    %2751 = vmatpush2.xpose.msra.mxu0 0.0
    %2752 = vmatprep.subr.mxu0 0.0
    %2753 = vmatpush2.xpose.msra.mxu0 0.0
    %2754 = vmatprep.subr.mxu0 0.0
    %2755 = vmatpush2.xpose.msra.mxu0 0.0
    %2756 = vmatprep.subr.mxu0 0.0
    %2757 = vmatpush2.xpose.msra.mxu0 0.0
    %2758 = vmatprep.subr.mxu0 0.0
    %2759 = vmatpush2.xpose.msra.mxu0 0.0
    %2760 = vmatprep.subr.mxu0 0.0
    %2761 = vmatpush2.xpose.msra.mxu0 0.0
    %2762 = vmatprep.subr.mxu0 0.0
    %2763 = vmatpush2.xpose.msra.mxu0 0.0
    %2764 = vmatprep.subr.mxu0 0.0
    %2765 = vmatpush2.xpose.msra.mxu0 0.0
    %2766 = vmatprep.subr.mxu0 0.0
    %2767 = vmatpush2.xpose.msra.mxu0 0.0
    %2768 = vmatprep.subr.mxu0 0.0
    %2769 = vmatpush2.xpose.msra.mxu0 0.0
    %2770 = vmatprep.subr.mxu0 0.0
    %2771 = vmatpush2.xpose.msra.mxu0 0.0
    %2772 = vmatprep.subr.mxu0 0.0
    %2773 = vmatpush2.xpose.msra.mxu0 0.0
    %2774 = vmatprep.mubr.f32.mxu0 0.0
    %2775 = vmatmul.mubr.f32.gmra.mxu0 %v2407
    %v2776 = vpop.f32.mrf.mxu0
    %v2777 = vadd.f32 0.0, %v2776
    %v2778 = vpop.f32.mrf.mxu0
    %2779 = vdwg.mxu0
    %2780 = vmatprep.subr.mxu0 0.0
    %2781 = vmatpush1.xpose.msra.mxu0 0.0
    %2782 = vmatprep.subr.mxu0 0.0
    %2783 = vmatpush1.xpose.msra.mxu0 0.0
    %2784 = vmatprep.subr.mxu0 0.0
    %2785 = vmatpush1.xpose.msra.mxu0 0.0
    %2786 = vmatprep.subr.mxu0 0.0
    %2787 = vmatpush1.xpose.msra.mxu0 0.0
    %2788 = vmatprep.subr.mxu0 0.0
    %2789 = vmatpush1.xpose.msra.mxu0 0.0
    %2790 = vmatprep.subr.mxu0 0.0
    %2791 = vmatpush1.xpose.msra.mxu0 0.0
    %2792 = vmatprep.subr.mxu0 0.0
    %2793 = vmatpush1.xpose.msra.mxu0 0.0
    %2794 = vmatprep.subr.mxu0 0.0
    %2795 = vmatpush1.xpose.msra.mxu0 0.0
    %2796 = vmatprep.subr.mxu0 0.0
    %2797 = vmatpush1.xpose.msra.mxu0 0.0
    %2798 = vmatprep.subr.mxu0 0.0
    %2799 = vmatpush1.xpose.msra.mxu0 0.0
    %2800 = vmatprep.subr.mxu0 0.0
    %2801 = vmatpush1.xpose.msra.mxu0 0.0
    %2802 = vmatprep.subr.mxu0 0.0
    %2803 = vmatpush1.xpose.msra.mxu0 0.0
    %2804 = vmatprep.subr.mxu0 0.0
    %2805 = vmatpush1.xpose.msra.mxu0 0.0
    %2806 = vmatprep.subr.mxu0 0.0
    %2807 = vmatpush1.xpose.msra.mxu0 0.0
    %2808 = vmatprep.subr.mxu0 0.0
    %2809 = vmatpush1.xpose.msra.mxu0 0.0
    %2810 = vmatprep.subr.mxu0 0.0
    %2811 = vmatpush1.xpose.msra.mxu0 %v2632
    %2812 = vmatprep.subr.mxu0 0.0
    %2813 = vmatpush2.xpose.msra.mxu0 0.0
    %2814 = vmatprep.subr.mxu0 0.0
    %2815 = vmatpush2.xpose.msra.mxu0 0.0
    %2816 = vmatprep.subr.mxu0 0.0
    %2817 = vmatpush2.xpose.msra.mxu0 0.0
    %2818 = vmatprep.subr.mxu0 0.0
    %2819 = vmatpush2.xpose.msra.mxu0 0.0
    %2820 = vmatprep.subr.mxu0 0.0
    %2821 = vmatpush2.xpose.msra.mxu0 0.0
    %2822 = vmatprep.subr.mxu0 0.0
    %2823 = vmatpush2.xpose.msra.mxu0 0.0
    %2824 = vmatprep.subr.mxu0 0.0
    %2825 = vmatpush2.xpose.msra.mxu0 0.0
    %2826 = vmatprep.subr.mxu0 0.0
    %2827 = vmatpush2.xpose.msra.mxu0 0.0
    %2828 = vmatprep.subr.mxu0 0.0
    %2829 = vmatpush2.xpose.msra.mxu0 0.0
    %2830 = vmatprep.subr.mxu0 0.0
    %2831 = vmatpush2.xpose.msra.mxu0 0.0
    %2832 = vmatprep.subr.mxu0 0.0
    %2833 = vmatpush2.xpose.msra.mxu0 0.0
    %2834 = vmatprep.subr.mxu0 0.0
    %2835 = vmatpush2.xpose.msra.mxu0 0.0
    %2836 = vmatprep.subr.mxu0 0.0
    %2837 = vmatpush2.xpose.msra.mxu0 0.0
    %2838 = vmatprep.subr.mxu0 0.0
    %2839 = vmatpush2.xpose.msra.mxu0 0.0
    %2840 = vmatprep.subr.mxu0 0.0
    %2841 = vmatpush2.xpose.msra.mxu0 0.0
    %2842 = vmatprep.subr.mxu0 0.0
    %2843 = vmatpush2.xpose.msra.mxu0 0.0
    %2844 = vmatprep.mubr.f32.mxu0 0.0
    %2845 = vmatmul.mubr.f32.gmra.mxu0 %v2480
    %v2846 = vpop.f32.mrf.mxu0
    %v2847 = vadd.f32 0.0, %v2846
    %v2848 = vpop.f32.mrf.mxu0
    %2849 = vdwg.mxu0
    %v2850 = vmul.f32 %v2777, 2.0
    %v2851 = vmul.f32 %v2847, 2.0
    %v2852 = vmul.f32 %v2850, 1.442695
    %v2853 = vpow.pop %v2852
    %v2854 = vmul.f32 %v2851, 1.442695
    %v2855 = vpow.pop %v2854
    %v2856 = vmul.f32 %v2402, %v2402
    %v2857 = vmul.f32 %v2403, %v2403
    %v2858 = vsel %vm137, %v2856, 0.0
    %2859 = vadd.xlane.f32.xlu0 %v2858
    %v2860 = vpop.xlane.xlu0 %2859
    %v2861 = vsel %vm137, %v2857, 0.0
    %2862 = vadd.xlane.f32.xlu0 %v2861
    %v2863 = vpop.xlane.xlu0 %2862
    %v2864 = vmul.f32 %v2860, 2.0
    %v2865 = vmul.f32 %v2863, 2.0
    %v2866 = vmul.f32 %v2864, 1.442695
    %v2867 = vpow.pop %v2866
    %v2868 = vmul.f32 %v2865, 1.442695
    %v2869 = vpow.pop %v2868
    %v2870 = vmul.f32 %v2404, %v2404
    %v2871 = vmul.f32 %v2405, %v2405
    %v2872 = vsel %vm137, %v2870, 0.0
    %2873 = vadd.xlane.f32.xlu0 %v2872
    %v2874 = vpop.xlane.xlu0 %2873
    %v2875 = vsel %vm137, %v2871, 0.0
    %2876 = vadd.xlane.f32.xlu0 %v2875
    %v2877 = vpop.xlane.xlu0 %2876
    %v2878 = vmul.f32 %v2874, 2.0
    %v2879 = vmul.f32 %v2877, 2.0
    %v2880 = vmul.f32 %v2878, 1.442695
    %v2881 = vpow.pop %v2880
    %v2882 = vmul.f32 %v2879, 1.442695
    %v2883 = vpow.pop %v2882
    %v2884 = vmul.f32 %v2402, %v2404
    %v2885 = vmul.f32 %v2403, %v2405
    %v2886 = vsel %vm137, %v2884, 0.0
    %2887 = vadd.xlane.f32.xlu0 %v2886
    %v2888 = vpop.xlane.xlu0 %2887
    %v2889 = vsel %vm137, %v2885, 0.0
    %2890 = vadd.xlane.f32.xlu0 %v2889
    %v2891 = vpop.xlane.xlu0 %2890
    %v2892 = vmul.f32 %v2888, 2.0
    %v2893 = vmul.f32 %v2891, 2.0
    %v2894 = vsel %vm549, %v2555, 0.0
    %2895 = vadd.xlane.f32.xlu0 %v2894
    %v2896 = vpop.xlane.xlu0 %2895
    %v2897 = vsel %vm549, %v2557, 0.0
    %2898 = vadd.xlane.f32.xlu0 %v2897
    %v2899 = vpop.xlane.xlu0 %2898
    %v2900 = vsel %vm549, %v2853, 0.0
    %2901 = vadd.xlane.f32.xlu0 %v2900
    %v2902 = vpop.xlane.xlu0 %2901
    %v2903 = vsel %vm549, %v2855, 0.0
    %2904 = vadd.xlane.f32.xlu0 %v2903
    %v2905 = vpop.xlane.xlu0 %2904
    %v2906 = vadd.f32 %v2896, %v2902
    %v2907 = vadd.f32 %v2899, %v2905
    %v2908 = vsub.f32 %v2906, %v2867
    %v2909 = vsub.f32 %v2907, %v2869
    %v2910 = vsel %vm549, %v2707, 0.0
    %2911 = vadd.xlane.f32.xlu0 %v2910
    %v2912 = vpop.xlane.xlu0 %2911
    %v2913 = vsel %vm549, %v2709, 0.0
    %2914 = vadd.xlane.f32.xlu0 %v2913
    %v2915 = vpop.xlane.xlu0 %2914
    %v2916 = vrot.slane %v2900, 4
    %v2917 = vadd.f32 %v2900, %v2916
    %v2918 = vrot.slane %v2917, 2
    %v2919 = vadd.f32 %v2917, %v2918
    %v2920 = vrot.slane %v2919, 1
    %v2921 = vadd.f32 %v2919, %v2920
    %v2922 = vrot.slane %v2903, 4
    %v2923 = vadd.f32 %v2903, %v2922
    %v2924 = vrot.slane %v2923, 2
    %v2925 = vadd.f32 %v2923, %v2924
    %v2926 = vrot.slane %v2925, 1
    %v2927 = vadd.f32 %v2925, %v2926
    %2931 = vbcast.lane.b32.xlu0 %v2921, 256
    %v2932 = vpop.permute.xlu0 %2931
    %2934 = vbcast.lane.b32.xlu0 %v2927, 256
    %v2935 = vpop.permute.xlu0 %2934
    %v2938 = vadd.f32 %v2912, %v2932
    %v2939 = vadd.f32 %v2915, %v2935
    %v2940 = vsub.f32 %v2938, %v2881
    %v2941 = vsub.f32 %v2939, %v2883
    %v2942 = vlog2.pop %v2908
    %v2943 = vmul.f32 %v2942, 0.6931472
    %v2944 = vlog2.pop %v2909
    %v2945 = vmul.f32 %v2944, 0.6931472
    %v2946 = vsub.f32 %v2943, %v2892
    %v2947 = vsub.f32 %v2945, %v2893
    %v2948 = vlog2.pop %v2940
    %v2949 = vmul.f32 %v2948, 0.6931472
    %v2950 = vlog2.pop %v2941
    %v2951 = vmul.f32 %v2950, 0.6931472
    %v2952 = vsub.f32 %v2949, %v2892
    %v2953 = vsub.f32 %v2951, %v2893
    %v2956 = vlaneseq
    %v2957 = vand.u32 %v2956, 127
    %v2958 = vlaneseq
    %v2959 = vshrl.u32 %v2958, 7
    %v2960 = vsub.s32 %v2957, %v2959
    %v2961 = vrot.slane %v2946, %v2960
    %v2962 = vlaneseq
    %v2963 = vshrl.u32 %v2962, 7
    %v2964 = vsub.s32 %v2957, %v2963
    %v2965 = vrot.slane %v2947, %v2964
    %vm2966 = vcmask 1041409
    %v2967 = vsel %vm2966, %v2965, %v2961
    %vm2969 = vcmask 58368
    %v2970 = vsel %vm2969, %v2967, 0.0
    %2971 = vadd.xlane.f32.xlu0 %v2970
    %v2972 = vpop.xlane.xlu0 %2971
    %2975 = vset.pattern.permute.xlu0 0
    %2976 = vperm.xlu0 %2975, %v2952
    %v2977 = vpop.permute.xlu0 %2976
    %2978 = vset.pattern.permute.xlu0 0
    %2979 = vperm.xlu0 %2978, %v2953
    %v2980 = vpop.permute.xlu0 %2979
    %v2981 = vlaneseq
    %v2982 = vshrl.u32 %v2981, 7
    %v2983 = vsub.s32 %v2957, %v2982
    %v2984 = vrot.slane %v2977, %v2983
    %v2985 = vlaneseq
    %v2986 = vshrl.u32 %v2985, 7
    %v2987 = vsub.s32 %v2957, %v2986
    %v2988 = vrot.slane %v2980, %v2987
    %v2989 = vsel %vm2966, %v2988, %v2984
    %v2991 = vsel %vm2969, %v2989, 0.0
    %2992 = vadd.xlane.f32.xlu0 %v2991
    %v2993 = vpop.xlane.xlu0 %2992
    %v2994 = vadd.f32 %v2972, %v2993
    %v2995 = vmul.f32 %v2994, 0.5
    %v2996 = vsel %vm137, %v2144, 0.0
    %v2997 = vrot.slane %v2996, 4
    %v2998 = vadd.f32 %v2996, %v2997
    %v2999 = vrot.slane %v2998, 2
    %v3000 = vadd.f32 %v2998, %v2999
    %v3001 = vrot.slane %v3000, 1
    %v3002 = vadd.f32 %v3000, %v3001
    %v3003 = vsel %vm137, %v2149, 0.0
    %v3004 = vrot.slane %v3003, 4
    %v3005 = vadd.f32 %v3003, %v3004
    %v3006 = vrot.slane %v3005, 2
    %v3007 = vadd.f32 %v3005, %v3006
    %v3008 = vrot.slane %v3007, 1
    %v3009 = vadd.f32 %v3007, %v3008
    %v3010 = vrcp.pop 8.0
    %v3011 = vmul.f32 %v3002, %v3010
    %v3012 = vmul.f32 %v3009, %v3010
    %v3013 = vld [vmem:[%s4 + $0x10] sm:$0x3]
    %v3014 = vld [vmem:[%s4 + $0xf] sm:$0x1]
    %v3015 = vld [vmem:[%s4 + $0x12] sm:$0x1]
    %v3016 = vld [vmem:[%s4 + $0x13] sm:$0x1]
    %v3017 = vmul.f32 %v3011, %v3013
    %v3018 = vmul.f32 %v3012, %v3013
    %vm3019 = vcmask 254976
    %v3020 = vsel %vm3019, %v3017, 0.0
    %3021 = vadd.xlane.f32.xlu0 %v3020
    %v3022 = vpop.xlane.xlu0 %3021
    %v3023 = vsel %vm3019, %v3018, 0.0
    %3024 = vadd.xlane.f32.xlu0 %v3023
    %v3025 = vpop.xlane.xlu0 %3024
    %v3026 = vlaneseq
    %v3027 = vshrl.u32 %v3026, 7
    %v3028 = vsub.s32 0, %v3027
    %v3029 = vrot.slane %v3014, %v3028
    %3032 = vbcast.lane.b32.xlu0 %v3029, 256
    %v3033 = vpop.permute.xlu0 %3032
    %v3035 = vadd.f32 %v3022, %v3033
    %v3036 = vadd.f32 %v3025, %v3033
    %v3037 = vmax.f32 %v3035, 0.0
    %v3038 = vmax.f32 %v3036, 0.0
    %v3039 = vlaneseq
    %v3040 = vshrl.u32 %v3039, 7
    %v3041 = vsub.s32 0, %v3040
    %v3042 = vrot.slane %v3015, %v3041
    %3045 = vbcast.lane.b32.xlu0 %v3042, 256
    %v3046 = vpop.permute.xlu0 %3045
    %v3048 = vmul.f32 %v3037, %v3046
    %v3049 = vmul.f32 %v3038, %v3046
    %3052 = vset.pattern.permute.xlu0 0
    %3053 = vperm.xlu0 %3052, %v3048
    %v3054 = vpop.permute.xlu0 %3053
    %3055 = vset.pattern.permute.xlu0 0
    %3056 = vperm.xlu0 %3055, %v3049
    %v3057 = vpop.permute.xlu0 %3056
    %v3058 = vlaneseq
    %v3059 = vshrl.u32 %v3058, 7
    %v3060 = vsub.s32 %v2957, %v3059
    %v3061 = vrot.slane %v3054, %v3060
    %v3062 = vlaneseq
    %v3063 = vshrl.u32 %v3062, 7
    %v3064 = vsub.s32 %v2957, %v3063
    %v3065 = vrot.slane %v3057, %v3064
    %v3066 = vsel %vm2966, %v3065, %v3061
    %vm3068 = vcmask 9216
    %v3069 = vsel %vm3068, %v3066, 0.0
    %3070 = vadd.xlane.f32.xlu0 %v3069
    %v3071 = vpop.xlane.xlu0 %3070
    %v3072 = vlaneseq
    %v3073 = vshrl.u32 %v3072, 7
    %v3074 = vsub.s32 0, %v3073
    %v3075 = vrot.slane %v3016, %v3074
    %v3076 = vadd.f32 %v3071, %v3075
    %v3077 = vxor.u32 %v3076, 2147483648
    %v3078 = vmul.f32 %v3077, 1.442695
    %v3079 = vpow.pop %v3078
    %v3080 = vadd.f32 %v3079, 1.0
    %v3081 = vrcp.pop %v3080
    %v3082 = vmul.f32 1.0, %v3081
    %vm3083 = vcmask 7168
    %v3084 = vsel %vm3083, %v3082, %v2995
    %3085 = vst.msk [vmem:[#allocation2] sm:$0x3] %vm3068, %v3084
    // Predicated region
    $region22: #{tpu_custom_call.1} parent=1 // pred_check
      _
    $region23: #{tpu_custom_call.1} parent=1 // pred_check_branch
      %3087 = sbr.rel (0) target = $region25
    $region24: #{tpu_custom_call.1} parent=1 // pred_region
      %s3089 = ssub.s32 32, 32
      %3090 = vsyncadd [#allocation3], %s3089
      %s3092 = sshll.u32 [#allocation2], 4
      %s3093 = int_to_ptr.vmem [resolvable:$true] %s3092
      %3095 = dma.vmem_to_hbm [thread:$0]  %s3093, 32, %s5, [#allocation3]
    $region25: #{tpu_custom_call.1} parent=1 // pred_fallthru
      _
    // Predicated region
    $region26: #{tpu_custom_call.1} parent=1 // pred_check
      _
    $region27: #{tpu_custom_call.1} parent=1 // pred_check_branch
      %3097 = sbr.rel (0) target = $region29
    $region28: #{tpu_custom_call.1} parent=1 // pred_region
      %3098 = dma.done [#allocation3], 32
    $region29: #{tpu_custom_call.1} parent=1 // pred_fallthru
      _
    %3099 = vsyncpa [#allocation3], 1

</llo_original>
